<compile_context>
chip_gen: v6e
topology: v6e:2x2x1
jax: 0.10.0
libtpu: 0.0.40
codegen_flags: <defaults>
</compile_context>

<pallas_src>
import math

import jax
import jax.numpy as jnp
import numpy as np
from jax.experimental import pallas as pl
from jax.experimental.pallas import tpu as pltpu


def _relu(v):
    return jnp.maximum(v, 0.0)


def _sigmoid(v, approx=True):
    # exp already runs on the EUP; route the reciprocal there too.
    return pl.reciprocal(1.0 + jnp.exp(-v), approx=approx)


def glsa_conv_branch_kernel(
    x_ref,
    w1_ref, b1_ref,     # conv1: 1x1 (+ folded BN), ReLU          (block-diag)
    w2_ref, b2_ref,     # conv2: 3x3 depthwise (+ folded BN), ReLU (G-tiled)
    w3_ref, b3_ref,     # conv3: 1x1 (+ folded BN), ReLU
    w4_ref, b4_ref,     # conv4: 3x3 depthwise (+ folded BN), ReLU
    w5_ref, b5_ref,     # conv5: 1x1 (+ folded BN), SiLU
    w6_ref, b6_ref,     # conv6: 3x3 depthwise (+ folded BN), ReLU
    w7_ref,             # conv7: 1x1, no BN / no bias, ReLU
    o_ref,
):
    _, H, W, Cp = x_ref.shape          # packed input channels (G * C_in)
    Ch = w1_ref.shape[1]               # packed hidden channels (G * hidden)
    HW = H * W

    # Edge-validity masks for the +-1 width shifts, built once and reused by
    # all three depthwise layers (broadcast over H at use time).
    col = jax.lax.broadcasted_iota(jnp.int32, (1, W, Ch), 1)
    left_ok = (col >= 1).astype(jnp.float32)        # x[:, w-1, :] in range
    right_ok = (col <= W - 2).astype(jnp.float32)   # x[:, w+1, :] in range

    def pointwise(x2d, w_ref, b_ref):
        # 1x1 conv == matmul over channels: (HW, Cin) @ (Cin, Cout) + (1, Cout)
        # NOTE: f32 MXU operands kept on purpose (exact parity with the f32
        # reference); bf16 casting is a v6e/v7x option if tolerance allows.
        y = jnp.dot(x2d, w_ref[...], preferred_element_type=jnp.float32)
        return y + b_ref[...]

    def depthwise3x3(x3d, w_ref, b_ref):
        # x3d: (H, W, Ch); w_ref: (9, 1, 1, Ch) row-major over (ky, kx);
        # pad=1, stride=1.  All shifts are register-level (roll / row concat).
        wr = [w_ref[k] for k in range(9)]            # hoisted (1, 1, Ch) rows
        zrow = jnp.zeros((1, W, Ch), jnp.float32)
        acc = jnp.zeros((H, W, Ch), jnp.float32)
        for kx in range(3):
            if kx == 0:      # needs x[:, w-1, :]  (zero at w == 0)
                c = pltpu.roll(x3d, 1, axis=1) * left_ok
            elif kx == 2:    # needs x[:, w+1, :]  (zero at w == W-1)
                c = pltpu.roll(x3d, W - 1, axis=1) * right_ok
            else:            # kx == 1: centre column
                c = x3d
            # ky = 1 : same row
            acc = acc + c * wr[3 + kx]
            # ky = 0 : needs x[h-1]  -> prepend zero row, drop last row
            acc = acc + jnp.concatenate([zrow, c[:-1]], axis=0) * wr[kx]
            # ky = 2 : needs x[h+1]  -> drop first row, append zero row
            acc = acc + jnp.concatenate([c[1:], zrow], axis=0) * wr[6 + kx]
        return acc + b_ref[...]                      # (1, 1, Ch) broadcasts

    x0 = x_ref[0]                                    # (H, W, Cp)  res1 / res2
    x2d = x0.reshape(HW, Cp)

    h = _relu(pointwise(x2d, w1_ref, b1_ref))                 # conv1
    h3 = h.reshape(H, W, Ch)
    h3 = h3 + _relu(depthwise3x3(h3, w2_ref, b2_ref))         # x + conv2(x)
    h = _relu(pointwise(h3.reshape(HW, Ch), w3_ref, b3_ref))  # conv3
    h3 = h.reshape(H, W, Ch)
    h3 = h3 + _relu(depthwise3x3(h3, w4_ref, b4_ref))         # x + conv4(x)
    p5 = pointwise(h3.reshape(HW, Ch), w5_ref, b5_ref)        # conv5 (SiLU)
    h = p5 * _sigmoid(p5, approx=True)
    h3 = h.reshape(H, W, Ch)
    h3 = h3 + _relu(depthwise3x3(h3, w6_ref, b6_ref))         # x + conv6(x)
    h = _relu(jnp.dot(h3.reshape(HW, Ch), w7_ref[...],
                      preferred_element_type=jnp.float32))    # conv7
    mask = _sigmoid(h, approx=False)                          # sigmoid_spatial
    out = x2d + x2d * mask                                    # res2 + res1*mask
    o_ref[0] = out.reshape(H, W, Cp)


def _block_diag(w, g):
    """kron(I_g, w): (Cin, Cout) -> (g*Cin, g*Cout)."""
    cin, cout = w.shape
    out = jnp.zeros((g * cin, g * cout), w.dtype)
    for i in range(g):
        out = out.at[i * cin:(i + 1) * cin, i * cout:(i + 1) * cout].set(w)
    return out


def _pack_params(params, g):
    """Tile / block-diagonalize per-image weights for G-image lane packing."""
    w1, b1, w2, b2, w3, b3, w4, b4, w5, b5, w6, b6, w7 = params
    pw_w = lambda w: _block_diag(w, g)                           # (gCin, gCout)
    pw_b = lambda b: jnp.tile(b, (1, g))                         # (1, gC)
    dw_w = lambda w: jnp.tile(w, (1, g)).reshape(9, 1, 1, -1)    # (9,1,1,gC)
    dw_b = lambda b: jnp.tile(b, (1, g)).reshape(1, 1, -1)       # (1,1,gC)
    return (pw_w(w1), pw_b(b1),
            dw_w(w2), dw_b(b2),
            pw_w(w3), pw_b(b3),
            dw_w(w4), dw_b(b4),
            pw_w(w5), pw_b(b5),
            dw_w(w6), dw_b(b6),
            pw_w(w7))


def glsa_conv_branch(x_nchw, params):
    """x_nchw: (B, C, H, W) float32 (PyTorch layout). Returns (B, C, H, W)."""
    B, C, H, W = x_nchw.shape
    # Lane packing: fold G batch images into the channel (lane) axis so the
    # packed channel count approaches the 128-lane vreg width.
    G = max(1, min(B, 128 // max(C, 1)))
    G = math.gcd(B, G)
    Bg = B // G
    Cp = G * C

    x = jnp.transpose(x_nchw, (0, 2, 3, 1)).astype(jnp.float32)      # NHWC
    xp = (x.reshape(Bg, G, H, W, C)
           .transpose(0, 2, 3, 1, 4)
           .reshape(Bg, H, W, Cp))                                   # packed

    packed = _pack_params(params, G)

    def full(a):
        return pl.BlockSpec(a.shape, lambda b, _nd=a.ndim: (0,) * _nd)

    out = pl.pallas_call(
        glsa_conv_branch_kernel,
        out_shape=jax.ShapeDtypeStruct((Bg, H, W, Cp), jnp.float32),
        grid=(Bg,),
        in_specs=[pl.BlockSpec((1, H, W, Cp), lambda b: (b, 0, 0, 0))]
                 + [full(a) for a in packed],
        out_specs=pl.BlockSpec((1, H, W, Cp), lambda b: (b, 0, 0, 0)),
        compiler_params=pltpu.CompilerParams(
            dimension_semantics=("parallel",)),   # no cross-step dependency
    )(xp, *packed)

    out = (out.reshape(Bg, H, W, G, C)
              .transpose(0, 3, 1, 2, 4)
              .reshape(B, H, W, C))
    return jnp.transpose(out, (0, 3, 1, 2))                          # NCHW


def init_params(key, c_in, hidden, c_out, eps=1e-5):
    """Deterministic synthetic params; BN (eval) folded into conv weight/bias."""
    ks = list(jax.random.split(key, 40))
    it = iter(ks)

    def conv_w(shape, scale=0.15):
        return jax.random.normal(next(it), shape, jnp.float32) * scale

    def bn_fold(c):
        gamma = jax.random.uniform(next(it), (c,), jnp.float32, 0.8, 1.2)
        beta = jax.random.normal(next(it), (c,), jnp.float32) * 0.05
        mean = jax.random.normal(next(it), (c,), jnp.float32) * 0.05
        var = jax.random.uniform(next(it), (c,), jnp.float32, 0.5, 1.5)
        scale = gamma / jnp.sqrt(var + eps)
        bias = beta - mean * scale
        return scale, bias

    def pw_layer(cin, cout):                 # 1x1 conv weight as (Cin, Cout)
        w = conv_w((cin, cout))
        s, b = bn_fold(cout)
        return w * s[None, :], b[None, :]

    def dw_layer(c):                         # depthwise 3x3 weight as (9, C)
        w = conv_w((9, c))
        s, b = bn_fold(c)
        return w * s[None, :], b[None, :]

    w1, b1 = pw_layer(c_in, hidden)
    w2, b2 = dw_layer(hidden)
    w3, b3 = pw_layer(hidden, hidden)
    w4, b4 = dw_layer(hidden)
    w5, b5 = pw_layer(hidden, hidden)
    w6, b6 = dw_layer(hidden)
    w7 = conv_w((hidden, c_out))             # conv7: no BN, no bias
    return (w1, b1, w2, b2, w3, b3, w4, b4, w5, b5, w6, b6, w7)


def ref_forward(x_nchw, params):
    """Pure-JAX reference of the PyTorch forward (same folded params)."""
    w1, b1, w2, b2, w3, b3, w4, b4, w5, b5, w6, b6, w7 = params
    x = jnp.transpose(x_nchw, (0, 2, 3, 1)).astype(jnp.float32)
    B, H, W, C = x.shape
    relu = lambda v: jnp.maximum(v, 0.0)
    sig = lambda v: 1.0 / (1.0 + jnp.exp(-v))

    def pw(t, w, b):
        return jnp.einsum('bhwc,cd->bhwd', t, w) + b

    def dw(t, w9, b):
        tp = jnp.pad(t, ((0, 0), (1, 1), (1, 1), (0, 0)))
        acc = jnp.zeros_like(t)
        for ky in range(3):
            for kx in range(3):
                acc = acc + tp[:, ky:ky + H, kx:kx + W, :] * w9[ky * 3 + kx]
        return acc + b

    h = relu(pw(x, w1, b1))
    h = h + relu(dw(h, w2, b2))
    h = relu(pw(h, w3, b3))
    h = h + relu(dw(h, w4, b4))
    p = pw(h, w5, b5)
    h = p * sig(p)
    h = h + relu(dw(h, w6, b6))
    h = relu(jnp.einsum('bhwc,cd->bhwd', h, w7))
    mask = sig(h)
    out = x + x * mask
    return jnp.transpose(out, (0, 3, 1, 2))


if __name__ == "__main__":
    key = jax.random.PRNGKey(0)
    kx, kp = jax.random.split(key)
    # in_features = hidden_features = out_features = 64 (matches the 64-channel
    # `ca` submodule built in __init__); B=2 images pack to 128 lanes (G=2).
    B, C, H, W = 2, 64, 16, 16
    x = jax.random.normal(kx, (B, C, H, W), jnp.float32)
    params = init_params(kp, C, C, C)

    out = glsa_conv_branch(x, params)
    out = jax.block_until_ready(out)

    ref = ref_forward(x, params)
    np.testing.assert_allclose(np.asarray(out), np.asarray(ref),
                               atol=2e-3, rtol=2e-3)
    print("KERNEL_OK")
</pallas_src>

<mosaic_0001>
module attributes {stable_mosaic.version = 11 : i64} {
  func.func @glsa_conv_branch_kernel(%arg0: i32, %arg1: memref<1x16x16x128xf32, #tpu.memory_space<vmem>>, %arg2: memref<128x128xf32, #tpu.memory_space<vmem>>, %arg3: memref<1x128xf32, #tpu.memory_space<vmem>>, %arg4: memref<9x1x1x128xf32, #tpu.memory_space<vmem>>, %arg5: memref<1x1x128xf32, #tpu.memory_space<vmem>>, %arg6: memref<128x128xf32, #tpu.memory_space<vmem>>, %arg7: memref<1x128xf32, #tpu.memory_space<vmem>>, %arg8: memref<9x1x1x128xf32, #tpu.memory_space<vmem>>, %arg9: memref<1x1x128xf32, #tpu.memory_space<vmem>>, %arg10: memref<128x128xf32, #tpu.memory_space<vmem>>, %arg11: memref<1x128xf32, #tpu.memory_space<vmem>>, %arg12: memref<9x1x1x128xf32, #tpu.memory_space<vmem>>, %arg13: memref<1x1x128xf32, #tpu.memory_space<vmem>>, %arg14: memref<128x128xf32, #tpu.memory_space<vmem>>, %arg15: memref<1x16x16x128xf32, #tpu.memory_space<vmem>>) attributes {dimension_semantics = [#tpu.dimension_semantics<parallel>], iteration_bounds = array<i64: 1>, scalar_prefetch = 0 : i64, scratch_operands = 0 : i64, tpu.core_type = #tpu.core_type<tc>, window_params = [{transform_indices = @transform_0, window_bounds = array<i64: 1, 16, 16, 128>}, {pipeline_mode = #tpu.pipeline_mode<synchronous>, transform_indices = @transform_1, window_bounds = array<i64: 128, 128>}, {pipeline_mode = #tpu.pipeline_mode<synchronous>, transform_indices = @transform_2, window_bounds = array<i64: 1, 128>}, {pipeline_mode = #tpu.pipeline_mode<synchronous>, transform_indices = @transform_3, window_bounds = array<i64: 9, 1, 1, 128>}, {pipeline_mode = #tpu.pipeline_mode<synchronous>, transform_indices = @transform_4, window_bounds = array<i64: 1, 1, 128>}, {pipeline_mode = #tpu.pipeline_mode<synchronous>, transform_indices = @transform_5, window_bounds = array<i64: 128, 128>}, {pipeline_mode = #tpu.pipeline_mode<synchronous>, transform_indices = @transform_6, window_bounds = array<i64: 1, 128>}, {pipeline_mode = #tpu.pipeline_mode<synchronous>, transform_indices = @transform_7, window_bounds = array<i64: 9, 1, 1, 128>}, {pipeline_mode = #tpu.pipeline_mode<synchronous>, transform_indices = @transform_8, window_bounds = array<i64: 1, 1, 128>}, {pipeline_mode = #tpu.pipeline_mode<synchronous>, transform_indices = @transform_9, window_bounds = array<i64: 128, 128>}, {pipeline_mode = #tpu.pipeline_mode<synchronous>, transform_indices = @transform_10, window_bounds = array<i64: 1, 128>}, {pipeline_mode = #tpu.pipeline_mode<synchronous>, transform_indices = @transform_11, window_bounds = array<i64: 9, 1, 1, 128>}, {pipeline_mode = #tpu.pipeline_mode<synchronous>, transform_indices = @transform_12, window_bounds = array<i64: 1, 1, 128>}, {pipeline_mode = #tpu.pipeline_mode<synchronous>, transform_indices = @transform_13, window_bounds = array<i64: 128, 128>}, {transform_indices = @transform_14, window_bounds = array<i64: 1, 16, 16, 128>}]} {
    %0 = tpu.iota {dimensions = array<i32: 1>} : vector<1x16x128xi32>
    %c1_i32 = arith.constant 1 : i32
    %1 = vector.broadcast %c1_i32 : i32 to vector<1x16x128xi32>
    %2 = arith.cmpi sge, %0, %1 : vector<1x16x128xi32>
    %3 = arith.extui %2 : vector<1x16x128xi1> to vector<1x16x128xi32>
    %4 = arith.sitofp %3 : vector<1x16x128xi32> to vector<1x16x128xf32>
    %c14_i32 = arith.constant 14 : i32
    %5 = vector.broadcast %c14_i32 : i32 to vector<1x16x128xi32>
    %6 = arith.cmpi sle, %0, %5 : vector<1x16x128xi32>
    %7 = arith.extui %6 : vector<1x16x128xi1> to vector<1x16x128xi32>
    %8 = arith.sitofp %7 : vector<1x16x128xi32> to vector<1x16x128xf32>
    %c0 = arith.constant 0 : index
    %c0_0 = arith.constant 0 : index
    %c0_1 = arith.constant 0 : index
    %c0_2 = arith.constant 0 : index
    %9 = vector.load %arg1[%c0, %c0_0, %c0_1, %c0_2] : memref<1x16x16x128xf32, #tpu.memory_space<vmem>>, vector<1x16x16x128xf32>
    %10 = vector.shape_cast %9 : vector<1x16x16x128xf32> to vector<16x16x128xf32>
    %11 = vector.shape_cast %10 : vector<16x16x128xf32> to vector<256x128xf32>
    %c0_3 = arith.constant 0 : index
    %c0_4 = arith.constant 0 : index
    %12 = vector.load %arg2[%c0_3, %c0_4] : memref<128x128xf32, #tpu.memory_space<vmem>>, vector<128x128xf32>
    %cst = arith.constant dense<0.000000e+00> : vector<256x128xf32>
    %13 = tpu.matmul %11, %12, %cst {dimension_numbers = #tpu.dot_dimension_numbers<[1], [0], [0], [1], [0, 0, 1, 1], [], []>} : vector<256x128xf32>, vector<128x128xf32>, vector<256x128xf32> -> vector<256x128xf32>
    %c0_5 = arith.constant 0 : index
    %c0_6 = arith.constant 0 : index
    %14 = vector.load %arg3[%c0_5, %c0_6] : memref<1x128xf32, #tpu.memory_space<vmem>>, vector<1x128xf32>
    %15 = vector.broadcast %14 : vector<1x128xf32> to vector<256x128xf32>
    %16 = arith.addf %13, %15 : vector<256x128xf32>
    %cst_7 = arith.constant 0.000000e+00 : f32
    %17 = vector.broadcast %cst_7 : f32 to vector<256x128xf32>
    %18 = arith.maximumf %16, %17 : vector<256x128xf32>
    %19 = vector.shape_cast %18 : vector<256x128xf32> to vector<16x16x128xf32>
    %c0_8 = arith.constant 0 : index
    %c0_9 = arith.constant 0 : index
    %c0_10 = arith.constant 0 : index
    %c0_11 = arith.constant 0 : index
    %20 = vector.load %arg4[%c0_8, %c0_9, %c0_10, %c0_11] : memref<9x1x1x128xf32, #tpu.memory_space<vmem>>, vector<1x1x1x128xf32>
    %21 = vector.shape_cast %20 : vector<1x1x1x128xf32> to vector<1x1x128xf32>
    %c1 = arith.constant 1 : index
    %c0_12 = arith.constant 0 : index
    %c0_13 = arith.constant 0 : index
    %c0_14 = arith.constant 0 : index
    %22 = vector.load %arg4[%c1, %c0_12, %c0_13, %c0_14] : memref<9x1x1x128xf32, #tpu.memory_space<vmem>>, vector<1x1x1x128xf32>
    %23 = vector.shape_cast %22 : vector<1x1x1x128xf32> to vector<1x1x128xf32>
    %c2 = arith.constant 2 : index
    %c0_15 = arith.constant 0 : index
    %c0_16 = arith.constant 0 : index
    %c0_17 = arith.constant 0 : index
    %24 = vector.load %arg4[%c2, %c0_15, %c0_16, %c0_17] : memref<9x1x1x128xf32, #tpu.memory_space<vmem>>, vector<1x1x1x128xf32>
    %25 = vector.shape_cast %24 : vector<1x1x1x128xf32> to vector<1x1x128xf32>
    %c3 = arith.constant 3 : index
    %c0_18 = arith.constant 0 : index
    %c0_19 = arith.constant 0 : index
    %c0_20 = arith.constant 0 : index
    %26 = vector.load %arg4[%c3, %c0_18, %c0_19, %c0_20] : memref<9x1x1x128xf32, #tpu.memory_space<vmem>>, vector<1x1x1x128xf32>
    %27 = vector.shape_cast %26 : vector<1x1x1x128xf32> to vector<1x1x128xf32>
    %c4 = arith.constant 4 : index
    %c0_21 = arith.constant 0 : index
    %c0_22 = arith.constant 0 : index
    %c0_23 = arith.constant 0 : index
    %28 = vector.load %arg4[%c4, %c0_21, %c0_22, %c0_23] : memref<9x1x1x128xf32, #tpu.memory_space<vmem>>, vector<1x1x1x128xf32>
    %29 = vector.shape_cast %28 : vector<1x1x1x128xf32> to vector<1x1x128xf32>
    %c5 = arith.constant 5 : index
    %c0_24 = arith.constant 0 : index
    %c0_25 = arith.constant 0 : index
    %c0_26 = arith.constant 0 : index
    %30 = vector.load %arg4[%c5, %c0_24, %c0_25, %c0_26] : memref<9x1x1x128xf32, #tpu.memory_space<vmem>>, vector<1x1x1x128xf32>
    %31 = vector.shape_cast %30 : vector<1x1x1x128xf32> to vector<1x1x128xf32>
    %c6 = arith.constant 6 : index
    %c0_27 = arith.constant 0 : index
    %c0_28 = arith.constant 0 : index
    %c0_29 = arith.constant 0 : index
    %32 = vector.load %arg4[%c6, %c0_27, %c0_28, %c0_29] : memref<9x1x1x128xf32, #tpu.memory_space<vmem>>, vector<1x1x1x128xf32>
    %33 = vector.shape_cast %32 : vector<1x1x1x128xf32> to vector<1x1x128xf32>
    %c7 = arith.constant 7 : index
    %c0_30 = arith.constant 0 : index
    %c0_31 = arith.constant 0 : index
    %c0_32 = arith.constant 0 : index
    %34 = vector.load %arg4[%c7, %c0_30, %c0_31, %c0_32] : memref<9x1x1x128xf32, #tpu.memory_space<vmem>>, vector<1x1x1x128xf32>
    %35 = vector.shape_cast %34 : vector<1x1x1x128xf32> to vector<1x1x128xf32>
    %c8 = arith.constant 8 : index
    %c0_33 = arith.constant 0 : index
    %c0_34 = arith.constant 0 : index
    %c0_35 = arith.constant 0 : index
    %36 = vector.load %arg4[%c8, %c0_33, %c0_34, %c0_35] : memref<9x1x1x128xf32, #tpu.memory_space<vmem>>, vector<1x1x1x128xf32>
    %37 = vector.shape_cast %36 : vector<1x1x1x128xf32> to vector<1x1x128xf32>
    %cst_36 = arith.constant 0.000000e+00 : f32
    %38 = vector.broadcast %cst_36 : f32 to vector<1x16x128xf32>
    %cst_37 = arith.constant 0.000000e+00 : f32
    %39 = vector.broadcast %cst_37 : f32 to vector<16x16x128xf32>
    %c1_i32_38 = arith.constant 1 : i32
    %40 = tpu.dynamic_rotate %19 by %c1_i32_38 dim 1 : vector<16x16x128xf32>, i32 -> vector<16x16x128xf32>
    %41 = vector.broadcast %4 : vector<1x16x128xf32> to vector<16x16x128xf32>
    %42 = arith.mulf %40, %41 : vector<16x16x128xf32>
    %43 = vector.broadcast %27 : vector<1x1x128xf32> to vector<16x16x128xf32>
    %44 = arith.mulf %42, %43 : vector<16x16x128xf32>
    %45 = arith.addf %39, %44 : vector<16x16x128xf32>
    %46 = vector.extract_strided_slice %42 {offsets = [0, 0, 0], sizes = [15, 16, 128], strides = [1, 1, 1]} : vector<16x16x128xf32> to vector<15x16x128xf32>
    %47 = tpu.concatenate %38, %46 in 0 : vector<1x16x128xf32>, vector<15x16x128xf32> -> vector<16x16x128xf32>
    %48 = vector.broadcast %21 : vector<1x1x128xf32> to vector<16x16x128xf32>
    %49 = arith.mulf %47, %48 : vector<16x16x128xf32>
    %50 = arith.addf %45, %49 : vector<16x16x128xf32>
    %51 = vector.extract_strided_slice %42 {offsets = [1, 0, 0], sizes = [15, 16, 128], strides = [1, 1, 1]} : vector<16x16x128xf32> to vector<15x16x128xf32>
    %52 = tpu.concatenate %51, %38 in 0 : vector<15x16x128xf32>, vector<1x16x128xf32> -> vector<16x16x128xf32>
    %53 = vector.broadcast %33 : vector<1x1x128xf32> to vector<16x16x128xf32>
    %54 = arith.mulf %52, %53 : vector<16x16x128xf32>
    %55 = arith.addf %50, %54 : vector<16x16x128xf32>
    %56 = vector.broadcast %29 : vector<1x1x128xf32> to vector<16x16x128xf32>
    %57 = arith.mulf %19, %56 : vector<16x16x128xf32>
    %58 = arith.addf %55, %57 : vector<16x16x128xf32>
    %59 = vector.extract_strided_slice %19 {offsets = [0, 0, 0], sizes = [15, 16, 128], strides = [1, 1, 1]} : vector<16x16x128xf32> to vector<15x16x128xf32>
    %60 = tpu.concatenate %38, %59 in 0 : vector<1x16x128xf32>, vector<15x16x128xf32> -> vector<16x16x128xf32>
    %61 = vector.broadcast %23 : vector<1x1x128xf32> to vector<16x16x128xf32>
    %62 = arith.mulf %60, %61 : vector<16x16x128xf32>
    %63 = arith.addf %58, %62 : vector<16x16x128xf32>
    %64 = vector.extract_strided_slice %19 {offsets = [1, 0, 0], sizes = [15, 16, 128], strides = [1, 1, 1]} : vector<16x16x128xf32> to vector<15x16x128xf32>
    %65 = tpu.concatenate %64, %38 in 0 : vector<15x16x128xf32>, vector<1x16x128xf32> -> vector<16x16x128xf32>
    %66 = vector.broadcast %35 : vector<1x1x128xf32> to vector<16x16x128xf32>
    %67 = arith.mulf %65, %66 : vector<16x16x128xf32>
    %68 = arith.addf %63, %67 : vector<16x16x128xf32>
    %c15_i32 = arith.constant 15 : i32
    %69 = tpu.dynamic_rotate %19 by %c15_i32 dim 1 : vector<16x16x128xf32>, i32 -> vector<16x16x128xf32>
    %70 = vector.broadcast %8 : vector<1x16x128xf32> to vector<16x16x128xf32>
    %71 = arith.mulf %69, %70 : vector<16x16x128xf32>
    %72 = vector.broadcast %31 : vector<1x1x128xf32> to vector<16x16x128xf32>
    %73 = arith.mulf %71, %72 : vector<16x16x128xf32>
    %74 = arith.addf %68, %73 : vector<16x16x128xf32>
    %75 = vector.extract_strided_slice %71 {offsets = [0, 0, 0], sizes = [15, 16, 128], strides = [1, 1, 1]} : vector<16x16x128xf32> to vector<15x16x128xf32>
    %76 = tpu.concatenate %38, %75 in 0 : vector<1x16x128xf32>, vector<15x16x128xf32> -> vector<16x16x128xf32>
    %77 = vector.broadcast %25 : vector<1x1x128xf32> to vector<16x16x128xf32>
    %78 = arith.mulf %76, %77 : vector<16x16x128xf32>
    %79 = arith.addf %74, %78 : vector<16x16x128xf32>
    %80 = vector.extract_strided_slice %71 {offsets = [1, 0, 0], sizes = [15, 16, 128], strides = [1, 1, 1]} : vector<16x16x128xf32> to vector<15x16x128xf32>
    %81 = tpu.concatenate %80, %38 in 0 : vector<15x16x128xf32>, vector<1x16x128xf32> -> vector<16x16x128xf32>
    %82 = vector.broadcast %37 : vector<1x1x128xf32> to vector<16x16x128xf32>
    %83 = arith.mulf %81, %82 : vector<16x16x128xf32>
    %84 = arith.addf %79, %83 : vector<16x16x128xf32>
    %c0_39 = arith.constant 0 : index
    %c0_40 = arith.constant 0 : index
    %c0_41 = arith.constant 0 : index
    %85 = vector.load %arg5[%c0_39, %c0_40, %c0_41] : memref<1x1x128xf32, #tpu.memory_space<vmem>>, vector<1x1x128xf32>
    %86 = vector.broadcast %85 : vector<1x1x128xf32> to vector<16x16x128xf32>
    %87 = arith.addf %84, %86 : vector<16x16x128xf32>
    %cst_42 = arith.constant 0.000000e+00 : f32
    %88 = vector.broadcast %cst_42 : f32 to vector<16x16x128xf32>
    %89 = arith.maximumf %87, %88 : vector<16x16x128xf32>
    %90 = arith.addf %19, %89 : vector<16x16x128xf32>
    %91 = vector.shape_cast %90 : vector<16x16x128xf32> to vector<256x128xf32>
    %c0_43 = arith.constant 0 : index
    %c0_44 = arith.constant 0 : index
    %92 = vector.load %arg6[%c0_43, %c0_44] : memref<128x128xf32, #tpu.memory_space<vmem>>, vector<128x128xf32>
    %cst_45 = arith.constant dense<0.000000e+00> : vector<256x128xf32>
    %93 = tpu.matmul %91, %92, %cst_45 {dimension_numbers = #tpu.dot_dimension_numbers<[1], [0], [0], [1], [0, 0, 1, 1], [], []>} : vector<256x128xf32>, vector<128x128xf32>, vector<256x128xf32> -> vector<256x128xf32>
    %c0_46 = arith.constant 0 : index
    %c0_47 = arith.constant 0 : index
    %94 = vector.load %arg7[%c0_46, %c0_47] : memref<1x128xf32, #tpu.memory_space<vmem>>, vector<1x128xf32>
    %95 = vector.broadcast %94 : vector<1x128xf32> to vector<256x128xf32>
    %96 = arith.addf %93, %95 : vector<256x128xf32>
    %cst_48 = arith.constant 0.000000e+00 : f32
    %97 = vector.broadcast %cst_48 : f32 to vector<256x128xf32>
    %98 = arith.maximumf %96, %97 : vector<256x128xf32>
    %99 = vector.shape_cast %98 : vector<256x128xf32> to vector<16x16x128xf32>
    %c0_49 = arith.constant 0 : index
    %c0_50 = arith.constant 0 : index
    %c0_51 = arith.constant 0 : index
    %c0_52 = arith.constant 0 : index
    %100 = vector.load %arg8[%c0_49, %c0_50, %c0_51, %c0_52] : memref<9x1x1x128xf32, #tpu.memory_space<vmem>>, vector<1x1x1x128xf32>
    %101 = vector.shape_cast %100 : vector<1x1x1x128xf32> to vector<1x1x128xf32>
    %c1_53 = arith.constant 1 : index
    %c0_54 = arith.constant 0 : index
    %c0_55 = arith.constant 0 : index
    %c0_56 = arith.constant 0 : index
    %102 = vector.load %arg8[%c1_53, %c0_54, %c0_55, %c0_56] : memref<9x1x1x128xf32, #tpu.memory_space<vmem>>, vector<1x1x1x128xf32>
    %103 = vector.shape_cast %102 : vector<1x1x1x128xf32> to vector<1x1x128xf32>
    %c2_57 = arith.constant 2 : index
    %c0_58 = arith.constant 0 : index
    %c0_59 = arith.constant 0 : index
    %c0_60 = arith.constant 0 : index
    %104 = vector.load %arg8[%c2_57, %c0_58, %c0_59, %c0_60] : memref<9x1x1x128xf32, #tpu.memory_space<vmem>>, vector<1x1x1x128xf32>
    %105 = vector.shape_cast %104 : vector<1x1x1x128xf32> to vector<1x1x128xf32>
    %c3_61 = arith.constant 3 : index
    %c0_62 = arith.constant 0 : index
    %c0_63 = arith.constant 0 : index
    %c0_64 = arith.constant 0 : index
    %106 = vector.load %arg8[%c3_61, %c0_62, %c0_63, %c0_64] : memref<9x1x1x128xf32, #tpu.memory_space<vmem>>, vector<1x1x1x128xf32>
    %107 = vector.shape_cast %106 : vector<1x1x1x128xf32> to vector<1x1x128xf32>
    %c4_65 = arith.constant 4 : index
    %c0_66 = arith.constant 0 : index
    %c0_67 = arith.constant 0 : index
    %c0_68 = arith.constant 0 : index
    %108 = vector.load %arg8[%c4_65, %c0_66, %c0_67, %c0_68] : memref<9x1x1x128xf32, #tpu.memory_space<vmem>>, vector<1x1x1x128xf32>
    %109 = vector.shape_cast %108 : vector<1x1x1x128xf32> to vector<1x1x128xf32>
    %c5_69 = arith.constant 5 : index
    %c0_70 = arith.constant 0 : index
    %c0_71 = arith.constant 0 : index
    %c0_72 = arith.constant 0 : index
    %110 = vector.load %arg8[%c5_69, %c0_70, %c0_71, %c0_72] : memref<9x1x1x128xf32, #tpu.memory_space<vmem>>, vector<1x1x1x128xf32>
    %111 = vector.shape_cast %110 : vector<1x1x1x128xf32> to vector<1x1x128xf32>
    %c6_73 = arith.constant 6 : index
    %c0_74 = arith.constant 0 : index
    %c0_75 = arith.constant 0 : index
    %c0_76 = arith.constant 0 : index
    %112 = vector.load %arg8[%c6_73, %c0_74, %c0_75, %c0_76] : memref<9x1x1x128xf32, #tpu.memory_space<vmem>>, vector<1x1x1x128xf32>
    %113 = vector.shape_cast %112 : vector<1x1x1x128xf32> to vector<1x1x128xf32>
    %c7_77 = arith.constant 7 : index
    %c0_78 = arith.constant 0 : index
    %c0_79 = arith.constant 0 : index
    %c0_80 = arith.constant 0 : index
    %114 = vector.load %arg8[%c7_77, %c0_78, %c0_79, %c0_80] : memref<9x1x1x128xf32, #tpu.memory_space<vmem>>, vector<1x1x1x128xf32>
    %115 = vector.shape_cast %114 : vector<1x1x1x128xf32> to vector<1x1x128xf32>
    %c8_81 = arith.constant 8 : index
    %c0_82 = arith.constant 0 : index
    %c0_83 = arith.constant 0 : index
    %c0_84 = arith.constant 0 : index
    %116 = vector.load %arg8[%c8_81, %c0_82, %c0_83, %c0_84] : memref<9x1x1x128xf32, #tpu.memory_space<vmem>>, vector<1x1x1x128xf32>
    %117 = vector.shape_cast %116 : vector<1x1x1x128xf32> to vector<1x1x128xf32>
    %cst_85 = arith.constant 0.000000e+00 : f32
    %118 = vector.broadcast %cst_85 : f32 to vector<1x16x128xf32>
    %cst_86 = arith.constant 0.000000e+00 : f32
    %119 = vector.broadcast %cst_86 : f32 to vector<16x16x128xf32>
    %c1_i32_87 = arith.constant 1 : i32
    %120 = tpu.dynamic_rotate %99 by %c1_i32_87 dim 1 : vector<16x16x128xf32>, i32 -> vector<16x16x128xf32>
    %121 = vector.broadcast %4 : vector<1x16x128xf32> to vector<16x16x128xf32>
    %122 = arith.mulf %120, %121 : vector<16x16x128xf32>
    %123 = vector.broadcast %107 : vector<1x1x128xf32> to vector<16x16x128xf32>
    %124 = arith.mulf %122, %123 : vector<16x16x128xf32>
    %125 = arith.addf %119, %124 : vector<16x16x128xf32>
    %126 = vector.extract_strided_slice %122 {offsets = [0, 0, 0], sizes = [15, 16, 128], strides = [1, 1, 1]} : vector<16x16x128xf32> to vector<15x16x128xf32>
    %127 = tpu.concatenate %118, %126 in 0 : vector<1x16x128xf32>, vector<15x16x128xf32> -> vector<16x16x128xf32>
    %128 = vector.broadcast %101 : vector<1x1x128xf32> to vector<16x16x128xf32>
    %129 = arith.mulf %127, %128 : vector<16x16x128xf32>
    %130 = arith.addf %125, %129 : vector<16x16x128xf32>
    %131 = vector.extract_strided_slice %122 {offsets = [1, 0, 0], sizes = [15, 16, 128], strides = [1, 1, 1]} : vector<16x16x128xf32> to vector<15x16x128xf32>
    %132 = tpu.concatenate %131, %118 in 0 : vector<15x16x128xf32>, vector<1x16x128xf32> -> vector<16x16x128xf32>
    %133 = vector.broadcast %113 : vector<1x1x128xf32> to vector<16x16x128xf32>
    %134 = arith.mulf %132, %133 : vector<16x16x128xf32>
    %135 = arith.addf %130, %134 : vector<16x16x128xf32>
    %136 = vector.broadcast %109 : vector<1x1x128xf32> to vector<16x16x128xf32>
    %137 = arith.mulf %99, %136 : vector<16x16x128xf32>
    %138 = arith.addf %135, %137 : vector<16x16x128xf32>
    %139 = vector.extract_strided_slice %99 {offsets = [0, 0, 0], sizes = [15, 16, 128], strides = [1, 1, 1]} : vector<16x16x128xf32> to vector<15x16x128xf32>
    %140 = tpu.concatenate %118, %139 in 0 : vector<1x16x128xf32>, vector<15x16x128xf32> -> vector<16x16x128xf32>
    %141 = vector.broadcast %103 : vector<1x1x128xf32> to vector<16x16x128xf32>
    %142 = arith.mulf %140, %141 : vector<16x16x128xf32>
    %143 = arith.addf %138, %142 : vector<16x16x128xf32>
    %144 = vector.extract_strided_slice %99 {offsets = [1, 0, 0], sizes = [15, 16, 128], strides = [1, 1, 1]} : vector<16x16x128xf32> to vector<15x16x128xf32>
    %145 = tpu.concatenate %144, %118 in 0 : vector<15x16x128xf32>, vector<1x16x128xf32> -> vector<16x16x128xf32>
    %146 = vector.broadcast %115 : vector<1x1x128xf32> to vector<16x16x128xf32>
    %147 = arith.mulf %145, %146 : vector<16x16x128xf32>
    %148 = arith.addf %143, %147 : vector<16x16x128xf32>
    %c15_i32_88 = arith.constant 15 : i32
    %149 = tpu.dynamic_rotate %99 by %c15_i32_88 dim 1 : vector<16x16x128xf32>, i32 -> vector<16x16x128xf32>
    %150 = vector.broadcast %8 : vector<1x16x128xf32> to vector<16x16x128xf32>
    %151 = arith.mulf %149, %150 : vector<16x16x128xf32>
    %152 = vector.broadcast %111 : vector<1x1x128xf32> to vector<16x16x128xf32>
    %153 = arith.mulf %151, %152 : vector<16x16x128xf32>
    %154 = arith.addf %148, %153 : vector<16x16x128xf32>
    %155 = vector.extract_strided_slice %151 {offsets = [0, 0, 0], sizes = [15, 16, 128], strides = [1, 1, 1]} : vector<16x16x128xf32> to vector<15x16x128xf32>
    %156 = tpu.concatenate %118, %155 in 0 : vector<1x16x128xf32>, vector<15x16x128xf32> -> vector<16x16x128xf32>
    %157 = vector.broadcast %105 : vector<1x1x128xf32> to vector<16x16x128xf32>
    %158 = arith.mulf %156, %157 : vector<16x16x128xf32>
    %159 = arith.addf %154, %158 : vector<16x16x128xf32>
    %160 = vector.extract_strided_slice %151 {offsets = [1, 0, 0], sizes = [15, 16, 128], strides = [1, 1, 1]} : vector<16x16x128xf32> to vector<15x16x128xf32>
    %161 = tpu.concatenate %160, %118 in 0 : vector<15x16x128xf32>, vector<1x16x128xf32> -> vector<16x16x128xf32>
    %162 = vector.broadcast %117 : vector<1x1x128xf32> to vector<16x16x128xf32>
    %163 = arith.mulf %161, %162 : vector<16x16x128xf32>
    %164 = arith.addf %159, %163 : vector<16x16x128xf32>
    %c0_89 = arith.constant 0 : index
    %c0_90 = arith.constant 0 : index
    %c0_91 = arith.constant 0 : index
    %165 = vector.load %arg9[%c0_89, %c0_90, %c0_91] : memref<1x1x128xf32, #tpu.memory_space<vmem>>, vector<1x1x128xf32>
    %166 = vector.broadcast %165 : vector<1x1x128xf32> to vector<16x16x128xf32>
    %167 = arith.addf %164, %166 : vector<16x16x128xf32>
    %cst_92 = arith.constant 0.000000e+00 : f32
    %168 = vector.broadcast %cst_92 : f32 to vector<16x16x128xf32>
    %169 = arith.maximumf %167, %168 : vector<16x16x128xf32>
    %170 = arith.addf %99, %169 : vector<16x16x128xf32>
    %171 = vector.shape_cast %170 : vector<16x16x128xf32> to vector<256x128xf32>
    %c0_93 = arith.constant 0 : index
    %c0_94 = arith.constant 0 : index
    %172 = vector.load %arg10[%c0_93, %c0_94] : memref<128x128xf32, #tpu.memory_space<vmem>>, vector<128x128xf32>
    %cst_95 = arith.constant dense<0.000000e+00> : vector<256x128xf32>
    %173 = tpu.matmul %171, %172, %cst_95 {dimension_numbers = #tpu.dot_dimension_numbers<[1], [0], [0], [1], [0, 0, 1, 1], [], []>} : vector<256x128xf32>, vector<128x128xf32>, vector<256x128xf32> -> vector<256x128xf32>
    %c0_96 = arith.constant 0 : index
    %c0_97 = arith.constant 0 : index
    %174 = vector.load %arg11[%c0_96, %c0_97] : memref<1x128xf32, #tpu.memory_space<vmem>>, vector<1x128xf32>
    %175 = vector.broadcast %174 : vector<1x128xf32> to vector<256x128xf32>
    %176 = arith.addf %173, %175 : vector<256x128xf32>
    %cst_98 = arith.constant 0.000000e+00 : f32
    %177 = vector.broadcast %cst_98 : f32 to vector<256x128xf32>
    %178 = arith.subf %177, %176 : vector<256x128xf32>
    %179 = math.exp %178 : vector<256x128xf32>
    %cst_99 = arith.constant 1.000000e+00 : f32
    %180 = vector.broadcast %cst_99 : f32 to vector<256x128xf32>
    %181 = arith.addf %180, %179 : vector<256x128xf32>
    %182 = tpu.reciprocal %181 {approx = true} : vector<256x128xf32> -> vector<256x128xf32>
    %183 = arith.mulf %176, %182 : vector<256x128xf32>
    %184 = vector.shape_cast %183 : vector<256x128xf32> to vector<16x16x128xf32>
    %c0_100 = arith.constant 0 : index
    %c0_101 = arith.constant 0 : index
    %c0_102 = arith.constant 0 : index
    %c0_103 = arith.constant 0 : index
    %185 = vector.load %arg12[%c0_100, %c0_101, %c0_102, %c0_103] : memref<9x1x1x128xf32, #tpu.memory_space<vmem>>, vector<1x1x1x128xf32>
    %186 = vector.shape_cast %185 : vector<1x1x1x128xf32> to vector<1x1x128xf32>
    %c1_104 = arith.constant 1 : index
    %c0_105 = arith.constant 0 : index
    %c0_106 = arith.constant 0 : index
    %c0_107 = arith.constant 0 : index
    %187 = vector.load %arg12[%c1_104, %c0_105, %c0_106, %c0_107] : memref<9x1x1x128xf32, #tpu.memory_space<vmem>>, vector<1x1x1x128xf32>
    %188 = vector.shape_cast %187 : vector<1x1x1x128xf32> to vector<1x1x128xf32>
    %c2_108 = arith.constant 2 : index
    %c0_109 = arith.constant 0 : index
    %c0_110 = arith.constant 0 : index
    %c0_111 = arith.constant 0 : index
    %189 = vector.load %arg12[%c2_108, %c0_109, %c0_110, %c0_111] : memref<9x1x1x128xf32, #tpu.memory_space<vmem>>, vector<1x1x1x128xf32>
    %190 = vector.shape_cast %189 : vector<1x1x1x128xf32> to vector<1x1x128xf32>
    %c3_112 = arith.constant 3 : index
    %c0_113 = arith.constant 0 : index
    %c0_114 = arith.constant 0 : index
    %c0_115 = arith.constant 0 : index
    %191 = vector.load %arg12[%c3_112, %c0_113, %c0_114, %c0_115] : memref<9x1x1x128xf32, #tpu.memory_space<vmem>>, vector<1x1x1x128xf32>
    %192 = vector.shape_cast %191 : vector<1x1x1x128xf32> to vector<1x1x128xf32>
    %c4_116 = arith.constant 4 : index
    %c0_117 = arith.constant 0 : index
    %c0_118 = arith.constant 0 : index
    %c0_119 = arith.constant 0 : index
    %193 = vector.load %arg12[%c4_116, %c0_117, %c0_118, %c0_119] : memref<9x1x1x128xf32, #tpu.memory_space<vmem>>, vector<1x1x1x128xf32>
    %194 = vector.shape_cast %193 : vector<1x1x1x128xf32> to vector<1x1x128xf32>
    %c5_120 = arith.constant 5 : index
    %c0_121 = arith.constant 0 : index
    %c0_122 = arith.constant 0 : index
    %c0_123 = arith.constant 0 : index
    %195 = vector.load %arg12[%c5_120, %c0_121, %c0_122, %c0_123] : memref<9x1x1x128xf32, #tpu.memory_space<vmem>>, vector<1x1x1x128xf32>
    %196 = vector.shape_cast %195 : vector<1x1x1x128xf32> to vector<1x1x128xf32>
    %c6_124 = arith.constant 6 : index
    %c0_125 = arith.constant 0 : index
    %c0_126 = arith.constant 0 : index
    %c0_127 = arith.constant 0 : index
    %197 = vector.load %arg12[%c6_124, %c0_125, %c0_126, %c0_127] : memref<9x1x1x128xf32, #tpu.memory_space<vmem>>, vector<1x1x1x128xf32>
    %198 = vector.shape_cast %197 : vector<1x1x1x128xf32> to vector<1x1x128xf32>
    %c7_128 = arith.constant 7 : index
    %c0_129 = arith.constant 0 : index
    %c0_130 = arith.constant 0 : index
    %c0_131 = arith.constant 0 : index
    %199 = vector.load %arg12[%c7_128, %c0_129, %c0_130, %c0_131] : memref<9x1x1x128xf32, #tpu.memory_space<vmem>>, vector<1x1x1x128xf32>
    %200 = vector.shape_cast %199 : vector<1x1x1x128xf32> to vector<1x1x128xf32>
    %c8_132 = arith.constant 8 : index
    %c0_133 = arith.constant 0 : index
    %c0_134 = arith.constant 0 : index
    %c0_135 = arith.constant 0 : index
    %201 = vector.load %arg12[%c8_132, %c0_133, %c0_134, %c0_135] : memref<9x1x1x128xf32, #tpu.memory_space<vmem>>, vector<1x1x1x128xf32>
    %202 = vector.shape_cast %201 : vector<1x1x1x128xf32> to vector<1x1x128xf32>
    %cst_136 = arith.constant 0.000000e+00 : f32
    %203 = vector.broadcast %cst_136 : f32 to vector<1x16x128xf32>
    %cst_137 = arith.constant 0.000000e+00 : f32
    %204 = vector.broadcast %cst_137 : f32 to vector<16x16x128xf32>
    %c1_i32_138 = arith.constant 1 : i32
    %205 = tpu.dynamic_rotate %184 by %c1_i32_138 dim 1 : vector<16x16x128xf32>, i32 -> vector<16x16x128xf32>
    %206 = vector.broadcast %4 : vector<1x16x128xf32> to vector<16x16x128xf32>
    %207 = arith.mulf %205, %206 : vector<16x16x128xf32>
    %208 = vector.broadcast %192 : vector<1x1x128xf32> to vector<16x16x128xf32>
    %209 = arith.mulf %207, %208 : vector<16x16x128xf32>
    %210 = arith.addf %204, %209 : vector<16x16x128xf32>
    %211 = vector.extract_strided_slice %207 {offsets = [0, 0, 0], sizes = [15, 16, 128], strides = [1, 1, 1]} : vector<16x16x128xf32> to vector<15x16x128xf32>
    %212 = tpu.concatenate %203, %211 in 0 : vector<1x16x128xf32>, vector<15x16x128xf32> -> vector<16x16x128xf32>
    %213 = vector.broadcast %186 : vector<1x1x128xf32> to vector<16x16x128xf32>
    %214 = arith.mulf %212, %213 : vector<16x16x128xf32>
    %215 = arith.addf %210, %214 : vector<16x16x128xf32>
    %216 = vector.extract_strided_slice %207 {offsets = [1, 0, 0], sizes = [15, 16, 128], strides = [1, 1, 1]} : vector<16x16x128xf32> to vector<15x16x128xf32>
    %217 = tpu.concatenate %216, %203 in 0 : vector<15x16x128xf32>, vector<1x16x128xf32> -> vector<16x16x128xf32>
    %218 = vector.broadcast %198 : vector<1x1x128xf32> to vector<16x16x128xf32>
    %219 = arith.mulf %217, %218 : vector<16x16x128xf32>
    %220 = arith.addf %215, %219 : vector<16x16x128xf32>
    %221 = vector.broadcast %194 : vector<1x1x128xf32> to vector<16x16x128xf32>
    %222 = arith.mulf %184, %221 : vector<16x16x128xf32>
    %223 = arith.addf %220, %222 : vector<16x16x128xf32>
    %224 = vector.extract_strided_slice %184 {offsets = [0, 0, 0], sizes = [15, 16, 128], strides = [1, 1, 1]} : vector<16x16x128xf32> to vector<15x16x128xf32>
    %225 = tpu.concatenate %203, %224 in 0 : vector<1x16x128xf32>, vector<15x16x128xf32> -> vector<16x16x128xf32>
    %226 = vector.broadcast %188 : vector<1x1x128xf32> to vector<16x16x128xf32>
    %227 = arith.mulf %225, %226 : vector<16x16x128xf32>
    %228 = arith.addf %223, %227 : vector<16x16x128xf32>
    %229 = vector.extract_strided_slice %184 {offsets = [1, 0, 0], sizes = [15, 16, 128], strides = [1, 1, 1]} : vector<16x16x128xf32> to vector<15x16x128xf32>
    %230 = tpu.concatenate %229, %203 in 0 : vector<15x16x128xf32>, vector<1x16x128xf32> -> vector<16x16x128xf32>
    %231 = vector.broadcast %200 : vector<1x1x128xf32> to vector<16x16x128xf32>
    %232 = arith.mulf %230, %231 : vector<16x16x128xf32>
    %233 = arith.addf %228, %232 : vector<16x16x128xf32>
    %c15_i32_139 = arith.constant 15 : i32
    %234 = tpu.dynamic_rotate %184 by %c15_i32_139 dim 1 : vector<16x16x128xf32>, i32 -> vector<16x16x128xf32>
    %235 = vector.broadcast %8 : vector<1x16x128xf32> to vector<16x16x128xf32>
    %236 = arith.mulf %234, %235 : vector<16x16x128xf32>
    %237 = vector.broadcast %196 : vector<1x1x128xf32> to vector<16x16x128xf32>
    %238 = arith.mulf %236, %237 : vector<16x16x128xf32>
    %239 = arith.addf %233, %238 : vector<16x16x128xf32>
    %240 = vector.extract_strided_slice %236 {offsets = [0, 0, 0], sizes = [15, 16, 128], strides = [1, 1, 1]} : vector<16x16x128xf32> to vector<15x16x128xf32>
    %241 = tpu.concatenate %203, %240 in 0 : vector<1x16x128xf32>, vector<15x16x128xf32> -> vector<16x16x128xf32>
    %242 = vector.broadcast %190 : vector<1x1x128xf32> to vector<16x16x128xf32>
    %243 = arith.mulf %241, %242 : vector<16x16x128xf32>
    %244 = arith.addf %239, %243 : vector<16x16x128xf32>
    %245 = vector.extract_strided_slice %236 {offsets = [1, 0, 0], sizes = [15, 16, 128], strides = [1, 1, 1]} : vector<16x16x128xf32> to vector<15x16x128xf32>
    %246 = tpu.concatenate %245, %203 in 0 : vector<15x16x128xf32>, vector<1x16x128xf32> -> vector<16x16x128xf32>
    %247 = vector.broadcast %202 : vector<1x1x128xf32> to vector<16x16x128xf32>
    %248 = arith.mulf %246, %247 : vector<16x16x128xf32>
    %249 = arith.addf %244, %248 : vector<16x16x128xf32>
    %c0_140 = arith.constant 0 : index
    %c0_141 = arith.constant 0 : index
    %c0_142 = arith.constant 0 : index
    %250 = vector.load %arg13[%c0_140, %c0_141, %c0_142] : memref<1x1x128xf32, #tpu.memory_space<vmem>>, vector<1x1x128xf32>
    %251 = vector.broadcast %250 : vector<1x1x128xf32> to vector<16x16x128xf32>
    %252 = arith.addf %249, %251 : vector<16x16x128xf32>
    %cst_143 = arith.constant 0.000000e+00 : f32
    %253 = vector.broadcast %cst_143 : f32 to vector<16x16x128xf32>
    %254 = arith.maximumf %252, %253 : vector<16x16x128xf32>
    %255 = arith.addf %184, %254 : vector<16x16x128xf32>
    %256 = vector.shape_cast %255 : vector<16x16x128xf32> to vector<256x128xf32>
    %c0_144 = arith.constant 0 : index
    %c0_145 = arith.constant 0 : index
    %257 = vector.load %arg14[%c0_144, %c0_145] : memref<128x128xf32, #tpu.memory_space<vmem>>, vector<128x128xf32>
    %cst_146 = arith.constant dense<0.000000e+00> : vector<256x128xf32>
    %258 = tpu.matmul %256, %257, %cst_146 {dimension_numbers = #tpu.dot_dimension_numbers<[1], [0], [0], [1], [0, 0, 1, 1], [], []>} : vector<256x128xf32>, vector<128x128xf32>, vector<256x128xf32> -> vector<256x128xf32>
    %cst_147 = arith.constant 0.000000e+00 : f32
    %259 = vector.broadcast %cst_147 : f32 to vector<256x128xf32>
    %260 = arith.maximumf %258, %259 : vector<256x128xf32>
    %cst_148 = arith.constant 0.000000e+00 : f32
    %261 = vector.broadcast %cst_148 : f32 to vector<256x128xf32>
    %262 = arith.subf %261, %260 : vector<256x128xf32>
    %263 = math.exp %262 : vector<256x128xf32>
    %cst_149 = arith.constant 1.000000e+00 : f32
    %264 = vector.broadcast %cst_149 : f32 to vector<256x128xf32>
    %265 = arith.addf %264, %263 : vector<256x128xf32>
    %266 = tpu.reciprocal %265 : vector<256x128xf32> -> vector<256x128xf32>
    %267 = arith.mulf %11, %266 : vector<256x128xf32>
    %268 = arith.addf %11, %267 : vector<256x128xf32>
    %269 = vector.shape_cast %268 : vector<256x128xf32> to vector<16x16x128xf32>
    %c0_150 = arith.constant 0 : index
    %c0_151 = arith.constant 0 : index
    %c0_152 = arith.constant 0 : index
    %c0_153 = arith.constant 0 : index
    %270 = vector.load %arg15[%c0_150, %c0_151, %c0_152, %c0_153] : memref<1x16x16x128xf32, #tpu.memory_space<vmem>>, vector<1x16x16x128xf32>
    %271 = vector.shape_cast %270 : vector<1x16x16x128xf32> to vector<16x16x128xf32>
    %272 = vector.shape_cast %269 : vector<16x16x128xf32> to vector<1x16x16x128xf32>
    tpu.vector_store %arg15[%c0_150, %c0_151, %c0_152, %c0_153], %272 {strides = array<i32>} : memref<1x16x16x128xf32, #tpu.memory_space<vmem>>, vector<1x16x16x128xf32>,
    return
  }
  func.func @transform_0(%arg0: i32) -> (i32, i32, i32, i32) {
    %c0_i32 = arith.constant 0 : i32
    %c0_i32_0 = arith.constant 0 : i32
    %c0_i32_1 = arith.constant 0 : i32
    %c0_i32_2 = arith.constant 0 : i32
    return %arg0, %c0_i32, %c0_i32_0, %c0_i32_1 : i32, i32, i32, i32
  }
  func.func @transform_1(%arg0: i32) -> (i32, i32) {
    %c0_i32 = arith.constant 0 : i32
    %c0_i32_0 = arith.constant 0 : i32
    %c0_i32_1 = arith.constant 0 : i32
    return %c0_i32, %c0_i32_0 : i32, i32
  }
  func.func @transform_2(%arg0: i32) -> (i32, i32) {
    %c0_i32 = arith.constant 0 : i32
    %c0_i32_0 = arith.constant 0 : i32
    %c0_i32_1 = arith.constant 0 : i32
    return %c0_i32, %c0_i32_0 : i32, i32
  }
  func.func @transform_3(%arg0: i32) -> (i32, i32, i32, i32) {
    %c0_i32 = arith.constant 0 : i32
    %c0_i32_0 = arith.constant 0 : i32
    %c0_i32_1 = arith.constant 0 : i32
    %c0_i32_2 = arith.constant 0 : i32
    %c0_i32_3 = arith.constant 0 : i32
    return %c0_i32, %c0_i32_0, %c0_i32_1, %c0_i32_2 : i32, i32, i32, i32
  }
  func.func @transform_4(%arg0: i32) -> (i32, i32, i32) {
    %c0_i32 = arith.constant 0 : i32
    %c0_i32_0 = arith.constant 0 : i32
    %c0_i32_1 = arith.constant 0 : i32
    %c0_i32_2 = arith.constant 0 : i32
    return %c0_i32, %c0_i32_0, %c0_i32_1 : i32, i32, i32
  }
  func.func @transform_5(%arg0: i32) -> (i32, i32) {
    %c0_i32 = arith.constant 0 : i32
    %c0_i32_0 = arith.constant 0 : i32
    %c0_i32_1 = arith.constant 0 : i32
    return %c0_i32, %c0_i32_0 : i32, i32
  }
  func.func @transform_6(%arg0: i32) -> (i32, i32) {
    %c0_i32 = arith.constant 0 : i32
    %c0_i32_0 = arith.constant 0 : i32
    %c0_i32_1 = arith.constant 0 : i32
    return %c0_i32, %c0_i32_0 : i32, i32
  }
  func.func @transform_7(%arg0: i32) -> (i32, i32, i32, i32) {
    %c0_i32 = arith.constant 0 : i32
    %c0_i32_0 = arith.constant 0 : i32
    %c0_i32_1 = arith.constant 0 : i32
    %c0_i32_2 = arith.constant 0 : i32
    %c0_i32_3 = arith.constant 0 : i32
    return %c0_i32, %c0_i32_0, %c0_i32_1, %c0_i32_2 : i32, i32, i32, i32
  }
  func.func @transform_8(%arg0: i32) -> (i32, i32, i32) {
    %c0_i32 = arith.constant 0 : i32
    %c0_i32_0 = arith.constant 0 : i32
    %c0_i32_1 = arith.constant 0 : i32
    %c0_i32_2 = arith.constant 0 : i32
    return %c0_i32, %c0_i32_0, %c0_i32_1 : i32, i32, i32
  }
  func.func @transform_9(%arg0: i32) -> (i32, i32) {
    %c0_i32 = arith.constant 0 : i32
    %c0_i32_0 = arith.constant 0 : i32
    %c0_i32_1 = arith.constant 0 : i32
    return %c0_i32, %c0_i32_0 : i32, i32
  }
  func.func @transform_10(%arg0: i32) -> (i32, i32) {
    %c0_i32 = arith.constant 0 : i32
    %c0_i32_0 = arith.constant 0 : i32
    %c0_i32_1 = arith.constant 0 : i32
    return %c0_i32, %c0_i32_0 : i32, i32
  }
  func.func @transform_11(%arg0: i32) -> (i32, i32, i32, i32) {
    %c0_i32 = arith.constant 0 : i32
    %c0_i32_0 = arith.constant 0 : i32
    %c0_i32_1 = arith.constant 0 : i32
    %c0_i32_2 = arith.constant 0 : i32
    %c0_i32_3 = arith.constant 0 : i32
    return %c0_i32, %c0_i32_0, %c0_i32_1, %c0_i32_2 : i32, i32, i32, i32
  }
  func.func @transform_12(%arg0: i32) -> (i32, i32, i32) {
    %c0_i32 = arith.constant 0 : i32
    %c0_i32_0 = arith.constant 0 : i32
    %c0_i32_1 = arith.constant 0 : i32
    %c0_i32_2 = arith.constant 0 : i32
    return %c0_i32, %c0_i32_0, %c0_i32_1 : i32, i32, i32
  }
  func.func @transform_13(%arg0: i32) -> (i32, i32) {
    %c0_i32 = arith.constant 0 : i32
    %c0_i32_0 = arith.constant 0 : i32
    %c0_i32_1 = arith.constant 0 : i32
    return %c0_i32, %c0_i32_0 : i32, i32
  }
  func.func @transform_14(%arg0: i32) -> (i32, i32, i32, i32) {
    %c0_i32 = arith.constant 0 : i32
    %c0_i32_0 = arith.constant 0 : i32
    %c0_i32_1 = arith.constant 0 : i32
    %c0_i32_2 = arith.constant 0 : i32
    return %arg0, %c0_i32, %c0_i32_0, %c0_i32_1 : i32, i32, i32, i32
  }
}

</mosaic_0001>

<llo_original>
// kernel: tpu_custom_call.1
$region0: #{tpu_custom_call.1}
  #allocation0 [shape = 'u32[]', space=smem, size = 0x4, offset = 0x4, fixed_abs, tag = 'smem constant byte address 0x4 - core index']
  #allocation1 [shape = 'u32[144,128]{1,0:T(1,128)}', space=vmem, size = 0x12000, scoped, tag = 'internal scratch']
  %s0 = inlined_call_operand.hbm [shape: f32[1,16,16,128], index: 0, kind: input, shape index: {}]
  %s1 = inlined_call_operand.hbm [shape: f32[128,128], index: 1, kind: input, shape index: {}]
  %s2 = inlined_call_operand.hbm [shape: f32[1,128], index: 2, kind: input, shape index: {}]
  %s3 = inlined_call_operand.hbm [shape: f32[9,1,1,128], index: 3, kind: input, shape index: {}]
  %s4 = inlined_call_operand.hbm [shape: f32[1,1,128], index: 4, kind: input, shape index: {}]
  %s5 = inlined_call_operand.hbm [shape: f32[128,128], index: 5, kind: input, shape index: {}]
  %s6 = inlined_call_operand.hbm [shape: f32[1,128], index: 6, kind: input, shape index: {}]
  %s7 = inlined_call_operand.vmem [shape: f32[9,1,1,128], index: 7, kind: input, shape index: {}]
  %s8 = inlined_call_operand.hbm [shape: f32[1,1,128], index: 8, kind: input, shape index: {}]
  %s9 = inlined_call_operand.hbm [shape: f32[128,128], index: 9, kind: input, shape index: {}]
  %s10 = inlined_call_operand.hbm [shape: f32[1,128], index: 10, kind: input, shape index: {}]
  %s11 = inlined_call_operand.vmem [shape: f32[9,1,1,128], index: 11, kind: input, shape index: {}]
  %s12 = inlined_call_operand.vmem [shape: f32[1,1,128], index: 12, kind: input, shape index: {}]
  %s13 = inlined_call_operand.hbm [shape: f32[128,128], index: 13, kind: input, shape index: {}]
  %s14 = inlined_call_operand.hbm [shape: f32[1,16,16,128], index: 14, kind: output, shape index: {}]
  %s15 = sld [smem:[#allocation0]]
  $region110: #{tpu_custom_call.1} parent=0
    _
  %s17 = ssub.s32 1, %s15
  %s18 = scalar_select 0, %s17, %s15
  $region1: #{tpu_custom_call.1} parent=0
    #allocation2 [shape = 'u8[131072]{0}', space=vmem, size = 0x20000, scoped, tag = 'input window, operand 0, single buffered']
    #allocation3 [shape = 's32[1]{0}', space=sflag, size = 0x4, scoped, tag = 'scoped memory for tpu_custom_call.1']
    #allocation4 [shape = 's32[1]{0}', space=sflag, size = 0x4, scoped, tag = 'scoped memory for tpu_custom_call.1']
    #allocation5 [shape = 'u8[65536]{0}', space=vmem, size = 0x10000, scoped, tag = 'input window, operand 1, single buffered']
    #allocation6 [shape = 's32[1]{0}', space=sflag, size = 0x4, scoped, tag = 'scoped memory for tpu_custom_call.1']
    #allocation7 [shape = 'u8[512]{0}', space=vmem, size = 0x400, scoped, tag = 'input window, operand 2, single buffered']
    #allocation8 [shape = 'u8[4608]{0}', space=vmem, size = 0x1400, scoped, tag = 'input window, operand 3, single buffered']
    #allocation9 [shape = 's32[1]{0}', space=sflag, size = 0x4, scoped, tag = 'scoped memory for tpu_custom_call.1']
    #allocation10 [shape = 'u8[512]{0}', space=vmem, size = 0x400, scoped, tag = 'input window, operand 4, single buffered']
    #allocation11 [shape = 'u8[65536]{0}', space=vmem, size = 0x10000, scoped, tag = 'input window, operand 5, single buffered']
    #allocation12 [shape = 's32[1]{0}', space=sflag, size = 0x4, scoped, tag = 'scoped memory for tpu_custom_call.1']
    #allocation13 [shape = 'u8[512]{0}', space=vmem, size = 0x400, scoped, tag = 'input window, operand 6, single buffered']
    #allocation14 [shape = 'u8[512]{0}', space=vmem, size = 0x400, scoped, tag = 'input window, operand 8, single buffered']
    #allocation15 [shape = 's32[1]{0}', space=sflag, size = 0x4, scoped, tag = 'scoped memory for tpu_custom_call.1']
    #allocation16 [shape = 'u8[65536]{0}', space=vmem, size = 0x10000, scoped, tag = 'input window, operand 9, single buffered']
    #allocation17 [shape = 'u8[512]{0}', space=vmem, size = 0x400, scoped, tag = 'input window, operand 10, single buffered']
    #allocation18 [shape = 's32[1]{0}', space=sflag, size = 0x4, scoped, tag = 'scoped memory for tpu_custom_call.1']
    #allocation19 [shape = 'u8[65536]{0}', space=vmem, size = 0x10000, scoped, tag = 'input window, operand 13, single buffered']
    #allocation20 [shape = 'u8[131072]{0}', space=vmem, size = 0x20000, scoped, tag = 'output window, operand 0, single buffered']
    %19 = vsyncpa [#allocation3], 0
    %20 = vsyncpa [#allocation6], 0
    %21 = vsyncpa [#allocation9], 0
    %22 = vsyncpa [#allocation12], 0
    %23 = vsyncpa [#allocation15], 0
    %24 = vsyncpa [#allocation18], 0
    %25 = vsyncpa [#allocation4], 0
    // Predicated region
    $region2: #{tpu_custom_call.1} parent=1 // pred_check
      _
    $region3: #{tpu_custom_call.1} parent=1 // pred_check_branch
      %27 = sbr.rel (0) target = $region5
    $region4: #{tpu_custom_call.1} parent=1 // pred_region
      %s29 = ssub.s32 4096, 4096
      %30 = vsyncadd [#allocation3], %s29
      %s31 = sshll.u32 [#allocation2], 4
      %s32 = int_to_ptr.vmem [resolvable:$true] %s31
      %37 = dma.hbm_to_vmem [thread:$0]  %s0, 4096, %s32, [#allocation3], 128, 128, 8
    $region5: #{tpu_custom_call.1} parent=1 // pred_fallthru
      _
    // Predicated region
    $region6: #{tpu_custom_call.1} parent=1 // pred_check
      _
    $region7: #{tpu_custom_call.1} parent=1 // pred_check_branch
      %39 = sbr.rel (0) target = $region9
    $region8: #{tpu_custom_call.1} parent=1 // pred_region
      %s41 = ssub.s32 2048, 2048
      %42 = vsyncadd [#allocation6], %s41
      %s43 = sshll.u32 [#allocation5], 4
      %s44 = int_to_ptr.vmem [resolvable:$true] %s43
      %49 = dma.hbm_to_vmem [thread:$0]  %s1, 2048, %s44, [#allocation6], 128, 128, 8
    $region9: #{tpu_custom_call.1} parent=1 // pred_fallthru
      _
    // Predicated region
    $region10: #{tpu_custom_call.1} parent=1 // pred_check
      _
    $region11: #{tpu_custom_call.1} parent=1 // pred_check_branch
      %51 = sbr.rel (0) target = $region13
    $region12: #{tpu_custom_call.1} parent=1 // pred_region
      %s53 = ssub.s32 16, 16
      %54 = vsyncadd [#allocation6], %s53
      %s56 = sshll.u32 [#allocation7], 4
      %s57 = int_to_ptr.vmem [resolvable:$true] %s56
      %59 = dma.hbm_to_vmem [thread:$0]  %s2, 16, %s57, [#allocation6]
    $region13: #{tpu_custom_call.1} parent=1 // pred_fallthru
      _
    // Predicated region
    $region14: #{tpu_custom_call.1} parent=1 // pred_check
      _
    $region15: #{tpu_custom_call.1} parent=1 // pred_check_branch
      %61 = sbr.rel (0) target = $region17
    $region16: #{tpu_custom_call.1} parent=1 // pred_region
      %s63 = ssub.s32 144, 144
      %64 = vsyncadd [#allocation9], %s63
      %s65 = sshll.u32 [#allocation8], 4
      %s66 = int_to_ptr.vmem [resolvable:$true] %s65
      %71 = dma.hbm_to_vmem [thread:$0]  %s3, 144, %s66, [#allocation9], 16, 16, 1
    $region17: #{tpu_custom_call.1} parent=1 // pred_fallthru
      _
    // Predicated region
    $region18: #{tpu_custom_call.1} parent=1 // pred_check
      _
    $region19: #{tpu_custom_call.1} parent=1 // pred_check_branch
      %73 = sbr.rel (0) target = $region21
    $region20: #{tpu_custom_call.1} parent=1 // pred_region
      %s75 = ssub.s32 16, 16
      %76 = vsyncadd [#allocation9], %s75
      %s78 = sshll.u32 [#allocation10], 4
      %s79 = int_to_ptr.vmem [resolvable:$true] %s78
      %81 = dma.hbm_to_vmem [thread:$0]  %s4, 16, %s79, [#allocation9]
    $region21: #{tpu_custom_call.1} parent=1 // pred_fallthru
      _
    // Predicated region
    $region22: #{tpu_custom_call.1} parent=1 // pred_check
      _
    $region23: #{tpu_custom_call.1} parent=1 // pred_check_branch
      %83 = sbr.rel (0) target = $region25
    $region24: #{tpu_custom_call.1} parent=1 // pred_region
      %s85 = ssub.s32 2048, 2048
      %86 = vsyncadd [#allocation12], %s85
      %s87 = sshll.u32 [#allocation11], 4
      %s88 = int_to_ptr.vmem [resolvable:$true] %s87
      %93 = dma.hbm_to_vmem [thread:$0]  %s5, 2048, %s88, [#allocation12], 128, 128, 8
    $region25: #{tpu_custom_call.1} parent=1 // pred_fallthru
      _
    // Predicated region
    $region26: #{tpu_custom_call.1} parent=1 // pred_check
      _
    $region27: #{tpu_custom_call.1} parent=1 // pred_check_branch
      %95 = sbr.rel (0) target = $region29
    $region28: #{tpu_custom_call.1} parent=1 // pred_region
      %s97 = ssub.s32 16, 16
      %98 = vsyncadd [#allocation12], %s97
      %s100 = sshll.u32 [#allocation13], 4
      %s101 = int_to_ptr.vmem [resolvable:$true] %s100
      %103 = dma.hbm_to_vmem [thread:$0]  %s6, 16, %s101, [#allocation12]
    $region29: #{tpu_custom_call.1} parent=1 // pred_fallthru
      _
    // Predicated region
    $region30: #{tpu_custom_call.1} parent=1 // pred_check
      _
    $region31: #{tpu_custom_call.1} parent=1 // pred_check_branch
      %105 = sbr.rel (0) target = $region33
    $region32: #{tpu_custom_call.1} parent=1 // pred_region
      _
    $region33: #{tpu_custom_call.1} parent=1 // pred_fallthru
      _
    // Predicated region
    $region34: #{tpu_custom_call.1} parent=1 // pred_check
      _
    $region35: #{tpu_custom_call.1} parent=1 // pred_check_branch
      %107 = sbr.rel (0) target = $region37
    $region36: #{tpu_custom_call.1} parent=1 // pred_region
      %s109 = ssub.s32 16, 16
      %110 = vsyncadd [#allocation15], %s109
      %s112 = sshll.u32 [#allocation14], 4
      %s113 = int_to_ptr.vmem [resolvable:$true] %s112
      %115 = dma.hbm_to_vmem [thread:$0]  %s8, 16, %s113, [#allocation15]
    $region37: #{tpu_custom_call.1} parent=1 // pred_fallthru
      _
    // Predicated region
    $region38: #{tpu_custom_call.1} parent=1 // pred_check
      _
    $region39: #{tpu_custom_call.1} parent=1 // pred_check_branch
      %117 = sbr.rel (0) target = $region41
    $region40: #{tpu_custom_call.1} parent=1 // pred_region
      %s119 = ssub.s32 2048, 2048
      %120 = vsyncadd [#allocation15], %s119
      %s121 = sshll.u32 [#allocation16], 4
      %s122 = int_to_ptr.vmem [resolvable:$true] %s121
      %127 = dma.hbm_to_vmem [thread:$0]  %s9, 2048, %s122, [#allocation15], 128, 128, 8
    $region41: #{tpu_custom_call.1} parent=1 // pred_fallthru
      _
    // Predicated region
    $region42: #{tpu_custom_call.1} parent=1 // pred_check
      _
    $region43: #{tpu_custom_call.1} parent=1 // pred_check_branch
      %129 = sbr.rel (0) target = $region45
    $region44: #{tpu_custom_call.1} parent=1 // pred_region
      %s131 = ssub.s32 16, 16
      %132 = vsyncadd [#allocation18], %s131
      %s134 = sshll.u32 [#allocation17], 4
      %s135 = int_to_ptr.vmem [resolvable:$true] %s134
      %137 = dma.hbm_to_vmem [thread:$0]  %s10, 16, %s135, [#allocation18]
    $region45: #{tpu_custom_call.1} parent=1 // pred_fallthru
      _
    // Predicated region
    $region46: #{tpu_custom_call.1} parent=1 // pred_check
      _
    $region47: #{tpu_custom_call.1} parent=1 // pred_check_branch
      %139 = sbr.rel (0) target = $region49
    $region48: #{tpu_custom_call.1} parent=1 // pred_region
      _
    $region49: #{tpu_custom_call.1} parent=1 // pred_fallthru
      _
    // Predicated region
    $region50: #{tpu_custom_call.1} parent=1 // pred_check
      _
    $region51: #{tpu_custom_call.1} parent=1 // pred_check_branch
      %141 = sbr.rel (0) target = $region53
    $region52: #{tpu_custom_call.1} parent=1 // pred_region
      _
    $region53: #{tpu_custom_call.1} parent=1 // pred_fallthru
      _
    // Predicated region
    $region54: #{tpu_custom_call.1} parent=1 // pred_check
      _
    $region55: #{tpu_custom_call.1} parent=1 // pred_check_branch
      %143 = sbr.rel (0) target = $region57
    $region56: #{tpu_custom_call.1} parent=1 // pred_region
      %s145 = ssub.s32 2048, 2048
      %146 = vsyncadd [#allocation18], %s145
      %s147 = sshll.u32 [#allocation19], 4
      %s148 = int_to_ptr.vmem [resolvable:$true] %s147
      %153 = dma.hbm_to_vmem [thread:$0]  %s13, 2048, %s148, [#allocation18], 128, 128, 8
    $region57: #{tpu_custom_call.1} parent=1 // pred_fallthru
      _
    // Predicated region
    $region58: #{tpu_custom_call.1} parent=1 // pred_check
      _
    $region59: #{tpu_custom_call.1} parent=1 // pred_check_branch
      %155 = sbr.rel (0) target = $region61
    $region60: #{tpu_custom_call.1} parent=1 // pred_region
      %156 = dma.done [#allocation3], 4096
    $region61: #{tpu_custom_call.1} parent=1 // pred_fallthru
      _
    // Predicated region
    $region62: #{tpu_custom_call.1} parent=1 // pred_check
      _
    $region63: #{tpu_custom_call.1} parent=1 // pred_check_branch
      %158 = sbr.rel (0) target = $region65
    $region64: #{tpu_custom_call.1} parent=1 // pred_region
      %159 = dma.done [#allocation6], 2048
    $region65: #{tpu_custom_call.1} parent=1 // pred_fallthru
      _
    // Predicated region
    $region66: #{tpu_custom_call.1} parent=1 // pred_check
      _
    $region67: #{tpu_custom_call.1} parent=1 // pred_check_branch
      %161 = sbr.rel (0) target = $region69
    $region68: #{tpu_custom_call.1} parent=1 // pred_region
      %162 = dma.done [#allocation6], 16
    $region69: #{tpu_custom_call.1} parent=1 // pred_fallthru
      _
    // Predicated region
    $region70: #{tpu_custom_call.1} parent=1 // pred_check
      _
    $region71: #{tpu_custom_call.1} parent=1 // pred_check_branch
      %164 = sbr.rel (0) target = $region73
    $region72: #{tpu_custom_call.1} parent=1 // pred_region
      %165 = dma.done [#allocation9], 144
    $region73: #{tpu_custom_call.1} parent=1 // pred_fallthru
      _
    // Predicated region
    $region74: #{tpu_custom_call.1} parent=1 // pred_check
      _
    $region75: #{tpu_custom_call.1} parent=1 // pred_check_branch
      %167 = sbr.rel (0) target = $region77
    $region76: #{tpu_custom_call.1} parent=1 // pred_region
      %168 = dma.done [#allocation9], 16
    $region77: #{tpu_custom_call.1} parent=1 // pred_fallthru
      _
    // Predicated region
    $region78: #{tpu_custom_call.1} parent=1 // pred_check
      _
    $region79: #{tpu_custom_call.1} parent=1 // pred_check_branch
      %170 = sbr.rel (0) target = $region81
    $region80: #{tpu_custom_call.1} parent=1 // pred_region
      %171 = dma.done [#allocation12], 2048
    $region81: #{tpu_custom_call.1} parent=1 // pred_fallthru
      _
    // Predicated region
    $region82: #{tpu_custom_call.1} parent=1 // pred_check
      _
    $region83: #{tpu_custom_call.1} parent=1 // pred_check_branch
      %173 = sbr.rel (0) target = $region85
    $region84: #{tpu_custom_call.1} parent=1 // pred_region
      %174 = dma.done [#allocation12], 16
    $region85: #{tpu_custom_call.1} parent=1 // pred_fallthru
      _
    // Predicated region
    $region86: #{tpu_custom_call.1} parent=1 // pred_check
      _
    $region87: #{tpu_custom_call.1} parent=1 // pred_check_branch
      %176 = sbr.rel (0) target = $region89
    $region88: #{tpu_custom_call.1} parent=1 // pred_region
      %177 = dma.done [#allocation15], 16
    $region89: #{tpu_custom_call.1} parent=1 // pred_fallthru
      _
    // Predicated region
    $region90: #{tpu_custom_call.1} parent=1 // pred_check
      _
    $region91: #{tpu_custom_call.1} parent=1 // pred_check_branch
      %179 = sbr.rel (0) target = $region93
    $region92: #{tpu_custom_call.1} parent=1 // pred_region
      %180 = dma.done [#allocation15], 2048
    $region93: #{tpu_custom_call.1} parent=1 // pred_fallthru
      _
    // Predicated region
    $region94: #{tpu_custom_call.1} parent=1 // pred_check
      _
    $region95: #{tpu_custom_call.1} parent=1 // pred_check_branch
      %182 = sbr.rel (0) target = $region97
    $region96: #{tpu_custom_call.1} parent=1 // pred_region
      %183 = dma.done [#allocation18], 16
    $region97: #{tpu_custom_call.1} parent=1 // pred_fallthru
      _
    // Predicated region
    $region98: #{tpu_custom_call.1} parent=1 // pred_check
      _
    $region99: #{tpu_custom_call.1} parent=1 // pred_check_branch
      %185 = sbr.rel (0) target = $region101
    $region100: #{tpu_custom_call.1} parent=1 // pred_region
      %186 = dma.done [#allocation18], 2048
    $region101: #{tpu_custom_call.1} parent=1 // pred_fallthru
      _
    %v187 = vlaneseq
    %v188 = vshrl.u32 %v187, 7
    %v189 = vadd.s32 %v188, 8
    %vm190 = vcmp.ge.s32.totalorder %v188, 1
    %vm191 = vcmp.ge.s32.totalorder %v189, 1
    %v192 = vsel %vm190, 1, 0
    %v193 = vsel %vm191, 1, 0
    %v194 = vcvt.s32.f32 %v192
    %v195 = vcvt.s32.f32 %v193
    %vm196 = vcmp.le.s32.totalorder %v188, 14
    %vm197 = vcmp.le.s32.totalorder %v189, 14
    %v198 = vsel %vm196, 1, 0
    %v199 = vsel %vm197, 1, 0
    %v200 = vcvt.s32.f32 %v198
    %v201 = vcvt.s32.f32 %v199
    %v202 = vld [vmem:[#allocation2] sm:$0xff]
    %v203 = vld [vmem:[#allocation2 + $0x8] sm:$0xff]
    %v204 = vld [vmem:[#allocation2 + $0x10] sm:$0xff]
    %v205 = vld [vmem:[#allocation2 + $0x18] sm:$0xff]
    %v206 = vld [vmem:[#allocation2 + $0x20] sm:$0xff]
    %v207 = vld [vmem:[#allocation2 + $0x28] sm:$0xff]
    %v208 = vld [vmem:[#allocation2 + $0x30] sm:$0xff]
    %v209 = vld [vmem:[#allocation2 + $0x38] sm:$0xff]
    %v210 = vld [vmem:[#allocation2 + $0x40] sm:$0xff]
    %v211 = vld [vmem:[#allocation2 + $0x48] sm:$0xff]
    %v212 = vld [vmem:[#allocation2 + $0x50] sm:$0xff]
    %v213 = vld [vmem:[#allocation2 + $0x58] sm:$0xff]
    %v214 = vld [vmem:[#allocation2 + $0x60] sm:$0xff]
    %v215 = vld [vmem:[#allocation2 + $0x68] sm:$0xff]
    %v216 = vld [vmem:[#allocation2 + $0x70] sm:$0xff]
    %v217 = vld [vmem:[#allocation2 + $0x78] sm:$0xff]
    %v218 = vld [vmem:[#allocation2 + $0x80] sm:$0xff]
    %v219 = vld [vmem:[#allocation2 + $0x88] sm:$0xff]
    %v220 = vld [vmem:[#allocation2 + $0x90] sm:$0xff]
    %v221 = vld [vmem:[#allocation2 + $0x98] sm:$0xff]
    %v222 = vld [vmem:[#allocation2 + $0xa0] sm:$0xff]
    %v223 = vld [vmem:[#allocation2 + $0xa8] sm:$0xff]
    %v224 = vld [vmem:[#allocation2 + $0xb0] sm:$0xff]
    %v225 = vld [vmem:[#allocation2 + $0xb8] sm:$0xff]
    %v226 = vld [vmem:[#allocation2 + $0xc0] sm:$0xff]
    %v227 = vld [vmem:[#allocation2 + $0xc8] sm:$0xff]
    %v228 = vld [vmem:[#allocation2 + $0xd0] sm:$0xff]
    %v229 = vld [vmem:[#allocation2 + $0xd8] sm:$0xff]
    %v230 = vld [vmem:[#allocation2 + $0xe0] sm:$0xff]
    %v231 = vld [vmem:[#allocation2 + $0xe8] sm:$0xff]
    %v232 = vld [vmem:[#allocation2 + $0xf0] sm:$0xff]
    %v233 = vld [vmem:[#allocation2 + $0xf8] sm:$0xff]
    %v234 = vld [vmem:[#allocation5] sm:$0xff]
    %v235 = vld [vmem:[#allocation5 + $0x8] sm:$0xff]
    %v236 = vld [vmem:[#allocation5 + $0x10] sm:$0xff]
    %v237 = vld [vmem:[#allocation5 + $0x18] sm:$0xff]
    %v238 = vld [vmem:[#allocation5 + $0x20] sm:$0xff]
    %v239 = vld [vmem:[#allocation5 + $0x28] sm:$0xff]
    %v240 = vld [vmem:[#allocation5 + $0x30] sm:$0xff]
    %v241 = vld [vmem:[#allocation5 + $0x38] sm:$0xff]
    %v242 = vld [vmem:[#allocation5 + $0x40] sm:$0xff]
    %v243 = vld [vmem:[#allocation5 + $0x48] sm:$0xff]
    %v244 = vld [vmem:[#allocation5 + $0x50] sm:$0xff]
    %v245 = vld [vmem:[#allocation5 + $0x58] sm:$0xff]
    %v246 = vld [vmem:[#allocation5 + $0x60] sm:$0xff]
    %v247 = vld [vmem:[#allocation5 + $0x68] sm:$0xff]
    %v248 = vld [vmem:[#allocation5 + $0x70] sm:$0xff]
    %v249 = vld [vmem:[#allocation5 + $0x78] sm:$0xff]
    %v250 = vld [vmem:[#allocation7] sm:$0x1]
    %v252 = vlaneseq
    %v253 = vshrl.u32 %v252, 7
    %v254 = vsub.s32 0, %v253
    %v255 = vrot.slane %v250, %v254
    %257 = vmatprep.subr.mxu0 0.0
    %258 = vmatpush1.msra.mxu0 %v249
    %259 = vmatprep.subr.mxu0 0.0
    %260 = vmatpush1.msra.mxu0 %v248
    %261 = vmatprep.subr.mxu0 0.0
    %262 = vmatpush1.msra.mxu0 %v247
    %263 = vmatprep.subr.mxu0 0.0
    %264 = vmatpush1.msra.mxu0 %v246
    %265 = vmatprep.subr.mxu0 0.0
    %266 = vmatpush1.msra.mxu0 %v245
    %267 = vmatprep.subr.mxu0 0.0
    %268 = vmatpush1.msra.mxu0 %v244
    %269 = vmatprep.subr.mxu0 0.0
    %270 = vmatpush1.msra.mxu0 %v243
    %271 = vmatprep.subr.mxu0 0.0
    %272 = vmatpush1.msra.mxu0 %v242
    %273 = vmatprep.subr.mxu0 0.0
    %274 = vmatpush1.msra.mxu0 %v241
    %275 = vmatprep.subr.mxu0 0.0
    %276 = vmatpush1.msra.mxu0 %v240
    %277 = vmatprep.subr.mxu0 0.0
    %278 = vmatpush1.msra.mxu0 %v239
    %279 = vmatprep.subr.mxu0 0.0
    %280 = vmatpush1.msra.mxu0 %v238
    %281 = vmatprep.subr.mxu0 0.0
    %282 = vmatpush1.msra.mxu0 %v237
    %283 = vmatprep.subr.mxu0 0.0
    %284 = vmatpush1.msra.mxu0 %v236
    %285 = vmatprep.subr.mxu0 0.0
    %286 = vmatpush1.msra.mxu0 %v235
    %287 = vmatprep.subr.mxu0 0.0
    %288 = vmatpush1.msra.mxu0 %v234
    %289 = vmatprep.subr.mxu0 0.0
    %290 = vmatpush2.msra.mxu0 0.0
    %291 = vmatprep.subr.mxu0 0.0
    %292 = vmatpush2.msra.mxu0 0.0
    %293 = vmatprep.subr.mxu0 0.0
    %294 = vmatpush2.msra.mxu0 0.0
    %295 = vmatprep.subr.mxu0 0.0
    %296 = vmatpush2.msra.mxu0 0.0
    %297 = vmatprep.subr.mxu0 0.0
    %298 = vmatpush2.msra.mxu0 0.0
    %299 = vmatprep.subr.mxu0 0.0
    %300 = vmatpush2.msra.mxu0 0.0
    %301 = vmatprep.subr.mxu0 0.0
    %302 = vmatpush2.msra.mxu0 0.0
    %303 = vmatprep.subr.mxu0 0.0
    %304 = vmatpush2.msra.mxu0 0.0
    %305 = vmatprep.subr.mxu0 0.0
    %306 = vmatpush2.msra.mxu0 0.0
    %307 = vmatprep.subr.mxu0 0.0
    %308 = vmatpush2.msra.mxu0 0.0
    %309 = vmatprep.subr.mxu0 0.0
    %310 = vmatpush2.msra.mxu0 0.0
    %311 = vmatprep.subr.mxu0 0.0
    %312 = vmatpush2.msra.mxu0 0.0
    %313 = vmatprep.subr.mxu0 0.0
    %314 = vmatpush2.msra.mxu0 0.0
    %315 = vmatprep.subr.mxu0 0.0
    %316 = vmatpush2.msra.mxu0 0.0
    %317 = vmatprep.subr.mxu0 0.0
    %318 = vmatpush2.msra.mxu0 0.0
    %319 = vmatprep.subr.mxu0 0.0
    %320 = vmatpush2.msra.mxu0 0.0
    %321 = vmatprep.mubr.f32.mxu0 0.0
    %322 = vmatmul.mubr.f32.gmra.mxu0 %v202
    %v323 = vpop.f32.mrf.mxu0
    %v324 = vadd.f32 %v255, %v323
    %v325 = vpop.f32.mrf.mxu0
    %326 = vmatprep.mubr.f32.mxu0 0.0
    %327 = vmatmul.mubr.f32.gmra.mxu0 %v203
    %v328 = vpop.f32.mrf.mxu0
    %v329 = vadd.f32 %v255, %v328
    %v330 = vpop.f32.mrf.mxu0
    %331 = vmatprep.mubr.f32.mxu0 0.0
    %332 = vmatmul.mubr.f32.gmra.mxu0 %v204
    %v333 = vpop.f32.mrf.mxu0
    %v334 = vadd.f32 %v255, %v333
    %v335 = vpop.f32.mrf.mxu0
    %336 = vmatprep.mubr.f32.mxu0 0.0
    %337 = vmatmul.mubr.f32.gmra.mxu0 %v205
    %v338 = vpop.f32.mrf.mxu0
    %v339 = vadd.f32 %v255, %v338
    %v340 = vpop.f32.mrf.mxu0
    %341 = vmatprep.mubr.f32.mxu0 0.0
    %342 = vmatmul.mubr.f32.gmra.mxu0 %v206
    %v343 = vpop.f32.mrf.mxu0
    %v344 = vadd.f32 %v255, %v343
    %v345 = vpop.f32.mrf.mxu0
    %346 = vmatprep.mubr.f32.mxu0 0.0
    %347 = vmatmul.mubr.f32.gmra.mxu0 %v207
    %v348 = vpop.f32.mrf.mxu0
    %v349 = vadd.f32 %v255, %v348
    %v350 = vpop.f32.mrf.mxu0
    %351 = vmatprep.mubr.f32.mxu0 0.0
    %352 = vmatmul.mubr.f32.gmra.mxu0 %v208
    %v353 = vpop.f32.mrf.mxu0
    %v354 = vadd.f32 %v255, %v353
    %v355 = vpop.f32.mrf.mxu0
    %356 = vmatprep.mubr.f32.mxu0 0.0
    %357 = vmatmul.mubr.f32.gmra.mxu0 %v209
    %v358 = vpop.f32.mrf.mxu0
    %v359 = vadd.f32 %v255, %v358
    %v360 = vpop.f32.mrf.mxu0
    %361 = vmatprep.mubr.f32.mxu0 0.0
    %362 = vmatmul.mubr.f32.gmra.mxu0 %v210
    %v363 = vpop.f32.mrf.mxu0
    %v364 = vadd.f32 %v255, %v363
    %v365 = vpop.f32.mrf.mxu0
    %366 = vmatprep.mubr.f32.mxu0 0.0
    %367 = vmatmul.mubr.f32.gmra.mxu0 %v211
    %v368 = vpop.f32.mrf.mxu0
    %v369 = vadd.f32 %v255, %v368
    %v370 = vpop.f32.mrf.mxu0
    %371 = vmatprep.mubr.f32.mxu0 0.0
    %372 = vmatmul.mubr.f32.gmra.mxu0 %v212
    %v373 = vpop.f32.mrf.mxu0
    %v374 = vadd.f32 %v255, %v373
    %v375 = vpop.f32.mrf.mxu0
    %376 = vmatprep.mubr.f32.mxu0 0.0
    %377 = vmatmul.mubr.f32.gmra.mxu0 %v213
    %v378 = vpop.f32.mrf.mxu0
    %v379 = vadd.f32 %v255, %v378
    %v380 = vpop.f32.mrf.mxu0
    %381 = vmatprep.mubr.f32.mxu0 0.0
    %382 = vmatmul.mubr.f32.gmra.mxu0 %v214
    %v383 = vpop.f32.mrf.mxu0
    %v384 = vadd.f32 %v255, %v383
    %v385 = vpop.f32.mrf.mxu0
    %386 = vmatprep.mubr.f32.mxu0 0.0
    %387 = vmatmul.mubr.f32.gmra.mxu0 %v215
    %v388 = vpop.f32.mrf.mxu0
    %v389 = vadd.f32 %v255, %v388
    %v390 = vpop.f32.mrf.mxu0
    %391 = vmatprep.mubr.f32.mxu0 0.0
    %392 = vmatmul.mubr.f32.gmra.mxu0 %v216
    %v393 = vpop.f32.mrf.mxu0
    %v394 = vadd.f32 %v255, %v393
    %v395 = vpop.f32.mrf.mxu0
    %396 = vmatprep.mubr.f32.mxu0 0.0
    %397 = vmatmul.mubr.f32.gmra.mxu0 %v217
    %v398 = vpop.f32.mrf.mxu0
    %v399 = vadd.f32 %v255, %v398
    %v400 = vpop.f32.mrf.mxu0
    %401 = vmatprep.mubr.f32.mxu0 0.0
    %402 = vmatmul.mubr.f32.gmra.mxu0 %v218
    %v403 = vpop.f32.mrf.mxu0
    %v404 = vadd.f32 %v255, %v403
    %v405 = vpop.f32.mrf.mxu0
    %406 = vmatprep.mubr.f32.mxu0 0.0
    %407 = vmatmul.mubr.f32.gmra.mxu0 %v219
    %v408 = vpop.f32.mrf.mxu0
    %v409 = vadd.f32 %v255, %v408
    %v410 = vpop.f32.mrf.mxu0
    %411 = vmatprep.mubr.f32.mxu0 0.0
    %412 = vmatmul.mubr.f32.gmra.mxu0 %v220
    %v413 = vpop.f32.mrf.mxu0
    %v414 = vadd.f32 %v255, %v413
    %v415 = vpop.f32.mrf.mxu0
    %416 = vmatprep.mubr.f32.mxu0 0.0
    %417 = vmatmul.mubr.f32.gmra.mxu0 %v221
    %v418 = vpop.f32.mrf.mxu0
    %v419 = vadd.f32 %v255, %v418
    %v420 = vpop.f32.mrf.mxu0
    %421 = vmatprep.mubr.f32.mxu0 0.0
    %422 = vmatmul.mubr.f32.gmra.mxu0 %v222
    %v423 = vpop.f32.mrf.mxu0
    %v424 = vadd.f32 %v255, %v423
    %v425 = vpop.f32.mrf.mxu0
    %426 = vmatprep.mubr.f32.mxu0 0.0
    %427 = vmatmul.mubr.f32.gmra.mxu0 %v223
    %v428 = vpop.f32.mrf.mxu0
    %v429 = vadd.f32 %v255, %v428
    %v430 = vpop.f32.mrf.mxu0
    %431 = vmatprep.mubr.f32.mxu0 0.0
    %432 = vmatmul.mubr.f32.gmra.mxu0 %v224
    %v433 = vpop.f32.mrf.mxu0
    %v434 = vadd.f32 %v255, %v433
    %v435 = vpop.f32.mrf.mxu0
    %436 = vmatprep.mubr.f32.mxu0 0.0
    %437 = vmatmul.mubr.f32.gmra.mxu0 %v225
    %v438 = vpop.f32.mrf.mxu0
    %v439 = vadd.f32 %v255, %v438
    %v440 = vpop.f32.mrf.mxu0
    %441 = vmatprep.mubr.f32.mxu0 0.0
    %442 = vmatmul.mubr.f32.gmra.mxu0 %v226
    %v443 = vpop.f32.mrf.mxu0
    %v444 = vadd.f32 %v255, %v443
    %v445 = vpop.f32.mrf.mxu0
    %446 = vmatprep.mubr.f32.mxu0 0.0
    %447 = vmatmul.mubr.f32.gmra.mxu0 %v227
    %v448 = vpop.f32.mrf.mxu0
    %v449 = vadd.f32 %v255, %v448
    %v450 = vpop.f32.mrf.mxu0
    %451 = vmatprep.mubr.f32.mxu0 0.0
    %452 = vmatmul.mubr.f32.gmra.mxu0 %v228
    %v453 = vpop.f32.mrf.mxu0
    %v454 = vadd.f32 %v255, %v453
    %v455 = vpop.f32.mrf.mxu0
    %456 = vmatprep.mubr.f32.mxu0 0.0
    %457 = vmatmul.mubr.f32.gmra.mxu0 %v229
    %v458 = vpop.f32.mrf.mxu0
    %v459 = vadd.f32 %v255, %v458
    %v460 = vpop.f32.mrf.mxu0
    %461 = vmatprep.mubr.f32.mxu0 0.0
    %462 = vmatmul.mubr.f32.gmra.mxu0 %v230
    %v463 = vpop.f32.mrf.mxu0
    %v464 = vadd.f32 %v255, %v463
    %v465 = vpop.f32.mrf.mxu0
    %466 = vmatprep.mubr.f32.mxu0 0.0
    %467 = vmatmul.mubr.f32.gmra.mxu0 %v231
    %v468 = vpop.f32.mrf.mxu0
    %v469 = vadd.f32 %v255, %v468
    %v470 = vpop.f32.mrf.mxu0
    %471 = vmatprep.mubr.f32.mxu0 0.0
    %472 = vmatmul.mubr.f32.gmra.mxu0 %v232
    %v473 = vpop.f32.mrf.mxu0
    %v474 = vadd.f32 %v255, %v473
    %v475 = vpop.f32.mrf.mxu0
    %476 = vmatprep.mubr.f32.mxu0 0.0
    %477 = vmatmul.mubr.f32.gmra.mxu0 %v233
    %v478 = vpop.f32.mrf.mxu0
    %v479 = vadd.f32 %v255, %v478
    %v480 = vpop.f32.mrf.mxu0
    %481 = vdwg.mxu0
    %v482 = vmax.f32 %v324, 0.0
    %v483 = vmax.f32 %v329, 0.0
    %v484 = vmax.f32 %v334, 0.0
    %v485 = vmax.f32 %v339, 0.0
    %v486 = vmax.f32 %v344, 0.0
    %v487 = vmax.f32 %v349, 0.0
    %v488 = vmax.f32 %v354, 0.0
    %v489 = vmax.f32 %v359, 0.0
    %v490 = vmax.f32 %v364, 0.0
    %v491 = vmax.f32 %v369, 0.0
    %v492 = vmax.f32 %v374, 0.0
    %v493 = vmax.f32 %v379, 0.0
    %v494 = vmax.f32 %v384, 0.0
    %v495 = vmax.f32 %v389, 0.0
    %v496 = vmax.f32 %v394, 0.0
    %v497 = vmax.f32 %v399, 0.0
    %v498 = vmax.f32 %v404, 0.0
    %v499 = vmax.f32 %v409, 0.0
    %v500 = vmax.f32 %v414, 0.0
    %v501 = vmax.f32 %v419, 0.0
    %v502 = vmax.f32 %v424, 0.0
    %v503 = vmax.f32 %v429, 0.0
    %v504 = vmax.f32 %v434, 0.0
    %v505 = vmax.f32 %v439, 0.0
    %v506 = vmax.f32 %v444, 0.0
    %v507 = vmax.f32 %v449, 0.0
    %v508 = vmax.f32 %v454, 0.0
    %v509 = vmax.f32 %v459, 0.0
    %v510 = vmax.f32 %v464, 0.0
    %v511 = vmax.f32 %v469, 0.0
    %v512 = vmax.f32 %v474, 0.0
    %v513 = vmax.f32 %v479, 0.0
    %v514 = vld [vmem:[#allocation8] sm:$0x1]
    %s515 = scalar_lea.vmem [#allocation8], 1
    %v516 = vld [vmem:[%s515] sm:$0x1]
    %s517 = scalar_lea.vmem [#allocation8], 2
    %v518 = vld [vmem:[%s517] sm:$0x1]
    %s519 = scalar_lea.vmem [#allocation8], 3
    %v520 = vld [vmem:[%s519] sm:$0x1]
    %s521 = scalar_lea.vmem [#allocation8], 4
    %v522 = vld [vmem:[%s521] sm:$0x1]
    %s523 = scalar_lea.vmem [#allocation8], 5
    %v524 = vld [vmem:[%s523] sm:$0x1]
    %s525 = scalar_lea.vmem [#allocation8], 6
    %v526 = vld [vmem:[%s525] sm:$0x1]
    %s527 = scalar_lea.vmem [#allocation8], 7
    %v528 = vld [vmem:[%s527] sm:$0x1]
    %s529 = scalar_lea.vmem [#allocation8], 8
    %v530 = vld [vmem:[%s529] sm:$0x1]
    %v531 = vrot.slane %v482, 7
    %v532 = vrot.slane %v484, 7
    %v533 = vrot.slane %v486, 7
    %v534 = vrot.slane %v488, 7
    %v535 = vrot.slane %v490, 7
    %v536 = vrot.slane %v492, 7
    %v537 = vrot.slane %v494, 7
    %v538 = vrot.slane %v496, 7
    %v539 = vrot.slane %v498, 7
    %v540 = vrot.slane %v500, 7
    %v541 = vrot.slane %v502, 7
    %v542 = vrot.slane %v504, 7
    %v543 = vrot.slane %v506, 7
    %v544 = vrot.slane %v508, 7
    %v545 = vrot.slane %v510, 7
    %v546 = vrot.slane %v512, 7
    %v547 = vrot.slane %v483, 7
    %v548 = vrot.slane %v485, 7
    %v549 = vrot.slane %v487, 7
    %v550 = vrot.slane %v489, 7
    %v551 = vrot.slane %v491, 7
    %v552 = vrot.slane %v493, 7
    %v553 = vrot.slane %v495, 7
    %v554 = vrot.slane %v497, 7
    %v555 = vrot.slane %v499, 7
    %v556 = vrot.slane %v501, 7
    %v557 = vrot.slane %v503, 7
    %v558 = vrot.slane %v505, 7
    %v559 = vrot.slane %v507, 7
    %v560 = vrot.slane %v509, 7
    %v561 = vrot.slane %v511, 7
    %v562 = vrot.slane %v513, 7
    %vm563 = vcmp.lt.s32.totalorder %v188, 1
    %v564 = vsel %vm563, %v531, %v547
    %v565 = vsel %vm563, %v532, %v548
    %v566 = vsel %vm563, %v533, %v549
    %v567 = vsel %vm563, %v534, %v550
    %v568 = vsel %vm563, %v535, %v551
    %v569 = vsel %vm563, %v536, %v552
    %v570 = vsel %vm563, %v537, %v553
    %v571 = vsel %vm563, %v538, %v554
    %v572 = vsel %vm563, %v539, %v555
    %v573 = vsel %vm563, %v540, %v556
    %v574 = vsel %vm563, %v541, %v557
    %v575 = vsel %vm563, %v542, %v558
    %v576 = vsel %vm563, %v543, %v559
    %v577 = vsel %vm563, %v544, %v560
    %v578 = vsel %vm563, %v545, %v561
    %v579 = vsel %vm563, %v546, %v562
    %v580 = vsel %vm563, %v547, %v531
    %v581 = vsel %vm563, %v548, %v532
    %v582 = vsel %vm563, %v549, %v533
    %v583 = vsel %vm563, %v550, %v534
    %v584 = vsel %vm563, %v551, %v535
    %v585 = vsel %vm563, %v552, %v536
    %v586 = vsel %vm563, %v553, %v537
    %v587 = vsel %vm563, %v554, %v538
    %v588 = vsel %vm563, %v555, %v539
    %v589 = vsel %vm563, %v556, %v540
    %v590 = vsel %vm563, %v557, %v541
    %v591 = vsel %vm563, %v558, %v542
    %v592 = vsel %vm563, %v559, %v543
    %v593 = vsel %vm563, %v560, %v544
    %v594 = vsel %vm563, %v561, %v545
    %v595 = vsel %vm563, %v562, %v546
    %v596 = vmul.f32 %v580, %v194
    %v597 = vmul.f32 %v564, %v195
    %v598 = vmul.f32 %v581, %v194
    %v599 = vmul.f32 %v565, %v195
    %v600 = vmul.f32 %v582, %v194
    %v601 = vmul.f32 %v566, %v195
    %v602 = vmul.f32 %v583, %v194
    %v603 = vmul.f32 %v567, %v195
    %v604 = vmul.f32 %v584, %v194
    %v605 = vmul.f32 %v568, %v195
    %v606 = vmul.f32 %v585, %v194
    %v607 = vmul.f32 %v569, %v195
    %v608 = vmul.f32 %v586, %v194
    %v609 = vmul.f32 %v570, %v195
    %v610 = vmul.f32 %v587, %v194
    %v611 = vmul.f32 %v571, %v195
    %v612 = vmul.f32 %v588, %v194
    %v613 = vmul.f32 %v572, %v195
    %v614 = vmul.f32 %v589, %v194
    %v615 = vmul.f32 %v573, %v195
    %v616 = vmul.f32 %v590, %v194
    %v617 = vmul.f32 %v574, %v195
    %v618 = vmul.f32 %v591, %v194
    %v619 = vmul.f32 %v575, %v195
    %v620 = vmul.f32 %v592, %v194
    %v621 = vmul.f32 %v576, %v195
    %v622 = vmul.f32 %v593, %v194
    %v623 = vmul.f32 %v577, %v195
    %v624 = vmul.f32 %v594, %v194
    %v625 = vmul.f32 %v578, %v195
    %v626 = vmul.f32 %v595, %v194
    %v627 = vmul.f32 %v579, %v195
    %v629 = vlaneseq
    %v630 = vshrl.u32 %v629, 7
    %v631 = vsub.s32 0, %v630
    %v632 = vrot.slane %v520, %v631
    %v634 = vmul.f32 %v596, %v632
    %v635 = vmul.f32 %v597, %v632
    %v636 = vmul.f32 %v598, %v632
    %v637 = vmul.f32 %v599, %v632
    %v638 = vmul.f32 %v600, %v632
    %v639 = vmul.f32 %v601, %v632
    %v640 = vmul.f32 %v602, %v632
    %v641 = vmul.f32 %v603, %v632
    %v642 = vmul.f32 %v604, %v632
    %v643 = vmul.f32 %v605, %v632
    %v644 = vmul.f32 %v606, %v632
    %v645 = vmul.f32 %v607, %v632
    %v646 = vmul.f32 %v608, %v632
    %v647 = vmul.f32 %v609, %v632
    %v648 = vmul.f32 %v610, %v632
    %v649 = vmul.f32 %v611, %v632
    %v650 = vmul.f32 %v612, %v632
    %v651 = vmul.f32 %v613, %v632
    %v652 = vmul.f32 %v614, %v632
    %v653 = vmul.f32 %v615, %v632
    %v654 = vmul.f32 %v616, %v632
    %v655 = vmul.f32 %v617, %v632
    %v656 = vmul.f32 %v618, %v632
    %v657 = vmul.f32 %v619, %v632
    %v658 = vmul.f32 %v620, %v632
    %v659 = vmul.f32 %v621, %v632
    %v660 = vmul.f32 %v622, %v632
    %v661 = vmul.f32 %v623, %v632
    %v662 = vmul.f32 %v624, %v632
    %v663 = vmul.f32 %v625, %v632
    %v664 = vmul.f32 %v626, %v632
    %v665 = vmul.f32 %v627, %v632
    %v666 = vadd.f32 %v634, 0.0
    %v667 = vadd.f32 %v635, 0.0
    %v668 = vadd.f32 %v636, 0.0
    %v669 = vadd.f32 %v637, 0.0
    %v670 = vadd.f32 %v638, 0.0
    %v671 = vadd.f32 %v639, 0.0
    %v672 = vadd.f32 %v640, 0.0
    %v673 = vadd.f32 %v641, 0.0
    %v674 = vadd.f32 %v642, 0.0
    %v675 = vadd.f32 %v643, 0.0
    %v676 = vadd.f32 %v644, 0.0
    %v677 = vadd.f32 %v645, 0.0
    %v678 = vadd.f32 %v646, 0.0
    %v679 = vadd.f32 %v647, 0.0
    %v680 = vadd.f32 %v648, 0.0
    %v681 = vadd.f32 %v649, 0.0
    %v682 = vadd.f32 %v650, 0.0
    %v683 = vadd.f32 %v651, 0.0
    %v684 = vadd.f32 %v652, 0.0
    %v685 = vadd.f32 %v653, 0.0
    %v686 = vadd.f32 %v654, 0.0
    %v687 = vadd.f32 %v655, 0.0
    %v688 = vadd.f32 %v656, 0.0
    %v689 = vadd.f32 %v657, 0.0
    %v690 = vadd.f32 %v658, 0.0
    %v691 = vadd.f32 %v659, 0.0
    %v692 = vadd.f32 %v660, 0.0
    %v693 = vadd.f32 %v661, 0.0
    %v694 = vadd.f32 %v662, 0.0
    %v695 = vadd.f32 %v663, 0.0
    %v696 = vadd.f32 %v664, 0.0
    %v697 = vadd.f32 %v665, 0.0
    %v699 = vlaneseq
    %v700 = vshrl.u32 %v699, 7
    %v701 = vsub.s32 0, %v700
    %v702 = vrot.slane %v514, %v701
    %v704 = vmul.f32 %v702, 0.0
    %v705 = vmul.f32 %v596, %v702
    %v706 = vmul.f32 %v597, %v702
    %v707 = vmul.f32 %v598, %v702
    %v708 = vmul.f32 %v599, %v702
    %v709 = vmul.f32 %v600, %v702
    %v710 = vmul.f32 %v601, %v702
    %v711 = vmul.f32 %v602, %v702
    %v712 = vmul.f32 %v603, %v702
    %v713 = vmul.f32 %v604, %v702
    %v714 = vmul.f32 %v605, %v702
    %v715 = vmul.f32 %v606, %v702
    %v716 = vmul.f32 %v607, %v702
    %v717 = vmul.f32 %v608, %v702
    %v718 = vmul.f32 %v609, %v702
    %v719 = vmul.f32 %v610, %v702
    %v720 = vmul.f32 %v611, %v702
    %v721 = vmul.f32 %v612, %v702
    %v722 = vmul.f32 %v613, %v702
    %v723 = vmul.f32 %v614, %v702
    %v724 = vmul.f32 %v615, %v702
    %v725 = vmul.f32 %v616, %v702
    %v726 = vmul.f32 %v617, %v702
    %v727 = vmul.f32 %v618, %v702
    %v728 = vmul.f32 %v619, %v702
    %v729 = vmul.f32 %v620, %v702
    %v730 = vmul.f32 %v621, %v702
    %v731 = vmul.f32 %v622, %v702
    %v732 = vmul.f32 %v623, %v702
    %v733 = vmul.f32 %v624, %v702
    %v734 = vmul.f32 %v625, %v702
    %v735 = vadd.f32 %v666, %v704
    %v736 = vadd.f32 %v667, %v704
    %v737 = vadd.f32 %v668, %v705
    %v738 = vadd.f32 %v669, %v706
    %v739 = vadd.f32 %v670, %v707
    %v740 = vadd.f32 %v671, %v708
    %v741 = vadd.f32 %v672, %v709
    %v742 = vadd.f32 %v673, %v710
    %v743 = vadd.f32 %v674, %v711
    %v744 = vadd.f32 %v675, %v712
    %v745 = vadd.f32 %v676, %v713
    %v746 = vadd.f32 %v677, %v714
    %v747 = vadd.f32 %v678, %v715
    %v748 = vadd.f32 %v679, %v716
    %v749 = vadd.f32 %v680, %v717
    %v750 = vadd.f32 %v681, %v718
    %v751 = vadd.f32 %v682, %v719
    %v752 = vadd.f32 %v683, %v720
    %v753 = vadd.f32 %v684, %v721
    %v754 = vadd.f32 %v685, %v722
    %v755 = vadd.f32 %v686, %v723
    %v756 = vadd.f32 %v687, %v724
    %v757 = vadd.f32 %v688, %v725
    %v758 = vadd.f32 %v689, %v726
    %v759 = vadd.f32 %v690, %v727
    %v760 = vadd.f32 %v691, %v728
    %v761 = vadd.f32 %v692, %v729
    %v762 = vadd.f32 %v693, %v730
    %v763 = vadd.f32 %v694, %v731
    %v764 = vadd.f32 %v695, %v732
    %v765 = vadd.f32 %v696, %v733
    %v766 = vadd.f32 %v697, %v734
    %v768 = vlaneseq
    %v769 = vshrl.u32 %v768, 7
    %v770 = vsub.s32 0, %v769
    %v771 = vrot.slane %v526, %v770
    %v773 = vmul.f32 %v598, %v771
    %v774 = vmul.f32 %v599, %v771
    %v775 = vmul.f32 %v600, %v771
    %v776 = vmul.f32 %v601, %v771
    %v777 = vmul.f32 %v602, %v771
    %v778 = vmul.f32 %v603, %v771
    %v779 = vmul.f32 %v604, %v771
    %v780 = vmul.f32 %v605, %v771
    %v781 = vmul.f32 %v606, %v771
    %v782 = vmul.f32 %v607, %v771
    %v783 = vmul.f32 %v608, %v771
    %v784 = vmul.f32 %v609, %v771
    %v785 = vmul.f32 %v610, %v771
    %v786 = vmul.f32 %v611, %v771
    %v787 = vmul.f32 %v612, %v771
    %v788 = vmul.f32 %v613, %v771
    %v789 = vmul.f32 %v614, %v771
    %v790 = vmul.f32 %v615, %v771
    %v791 = vmul.f32 %v616, %v771
    %v792 = vmul.f32 %v617, %v771
    %v793 = vmul.f32 %v618, %v771
    %v794 = vmul.f32 %v619, %v771
    %v795 = vmul.f32 %v620, %v771
    %v796 = vmul.f32 %v621, %v771
    %v797 = vmul.f32 %v622, %v771
    %v798 = vmul.f32 %v623, %v771
    %v799 = vmul.f32 %v624, %v771
    %v800 = vmul.f32 %v625, %v771
    %v801 = vmul.f32 %v626, %v771
    %v802 = vmul.f32 %v627, %v771
    %v803 = vmul.f32 %v771, 0.0
    %v804 = vadd.f32 %v735, %v773
    %v805 = vadd.f32 %v736, %v774
    %v806 = vadd.f32 %v737, %v775
    %v807 = vadd.f32 %v738, %v776
    %v808 = vadd.f32 %v739, %v777
    %v809 = vadd.f32 %v740, %v778
    %v810 = vadd.f32 %v741, %v779
    %v811 = vadd.f32 %v742, %v780
    %v812 = vadd.f32 %v743, %v781
    %v813 = vadd.f32 %v744, %v782
    %v814 = vadd.f32 %v745, %v783
    %v815 = vadd.f32 %v746, %v784
    %v816 = vadd.f32 %v747, %v785
    %v817 = vadd.f32 %v748, %v786
    %v818 = vadd.f32 %v749, %v787
    %v819 = vadd.f32 %v750, %v788
    %v820 = vadd.f32 %v751, %v789
    %v821 = vadd.f32 %v752, %v790
    %v822 = vadd.f32 %v753, %v791
    %v823 = vadd.f32 %v754, %v792
    %v824 = vadd.f32 %v755, %v793
    %v825 = vadd.f32 %v756, %v794
    %v826 = vadd.f32 %v757, %v795
    %v827 = vadd.f32 %v758, %v796
    %v828 = vadd.f32 %v759, %v797
    %v829 = vadd.f32 %v760, %v798
    %v830 = vadd.f32 %v761, %v799
    %v831 = vadd.f32 %v762, %v800
    %v832 = vadd.f32 %v763, %v801
    %v833 = vadd.f32 %v764, %v802
    %v834 = vadd.f32 %v765, %v803
    %v835 = vadd.f32 %v766, %v803
    %v837 = vlaneseq
    %v838 = vshrl.u32 %v837, 7
    %v839 = vsub.s32 0, %v838
    %v840 = vrot.slane %v522, %v839
    %v842 = vmul.f32 %v482, %v840
    %v843 = vmul.f32 %v483, %v840
    %v844 = vmul.f32 %v484, %v840
    %v845 = vmul.f32 %v485, %v840
    %v846 = vmul.f32 %v486, %v840
    %v847 = vmul.f32 %v487, %v840
    %v848 = vmul.f32 %v488, %v840
    %v849 = vmul.f32 %v489, %v840
    %v850 = vmul.f32 %v490, %v840
    %v851 = vmul.f32 %v491, %v840
    %v852 = vmul.f32 %v492, %v840
    %v853 = vmul.f32 %v493, %v840
    %v854 = vmul.f32 %v494, %v840
    %v855 = vmul.f32 %v495, %v840
    %v856 = vmul.f32 %v496, %v840
    %v857 = vmul.f32 %v497, %v840
    %v858 = vmul.f32 %v498, %v840
    %v859 = vmul.f32 %v499, %v840
    %v860 = vmul.f32 %v500, %v840
    %v861 = vmul.f32 %v501, %v840
    %v862 = vmul.f32 %v502, %v840
    %v863 = vmul.f32 %v503, %v840
    %v864 = vmul.f32 %v504, %v840
    %v865 = vmul.f32 %v505, %v840
    %v866 = vmul.f32 %v506, %v840
    %v867 = vmul.f32 %v507, %v840
    %v868 = vmul.f32 %v508, %v840
    %v869 = vmul.f32 %v509, %v840
    %v870 = vmul.f32 %v510, %v840
    %v871 = vmul.f32 %v511, %v840
    %v872 = vmul.f32 %v512, %v840
    %v873 = vmul.f32 %v513, %v840
    %v874 = vadd.f32 %v804, %v842
    %v875 = vadd.f32 %v805, %v843
    %v876 = vadd.f32 %v806, %v844
    %v877 = vadd.f32 %v807, %v845
    %v878 = vadd.f32 %v808, %v846
    %v879 = vadd.f32 %v809, %v847
    %v880 = vadd.f32 %v810, %v848
    %v881 = vadd.f32 %v811, %v849
    %v882 = vadd.f32 %v812, %v850
    %v883 = vadd.f32 %v813, %v851
    %v884 = vadd.f32 %v814, %v852
    %v885 = vadd.f32 %v815, %v853
    %v886 = vadd.f32 %v816, %v854
    %v887 = vadd.f32 %v817, %v855
    %v888 = vadd.f32 %v818, %v856
    %v889 = vadd.f32 %v819, %v857
    %v890 = vadd.f32 %v820, %v858
    %v891 = vadd.f32 %v821, %v859
    %v892 = vadd.f32 %v822, %v860
    %v893 = vadd.f32 %v823, %v861
    %v894 = vadd.f32 %v824, %v862
    %v895 = vadd.f32 %v825, %v863
    %v896 = vadd.f32 %v826, %v864
    %v897 = vadd.f32 %v827, %v865
    %v898 = vadd.f32 %v828, %v866
    %v899 = vadd.f32 %v829, %v867
    %v900 = vadd.f32 %v830, %v868
    %v901 = vadd.f32 %v831, %v869
    %v902 = vadd.f32 %v832, %v870
    %v903 = vadd.f32 %v833, %v871
    %v904 = vadd.f32 %v834, %v872
    %v905 = vadd.f32 %v835, %v873
    %v907 = vlaneseq
    %v908 = vshrl.u32 %v907, 7
    %v909 = vsub.s32 0, %v908
    %v910 = vrot.slane %v516, %v909
    %v912 = vmul.f32 %v910, 0.0
    %v913 = vmul.f32 %v482, %v910
    %v914 = vmul.f32 %v483, %v910
    %v915 = vmul.f32 %v484, %v910
    %v916 = vmul.f32 %v485, %v910
    %v917 = vmul.f32 %v486, %v910
    %v918 = vmul.f32 %v487, %v910
    %v919 = vmul.f32 %v488, %v910
    %v920 = vmul.f32 %v489, %v910
    %v921 = vmul.f32 %v490, %v910
    %v922 = vmul.f32 %v491, %v910
    %v923 = vmul.f32 %v492, %v910
    %v924 = vmul.f32 %v493, %v910
    %v925 = vmul.f32 %v494, %v910
    %v926 = vmul.f32 %v495, %v910
    %v927 = vmul.f32 %v496, %v910
    %v928 = vmul.f32 %v497, %v910
    %v929 = vmul.f32 %v498, %v910
    %v930 = vmul.f32 %v499, %v910
    %v931 = vmul.f32 %v500, %v910
    %v932 = vmul.f32 %v501, %v910
    %v933 = vmul.f32 %v502, %v910
    %v934 = vmul.f32 %v503, %v910
    %v935 = vmul.f32 %v504, %v910
    %v936 = vmul.f32 %v505, %v910
    %v937 = vmul.f32 %v506, %v910
    %v938 = vmul.f32 %v507, %v910
    %v939 = vmul.f32 %v508, %v910
    %v940 = vmul.f32 %v509, %v910
    %v941 = vmul.f32 %v510, %v910
    %v942 = vmul.f32 %v511, %v910
    %v943 = vadd.f32 %v874, %v912
    %v944 = vadd.f32 %v875, %v912
    %v945 = vadd.f32 %v876, %v913
    %v946 = vadd.f32 %v877, %v914
    %v947 = vadd.f32 %v878, %v915
    %v948 = vadd.f32 %v879, %v916
    %v949 = vadd.f32 %v880, %v917
    %v950 = vadd.f32 %v881, %v918
    %v951 = vadd.f32 %v882, %v919
    %v952 = vadd.f32 %v883, %v920
    %v953 = vadd.f32 %v884, %v921
    %v954 = vadd.f32 %v885, %v922
    %v955 = vadd.f32 %v886, %v923
    %v956 = vadd.f32 %v887, %v924
    %v957 = vadd.f32 %v888, %v925
    %v958 = vadd.f32 %v889, %v926
    %v959 = vadd.f32 %v890, %v927
    %v960 = vadd.f32 %v891, %v928
    %v961 = vadd.f32 %v892, %v929
    %v962 = vadd.f32 %v893, %v930
    %v963 = vadd.f32 %v894, %v931
    %v964 = vadd.f32 %v895, %v932
    %v965 = vadd.f32 %v896, %v933
    %v966 = vadd.f32 %v897, %v934
    %v967 = vadd.f32 %v898, %v935
    %v968 = vadd.f32 %v899, %v936
    %v969 = vadd.f32 %v900, %v937
    %v970 = vadd.f32 %v901, %v938
    %v971 = vadd.f32 %v902, %v939
    %v972 = vadd.f32 %v903, %v940
    %v973 = vadd.f32 %v904, %v941
    %v974 = vadd.f32 %v905, %v942
    %v976 = vlaneseq
    %v977 = vshrl.u32 %v976, 7
    %v978 = vsub.s32 0, %v977
    %v979 = vrot.slane %v528, %v978
    %v981 = vmul.f32 %v484, %v979
    %v982 = vmul.f32 %v485, %v979
    %v983 = vmul.f32 %v486, %v979
    %v984 = vmul.f32 %v487, %v979
    %v985 = vmul.f32 %v488, %v979
    %v986 = vmul.f32 %v489, %v979
    %v987 = vmul.f32 %v490, %v979
    %v988 = vmul.f32 %v491, %v979
    %v989 = vmul.f32 %v492, %v979
    %v990 = vmul.f32 %v493, %v979
    %v991 = vmul.f32 %v494, %v979
    %v992 = vmul.f32 %v495, %v979
    %v993 = vmul.f32 %v496, %v979
    %v994 = vmul.f32 %v497, %v979
    %v995 = vmul.f32 %v498, %v979
    %v996 = vmul.f32 %v499, %v979
    %v997 = vmul.f32 %v500, %v979
    %v998 = vmul.f32 %v501, %v979
    %v999 = vmul.f32 %v502, %v979
    %v1000 = vmul.f32 %v503, %v979
    %v1001 = vmul.f32 %v504, %v979
    %v1002 = vmul.f32 %v505, %v979
    %v1003 = vmul.f32 %v506, %v979
    %v1004 = vmul.f32 %v507, %v979
    %v1005 = vmul.f32 %v508, %v979
    %v1006 = vmul.f32 %v509, %v979
    %v1007 = vmul.f32 %v510, %v979
    %v1008 = vmul.f32 %v511, %v979
    %v1009 = vmul.f32 %v512, %v979
    %v1010 = vmul.f32 %v513, %v979
    %v1011 = vmul.f32 %v979, 0.0
    %v1012 = vadd.f32 %v943, %v981
    %v1013 = vadd.f32 %v944, %v982
    %v1014 = vadd.f32 %v945, %v983
    %v1015 = vadd.f32 %v946, %v984
    %v1016 = vadd.f32 %v947, %v985
    %v1017 = vadd.f32 %v948, %v986
    %v1018 = vadd.f32 %v949, %v987
    %v1019 = vadd.f32 %v950, %v988
    %v1020 = vadd.f32 %v951, %v989
    %v1021 = vadd.f32 %v952, %v990
    %v1022 = vadd.f32 %v953, %v991
    %v1023 = vadd.f32 %v954, %v992
    %v1024 = vadd.f32 %v955, %v993
    %v1025 = vadd.f32 %v956, %v994
    %v1026 = vadd.f32 %v957, %v995
    %v1027 = vadd.f32 %v958, %v996
    %v1028 = vadd.f32 %v959, %v997
    %v1029 = vadd.f32 %v960, %v998
    %v1030 = vadd.f32 %v961, %v999
    %v1031 = vadd.f32 %v962, %v1000
    %v1032 = vadd.f32 %v963, %v1001
    %v1033 = vadd.f32 %v964, %v1002
    %v1034 = vadd.f32 %v965, %v1003
    %v1035 = vadd.f32 %v966, %v1004
    %v1036 = vadd.f32 %v967, %v1005
    %v1037 = vadd.f32 %v968, %v1006
    %v1038 = vadd.f32 %v969, %v1007
    %v1039 = vadd.f32 %v970, %v1008
    %v1040 = vadd.f32 %v971, %v1009
    %v1041 = vadd.f32 %v972, %v1010
    %v1042 = vadd.f32 %v973, %v1011
    %v1043 = vadd.f32 %v974, %v1011
    %v1044 = vrot.slane %v482, 1
    %v1045 = vrot.slane %v484, 1
    %v1046 = vrot.slane %v486, 1
    %v1047 = vrot.slane %v488, 1
    %v1048 = vrot.slane %v490, 1
    %v1049 = vrot.slane %v492, 1
    %v1050 = vrot.slane %v494, 1
    %v1051 = vrot.slane %v496, 1
    %v1052 = vrot.slane %v498, 1
    %v1053 = vrot.slane %v500, 1
    %v1054 = vrot.slane %v502, 1
    %v1055 = vrot.slane %v504, 1
    %v1056 = vrot.slane %v506, 1
    %v1057 = vrot.slane %v508, 1
    %v1058 = vrot.slane %v510, 1
    %v1059 = vrot.slane %v512, 1
    %v1060 = vrot.slane %v483, 1
    %v1061 = vrot.slane %v485, 1
    %v1062 = vrot.slane %v487, 1
    %v1063 = vrot.slane %v489, 1
    %v1064 = vrot.slane %v491, 1
    %v1065 = vrot.slane %v493, 1
    %v1066 = vrot.slane %v495, 1
    %v1067 = vrot.slane %v497, 1
    %v1068 = vrot.slane %v499, 1
    %v1069 = vrot.slane %v501, 1
    %v1070 = vrot.slane %v503, 1
    %v1071 = vrot.slane %v505, 1
    %v1072 = vrot.slane %v507, 1
    %v1073 = vrot.slane %v509, 1
    %v1074 = vrot.slane %v511, 1
    %v1075 = vrot.slane %v513, 1
    %vm1076 = vcmp.lt.s32.totalorder %v188, 7
    %v1077 = vsel %vm1076, %v1044, %v1060
    %v1078 = vsel %vm1076, %v1045, %v1061
    %v1079 = vsel %vm1076, %v1046, %v1062
    %v1080 = vsel %vm1076, %v1047, %v1063
    %v1081 = vsel %vm1076, %v1048, %v1064
    %v1082 = vsel %vm1076, %v1049, %v1065
    %v1083 = vsel %vm1076, %v1050, %v1066
    %v1084 = vsel %vm1076, %v1051, %v1067
    %v1085 = vsel %vm1076, %v1052, %v1068
    %v1086 = vsel %vm1076, %v1053, %v1069
    %v1087 = vsel %vm1076, %v1054, %v1070
    %v1088 = vsel %vm1076, %v1055, %v1071
    %v1089 = vsel %vm1076, %v1056, %v1072
    %v1090 = vsel %vm1076, %v1057, %v1073
    %v1091 = vsel %vm1076, %v1058, %v1074
    %v1092 = vsel %vm1076, %v1059, %v1075
    %v1093 = vsel %vm1076, %v1060, %v1044
    %v1094 = vsel %vm1076, %v1061, %v1045
    %v1095 = vsel %vm1076, %v1062, %v1046
    %v1096 = vsel %vm1076, %v1063, %v1047
    %v1097 = vsel %vm1076, %v1064, %v1048
    %v1098 = vsel %vm1076, %v1065, %v1049
    %v1099 = vsel %vm1076, %v1066, %v1050
    %v1100 = vsel %vm1076, %v1067, %v1051
    %v1101 = vsel %vm1076, %v1068, %v1052
    %v1102 = vsel %vm1076, %v1069, %v1053
    %v1103 = vsel %vm1076, %v1070, %v1054
    %v1104 = vsel %vm1076, %v1071, %v1055
    %v1105 = vsel %vm1076, %v1072, %v1056
    %v1106 = vsel %vm1076, %v1073, %v1057
    %v1107 = vsel %vm1076, %v1074, %v1058
    %v1108 = vsel %vm1076, %v1075, %v1059
    %v1109 = vmul.f32 %v1077, %v200
    %v1110 = vmul.f32 %v1093, %v201
    %v1111 = vmul.f32 %v1078, %v200
    %v1112 = vmul.f32 %v1094, %v201
    %v1113 = vmul.f32 %v1079, %v200
    %v1114 = vmul.f32 %v1095, %v201
    %v1115 = vmul.f32 %v1080, %v200
    %v1116 = vmul.f32 %v1096, %v201
    %v1117 = vmul.f32 %v1081, %v200
    %v1118 = vmul.f32 %v1097, %v201
    %v1119 = vmul.f32 %v1082, %v200
    %v1120 = vmul.f32 %v1098, %v201
    %v1121 = vmul.f32 %v1083, %v200
    %v1122 = vmul.f32 %v1099, %v201
    %v1123 = vmul.f32 %v1084, %v200
    %v1124 = vmul.f32 %v1100, %v201
    %v1125 = vmul.f32 %v1085, %v200
    %v1126 = vmul.f32 %v1101, %v201
    %v1127 = vmul.f32 %v1086, %v200
    %v1128 = vmul.f32 %v1102, %v201
    %v1129 = vmul.f32 %v1087, %v200
    %v1130 = vmul.f32 %v1103, %v201
    %v1131 = vmul.f32 %v1088, %v200
    %v1132 = vmul.f32 %v1104, %v201
    %v1133 = vmul.f32 %v1089, %v200
    %v1134 = vmul.f32 %v1105, %v201
    %v1135 = vmul.f32 %v1090, %v200
    %v1136 = vmul.f32 %v1106, %v201
    %v1137 = vmul.f32 %v1091, %v200
    %v1138 = vmul.f32 %v1107, %v201
    %v1139 = vmul.f32 %v1092, %v200
    %v1140 = vmul.f32 %v1108, %v201
    %v1142 = vlaneseq
    %v1143 = vshrl.u32 %v1142, 7
    %v1144 = vsub.s32 0, %v1143
    %v1145 = vrot.slane %v524, %v1144
    %v1147 = vmul.f32 %v1109, %v1145
    %v1148 = vmul.f32 %v1110, %v1145
    %v1149 = vmul.f32 %v1111, %v1145
    %v1150 = vmul.f32 %v1112, %v1145
    %v1151 = vmul.f32 %v1113, %v1145
    %v1152 = vmul.f32 %v1114, %v1145
    %v1153 = vmul.f32 %v1115, %v1145
    %v1154 = vmul.f32 %v1116, %v1145
    %v1155 = vmul.f32 %v1117, %v1145
    %v1156 = vmul.f32 %v1118, %v1145
    %v1157 = vmul.f32 %v1119, %v1145
    %v1158 = vmul.f32 %v1120, %v1145
    %v1159 = vmul.f32 %v1121, %v1145
    %v1160 = vmul.f32 %v1122, %v1145
    %v1161 = vmul.f32 %v1123, %v1145
    %v1162 = vmul.f32 %v1124, %v1145
    %v1163 = vmul.f32 %v1125, %v1145
    %v1164 = vmul.f32 %v1126, %v1145
    %v1165 = vmul.f32 %v1127, %v1145
    %v1166 = vmul.f32 %v1128, %v1145
    %v1167 = vmul.f32 %v1129, %v1145
    %v1168 = vmul.f32 %v1130, %v1145
    %v1169 = vmul.f32 %v1131, %v1145
    %v1170 = vmul.f32 %v1132, %v1145
    %v1171 = vmul.f32 %v1133, %v1145
    %v1172 = vmul.f32 %v1134, %v1145
    %v1173 = vmul.f32 %v1135, %v1145
    %v1174 = vmul.f32 %v1136, %v1145
    %v1175 = vmul.f32 %v1137, %v1145
    %v1176 = vmul.f32 %v1138, %v1145
    %v1177 = vmul.f32 %v1139, %v1145
    %v1178 = vmul.f32 %v1140, %v1145
    %v1179 = vadd.f32 %v1012, %v1147
    %v1180 = vadd.f32 %v1013, %v1148
    %v1181 = vadd.f32 %v1014, %v1149
    %v1182 = vadd.f32 %v1015, %v1150
    %v1183 = vadd.f32 %v1016, %v1151
    %v1184 = vadd.f32 %v1017, %v1152
    %v1185 = vadd.f32 %v1018, %v1153
    %v1186 = vadd.f32 %v1019, %v1154
    %v1187 = vadd.f32 %v1020, %v1155
    %v1188 = vadd.f32 %v1021, %v1156
    %v1189 = vadd.f32 %v1022, %v1157
    %v1190 = vadd.f32 %v1023, %v1158
    %v1191 = vadd.f32 %v1024, %v1159
    %v1192 = vadd.f32 %v1025, %v1160
    %v1193 = vadd.f32 %v1026, %v1161
    %v1194 = vadd.f32 %v1027, %v1162
    %v1195 = vadd.f32 %v1028, %v1163
    %v1196 = vadd.f32 %v1029, %v1164
    %v1197 = vadd.f32 %v1030, %v1165
    %v1198 = vadd.f32 %v1031, %v1166
    %v1199 = vadd.f32 %v1032, %v1167
    %v1200 = vadd.f32 %v1033, %v1168
    %v1201 = vadd.f32 %v1034, %v1169
    %v1202 = vadd.f32 %v1035, %v1170
    %v1203 = vadd.f32 %v1036, %v1171
    %v1204 = vadd.f32 %v1037, %v1172
    %v1205 = vadd.f32 %v1038, %v1173
    %v1206 = vadd.f32 %v1039, %v1174
    %v1207 = vadd.f32 %v1040, %v1175
    %v1208 = vadd.f32 %v1041, %v1176
    %v1209 = vadd.f32 %v1042, %v1177
    %v1210 = vadd.f32 %v1043, %v1178
    %v1212 = vlaneseq
    %v1213 = vshrl.u32 %v1212, 7
    %v1214 = vsub.s32 0, %v1213
    %v1215 = vrot.slane %v518, %v1214
    %v1217 = vmul.f32 %v1215, 0.0
    %v1218 = vmul.f32 %v1109, %v1215
    %v1219 = vmul.f32 %v1110, %v1215
    %v1220 = vmul.f32 %v1111, %v1215
    %v1221 = vmul.f32 %v1112, %v1215
    %v1222 = vmul.f32 %v1113, %v1215
    %v1223 = vmul.f32 %v1114, %v1215
    %v1224 = vmul.f32 %v1115, %v1215
    %v1225 = vmul.f32 %v1116, %v1215
    %v1226 = vmul.f32 %v1117, %v1215
    %v1227 = vmul.f32 %v1118, %v1215
    %v1228 = vmul.f32 %v1119, %v1215
    %v1229 = vmul.f32 %v1120, %v1215
    %v1230 = vmul.f32 %v1121, %v1215
    %v1231 = vmul.f32 %v1122, %v1215
    %v1232 = vmul.f32 %v1123, %v1215
    %v1233 = vmul.f32 %v1124, %v1215
    %v1234 = vmul.f32 %v1125, %v1215
    %v1235 = vmul.f32 %v1126, %v1215
    %v1236 = vmul.f32 %v1127, %v1215
    %v1237 = vmul.f32 %v1128, %v1215
    %v1238 = vmul.f32 %v1129, %v1215
    %v1239 = vmul.f32 %v1130, %v1215
    %v1240 = vmul.f32 %v1131, %v1215
    %v1241 = vmul.f32 %v1132, %v1215
    %v1242 = vmul.f32 %v1133, %v1215
    %v1243 = vmul.f32 %v1134, %v1215
    %v1244 = vmul.f32 %v1135, %v1215
    %v1245 = vmul.f32 %v1136, %v1215
    %v1246 = vmul.f32 %v1137, %v1215
    %v1247 = vmul.f32 %v1138, %v1215
    %v1248 = vadd.f32 %v1179, %v1217
    %v1249 = vadd.f32 %v1180, %v1217
    %v1250 = vadd.f32 %v1181, %v1218
    %v1251 = vadd.f32 %v1182, %v1219
    %v1252 = vadd.f32 %v1183, %v1220
    %v1253 = vadd.f32 %v1184, %v1221
    %v1254 = vadd.f32 %v1185, %v1222
    %v1255 = vadd.f32 %v1186, %v1223
    %v1256 = vadd.f32 %v1187, %v1224
    %v1257 = vadd.f32 %v1188, %v1225
    %v1258 = vadd.f32 %v1189, %v1226
    %v1259 = vadd.f32 %v1190, %v1227
    %v1260 = vadd.f32 %v1191, %v1228
    %v1261 = vadd.f32 %v1192, %v1229
    %v1262 = vadd.f32 %v1193, %v1230
    %v1263 = vadd.f32 %v1194, %v1231
    %v1264 = vadd.f32 %v1195, %v1232
    %v1265 = vadd.f32 %v1196, %v1233
    %v1266 = vadd.f32 %v1197, %v1234
    %v1267 = vadd.f32 %v1198, %v1235
    %v1268 = vadd.f32 %v1199, %v1236
    %v1269 = vadd.f32 %v1200, %v1237
    %v1270 = vadd.f32 %v1201, %v1238
    %v1271 = vadd.f32 %v1202, %v1239
    %v1272 = vadd.f32 %v1203, %v1240
    %v1273 = vadd.f32 %v1204, %v1241
    %v1274 = vadd.f32 %v1205, %v1242
    %v1275 = vadd.f32 %v1206, %v1243
    %v1276 = vadd.f32 %v1207, %v1244
    %v1277 = vadd.f32 %v1208, %v1245
    %v1278 = vadd.f32 %v1209, %v1246
    %v1279 = vadd.f32 %v1210, %v1247
    %v1281 = vlaneseq
    %v1282 = vshrl.u32 %v1281, 7
    %v1283 = vsub.s32 0, %v1282
    %v1284 = vrot.slane %v530, %v1283
    %v1286 = vmul.f32 %v1111, %v1284
    %v1287 = vmul.f32 %v1112, %v1284
    %v1288 = vmul.f32 %v1113, %v1284
    %v1289 = vmul.f32 %v1114, %v1284
    %v1290 = vmul.f32 %v1115, %v1284
    %v1291 = vmul.f32 %v1116, %v1284
    %v1292 = vmul.f32 %v1117, %v1284
    %v1293 = vmul.f32 %v1118, %v1284
    %v1294 = vmul.f32 %v1119, %v1284
    %v1295 = vmul.f32 %v1120, %v1284
    %v1296 = vmul.f32 %v1121, %v1284
    %v1297 = vmul.f32 %v1122, %v1284
    %v1298 = vmul.f32 %v1123, %v1284
    %v1299 = vmul.f32 %v1124, %v1284
    %v1300 = vmul.f32 %v1125, %v1284
    %v1301 = vmul.f32 %v1126, %v1284
    %v1302 = vmul.f32 %v1127, %v1284
    %v1303 = vmul.f32 %v1128, %v1284
    %v1304 = vmul.f32 %v1129, %v1284
    %v1305 = vmul.f32 %v1130, %v1284
    %v1306 = vmul.f32 %v1131, %v1284
    %v1307 = vmul.f32 %v1132, %v1284
    %v1308 = vmul.f32 %v1133, %v1284
    %v1309 = vmul.f32 %v1134, %v1284
    %v1310 = vmul.f32 %v1135, %v1284
    %v1311 = vmul.f32 %v1136, %v1284
    %v1312 = vmul.f32 %v1137, %v1284
    %v1313 = vmul.f32 %v1138, %v1284
    %v1314 = vmul.f32 %v1139, %v1284
    %v1315 = vmul.f32 %v1140, %v1284
    %v1316 = vmul.f32 %v1284, 0.0
    %v1317 = vadd.f32 %v1248, %v1286
    %v1318 = vadd.f32 %v1249, %v1287
    %v1319 = vadd.f32 %v1250, %v1288
    %v1320 = vadd.f32 %v1251, %v1289
    %v1321 = vadd.f32 %v1252, %v1290
    %v1322 = vadd.f32 %v1253, %v1291
    %v1323 = vadd.f32 %v1254, %v1292
    %v1324 = vadd.f32 %v1255, %v1293
    %v1325 = vadd.f32 %v1256, %v1294
    %v1326 = vadd.f32 %v1257, %v1295
    %v1327 = vadd.f32 %v1258, %v1296
    %v1328 = vadd.f32 %v1259, %v1297
    %v1329 = vadd.f32 %v1260, %v1298
    %v1330 = vadd.f32 %v1261, %v1299
    %v1331 = vadd.f32 %v1262, %v1300
    %v1332 = vadd.f32 %v1263, %v1301
    %v1333 = vadd.f32 %v1264, %v1302
    %v1334 = vadd.f32 %v1265, %v1303
    %v1335 = vadd.f32 %v1266, %v1304
    %v1336 = vadd.f32 %v1267, %v1305
    %v1337 = vadd.f32 %v1268, %v1306
    %v1338 = vadd.f32 %v1269, %v1307
    %v1339 = vadd.f32 %v1270, %v1308
    %v1340 = vadd.f32 %v1271, %v1309
    %v1341 = vadd.f32 %v1272, %v1310
    %v1342 = vadd.f32 %v1273, %v1311
    %v1343 = vadd.f32 %v1274, %v1312
    %v1344 = vadd.f32 %v1275, %v1313
    %v1345 = vadd.f32 %v1276, %v1314
    %v1346 = vadd.f32 %v1277, %v1315
    %v1347 = vadd.f32 %v1278, %v1316
    %v1348 = vadd.f32 %v1279, %v1316
    %v1349 = vld [vmem:[#allocation10] sm:$0x1]
    %v1351 = vlaneseq
    %v1352 = vshrl.u32 %v1351, 7
    %v1353 = vsub.s32 0, %v1352
    %v1354 = vrot.slane %v1349, %v1353
    %v1356 = vadd.f32 %v1317, %v1354
    %v1357 = vadd.f32 %v1318, %v1354
    %v1358 = vadd.f32 %v1319, %v1354
    %v1359 = vadd.f32 %v1320, %v1354
    %v1360 = vadd.f32 %v1321, %v1354
    %v1361 = vadd.f32 %v1322, %v1354
    %v1362 = vadd.f32 %v1323, %v1354
    %v1363 = vadd.f32 %v1324, %v1354
    %v1364 = vadd.f32 %v1325, %v1354
    %v1365 = vadd.f32 %v1326, %v1354
    %v1366 = vadd.f32 %v1327, %v1354
    %v1367 = vadd.f32 %v1328, %v1354
    %v1368 = vadd.f32 %v1329, %v1354
    %v1369 = vadd.f32 %v1330, %v1354
    %v1370 = vadd.f32 %v1331, %v1354
    %v1371 = vadd.f32 %v1332, %v1354
    %v1372 = vadd.f32 %v1333, %v1354
    %v1373 = vadd.f32 %v1334, %v1354
    %v1374 = vadd.f32 %v1335, %v1354
    %v1375 = vadd.f32 %v1336, %v1354
    %v1376 = vadd.f32 %v1337, %v1354
    %v1377 = vadd.f32 %v1338, %v1354
    %v1378 = vadd.f32 %v1339, %v1354
    %v1379 = vadd.f32 %v1340, %v1354
    %v1380 = vadd.f32 %v1341, %v1354
    %v1381 = vadd.f32 %v1342, %v1354
    %v1382 = vadd.f32 %v1343, %v1354
    %v1383 = vadd.f32 %v1344, %v1354
    %v1384 = vadd.f32 %v1345, %v1354
    %v1385 = vadd.f32 %v1346, %v1354
    %v1386 = vadd.f32 %v1347, %v1354
    %v1387 = vadd.f32 %v1348, %v1354
    %v1388 = vmax.f32 %v1356, 0.0
    %v1389 = vmax.f32 %v1357, 0.0
    %v1390 = vmax.f32 %v1358, 0.0
    %v1391 = vmax.f32 %v1359, 0.0
    %v1392 = vmax.f32 %v1360, 0.0
    %v1393 = vmax.f32 %v1361, 0.0
    %v1394 = vmax.f32 %v1362, 0.0
    %v1395 = vmax.f32 %v1363, 0.0
    %v1396 = vmax.f32 %v1364, 0.0
    %v1397 = vmax.f32 %v1365, 0.0
    %v1398 = vmax.f32 %v1366, 0.0
    %v1399 = vmax.f32 %v1367, 0.0
    %v1400 = vmax.f32 %v1368, 0.0
    %v1401 = vmax.f32 %v1369, 0.0
    %v1402 = vmax.f32 %v1370, 0.0
    %v1403 = vmax.f32 %v1371, 0.0
    %v1404 = vmax.f32 %v1372, 0.0
    %v1405 = vmax.f32 %v1373, 0.0
    %v1406 = vmax.f32 %v1374, 0.0
    %v1407 = vmax.f32 %v1375, 0.0
    %v1408 = vmax.f32 %v1376, 0.0
    %v1409 = vmax.f32 %v1377, 0.0
    %v1410 = vmax.f32 %v1378, 0.0
    %v1411 = vmax.f32 %v1379, 0.0
    %v1412 = vmax.f32 %v1380, 0.0
    %v1413 = vmax.f32 %v1381, 0.0
    %v1414 = vmax.f32 %v1382, 0.0
    %v1415 = vmax.f32 %v1383, 0.0
    %v1416 = vmax.f32 %v1384, 0.0
    %v1417 = vmax.f32 %v1385, 0.0
    %v1418 = vmax.f32 %v1386, 0.0
    %v1419 = vmax.f32 %v1387, 0.0
    %v1420 = vadd.f32 %v482, %v1388
    %v1421 = vadd.f32 %v483, %v1389
    %v1422 = vadd.f32 %v484, %v1390
    %v1423 = vadd.f32 %v485, %v1391
    %v1424 = vadd.f32 %v486, %v1392
    %v1425 = vadd.f32 %v487, %v1393
    %v1426 = vadd.f32 %v488, %v1394
    %v1427 = vadd.f32 %v489, %v1395
    %v1428 = vadd.f32 %v490, %v1396
    %v1429 = vadd.f32 %v491, %v1397
    %v1430 = vadd.f32 %v492, %v1398
    %v1431 = vadd.f32 %v493, %v1399
    %v1432 = vadd.f32 %v494, %v1400
    %v1433 = vadd.f32 %v495, %v1401
    %v1434 = vadd.f32 %v496, %v1402
    %v1435 = vadd.f32 %v497, %v1403
    %v1436 = vadd.f32 %v498, %v1404
    %v1437 = vadd.f32 %v499, %v1405
    %v1438 = vadd.f32 %v500, %v1406
    %v1439 = vadd.f32 %v501, %v1407
    %v1440 = vadd.f32 %v502, %v1408
    %v1441 = vadd.f32 %v503, %v1409
    %v1442 = vadd.f32 %v504, %v1410
    %v1443 = vadd.f32 %v505, %v1411
    %v1444 = vadd.f32 %v506, %v1412
    %v1445 = vadd.f32 %v507, %v1413
    %v1446 = vadd.f32 %v508, %v1414
    %v1447 = vadd.f32 %v509, %v1415
    %v1448 = vadd.f32 %v510, %v1416
    %v1449 = vadd.f32 %v511, %v1417
    %v1450 = vadd.f32 %v512, %v1418
    %v1451 = vadd.f32 %v513, %v1419
    %v1452 = vld [vmem:[#allocation11] sm:$0xff]
    %v1453 = vld [vmem:[#allocation11 + $0x8] sm:$0xff]
    %v1454 = vld [vmem:[#allocation11 + $0x10] sm:$0xff]
    %v1455 = vld [vmem:[#allocation11 + $0x18] sm:$0xff]
    %v1456 = vld [vmem:[#allocation11 + $0x20] sm:$0xff]
    %v1457 = vld [vmem:[#allocation11 + $0x28] sm:$0xff]
    %v1458 = vld [vmem:[#allocation11 + $0x30] sm:$0xff]
    %v1459 = vld [vmem:[#allocation11 + $0x38] sm:$0xff]
    %v1460 = vld [vmem:[#allocation11 + $0x40] sm:$0xff]
    %v1461 = vld [vmem:[#allocation11 + $0x48] sm:$0xff]
    %v1462 = vld [vmem:[#allocation11 + $0x50] sm:$0xff]
    %v1463 = vld [vmem:[#allocation11 + $0x58] sm:$0xff]
    %v1464 = vld [vmem:[#allocation11 + $0x60] sm:$0xff]
    %v1465 = vld [vmem:[#allocation11 + $0x68] sm:$0xff]
    %v1466 = vld [vmem:[#allocation11 + $0x70] sm:$0xff]
    %v1467 = vld [vmem:[#allocation11 + $0x78] sm:$0xff]
    %v1468 = vld [vmem:[#allocation13] sm:$0x1]
    %v1470 = vlaneseq
    %v1471 = vshrl.u32 %v1470, 7
    %v1472 = vsub.s32 0, %v1471
    %v1473 = vrot.slane %v1468, %v1472
    %1475 = vmatprep.subr.mxu0 0.0
    %1476 = vmatpush1.msra.mxu0 %v1467
    %1477 = vmatprep.subr.mxu0 0.0
    %1478 = vmatpush1.msra.mxu0 %v1466
    %1479 = vmatprep.subr.mxu0 0.0
    %1480 = vmatpush1.msra.mxu0 %v1465
    %1481 = vmatprep.subr.mxu0 0.0
    %1482 = vmatpush1.msra.mxu0 %v1464
    %1483 = vmatprep.subr.mxu0 0.0
    %1484 = vmatpush1.msra.mxu0 %v1463
    %1485 = vmatprep.subr.mxu0 0.0
    %1486 = vmatpush1.msra.mxu0 %v1462
    %1487 = vmatprep.subr.mxu0 0.0
    %1488 = vmatpush1.msra.mxu0 %v1461
    %1489 = vmatprep.subr.mxu0 0.0
    %1490 = vmatpush1.msra.mxu0 %v1460
    %1491 = vmatprep.subr.mxu0 0.0
    %1492 = vmatpush1.msra.mxu0 %v1459
    %1493 = vmatprep.subr.mxu0 0.0
    %1494 = vmatpush1.msra.mxu0 %v1458
    %1495 = vmatprep.subr.mxu0 0.0
    %1496 = vmatpush1.msra.mxu0 %v1457
    %1497 = vmatprep.subr.mxu0 0.0
    %1498 = vmatpush1.msra.mxu0 %v1456
    %1499 = vmatprep.subr.mxu0 0.0
    %1500 = vmatpush1.msra.mxu0 %v1455
    %1501 = vmatprep.subr.mxu0 0.0
    %1502 = vmatpush1.msra.mxu0 %v1454
    %1503 = vmatprep.subr.mxu0 0.0
    %1504 = vmatpush1.msra.mxu0 %v1453
    %1505 = vmatprep.subr.mxu0 0.0
    %1506 = vmatpush1.msra.mxu0 %v1452
    %1507 = vmatprep.subr.mxu0 0.0
    %1508 = vmatpush2.msra.mxu0 0.0
    %1509 = vmatprep.subr.mxu0 0.0
    %1510 = vmatpush2.msra.mxu0 0.0
    %1511 = vmatprep.subr.mxu0 0.0
    %1512 = vmatpush2.msra.mxu0 0.0
    %1513 = vmatprep.subr.mxu0 0.0
    %1514 = vmatpush2.msra.mxu0 0.0
    %1515 = vmatprep.subr.mxu0 0.0
    %1516 = vmatpush2.msra.mxu0 0.0
    %1517 = vmatprep.subr.mxu0 0.0
    %1518 = vmatpush2.msra.mxu0 0.0
    %1519 = vmatprep.subr.mxu0 0.0
    %1520 = vmatpush2.msra.mxu0 0.0
    %1521 = vmatprep.subr.mxu0 0.0
    %1522 = vmatpush2.msra.mxu0 0.0
    %1523 = vmatprep.subr.mxu0 0.0
    %1524 = vmatpush2.msra.mxu0 0.0
    %1525 = vmatprep.subr.mxu0 0.0
    %1526 = vmatpush2.msra.mxu0 0.0
    %1527 = vmatprep.subr.mxu0 0.0
    %1528 = vmatpush2.msra.mxu0 0.0
    %1529 = vmatprep.subr.mxu0 0.0
    %1530 = vmatpush2.msra.mxu0 0.0
    %1531 = vmatprep.subr.mxu0 0.0
    %1532 = vmatpush2.msra.mxu0 0.0
    %1533 = vmatprep.subr.mxu0 0.0
    %1534 = vmatpush2.msra.mxu0 0.0
    %1535 = vmatprep.subr.mxu0 0.0
    %1536 = vmatpush2.msra.mxu0 0.0
    %1537 = vmatprep.subr.mxu0 0.0
    %1538 = vmatpush2.msra.mxu0 0.0
    %1539 = vmatprep.mubr.f32.mxu0 0.0
    %1540 = vmatmul.mubr.f32.gmra.mxu0 %v1420
    %v1541 = vpop.f32.mrf.mxu0
    %v1542 = vadd.f32 %v1473, %v1541
    %v1543 = vpop.f32.mrf.mxu0
    %1544 = vmatprep.mubr.f32.mxu0 0.0
    %1545 = vmatmul.mubr.f32.gmra.mxu0 %v1421
    %v1546 = vpop.f32.mrf.mxu0
    %v1547 = vadd.f32 %v1473, %v1546
    %v1548 = vpop.f32.mrf.mxu0
    %1549 = vmatprep.mubr.f32.mxu0 0.0
    %1550 = vmatmul.mubr.f32.gmra.mxu0 %v1422
    %v1551 = vpop.f32.mrf.mxu0
    %v1552 = vadd.f32 %v1473, %v1551
    %v1553 = vpop.f32.mrf.mxu0
    %1554 = vmatprep.mubr.f32.mxu0 0.0
    %1555 = vmatmul.mubr.f32.gmra.mxu0 %v1423
    %v1556 = vpop.f32.mrf.mxu0
    %v1557 = vadd.f32 %v1473, %v1556
    %v1558 = vpop.f32.mrf.mxu0
    %1559 = vmatprep.mubr.f32.mxu0 0.0
    %1560 = vmatmul.mubr.f32.gmra.mxu0 %v1424
    %v1561 = vpop.f32.mrf.mxu0
    %v1562 = vadd.f32 %v1473, %v1561
    %v1563 = vpop.f32.mrf.mxu0
    %1564 = vmatprep.mubr.f32.mxu0 0.0
    %1565 = vmatmul.mubr.f32.gmra.mxu0 %v1425
    %v1566 = vpop.f32.mrf.mxu0
    %v1567 = vadd.f32 %v1473, %v1566
    %v1568 = vpop.f32.mrf.mxu0
    %1569 = vmatprep.mubr.f32.mxu0 0.0
    %1570 = vmatmul.mubr.f32.gmra.mxu0 %v1426
    %v1571 = vpop.f32.mrf.mxu0
    %v1572 = vadd.f32 %v1473, %v1571
    %v1573 = vpop.f32.mrf.mxu0
    %1574 = vmatprep.mubr.f32.mxu0 0.0
    %1575 = vmatmul.mubr.f32.gmra.mxu0 %v1427
    %v1576 = vpop.f32.mrf.mxu0
    %v1577 = vadd.f32 %v1473, %v1576
    %v1578 = vpop.f32.mrf.mxu0
    %1579 = vmatprep.mubr.f32.mxu0 0.0
    %1580 = vmatmul.mubr.f32.gmra.mxu0 %v1428
    %v1581 = vpop.f32.mrf.mxu0
    %v1582 = vadd.f32 %v1473, %v1581
    %v1583 = vpop.f32.mrf.mxu0
    %1584 = vmatprep.mubr.f32.mxu0 0.0
    %1585 = vmatmul.mubr.f32.gmra.mxu0 %v1429
    %v1586 = vpop.f32.mrf.mxu0
    %v1587 = vadd.f32 %v1473, %v1586
    %v1588 = vpop.f32.mrf.mxu0
    %1589 = vmatprep.mubr.f32.mxu0 0.0
    %1590 = vmatmul.mubr.f32.gmra.mxu0 %v1430
    %v1591 = vpop.f32.mrf.mxu0
    %v1592 = vadd.f32 %v1473, %v1591
    %v1593 = vpop.f32.mrf.mxu0
    %1594 = vmatprep.mubr.f32.mxu0 0.0
    %1595 = vmatmul.mubr.f32.gmra.mxu0 %v1431
    %v1596 = vpop.f32.mrf.mxu0
    %v1597 = vadd.f32 %v1473, %v1596
    %v1598 = vpop.f32.mrf.mxu0
    %1599 = vmatprep.mubr.f32.mxu0 0.0
    %1600 = vmatmul.mubr.f32.gmra.mxu0 %v1432
    %v1601 = vpop.f32.mrf.mxu0
    %v1602 = vadd.f32 %v1473, %v1601
    %v1603 = vpop.f32.mrf.mxu0
    %1604 = vmatprep.mubr.f32.mxu0 0.0
    %1605 = vmatmul.mubr.f32.gmra.mxu0 %v1433
    %v1606 = vpop.f32.mrf.mxu0
    %v1607 = vadd.f32 %v1473, %v1606
    %v1608 = vpop.f32.mrf.mxu0
    %1609 = vmatprep.mubr.f32.mxu0 0.0
    %1610 = vmatmul.mubr.f32.gmra.mxu0 %v1434
    %v1611 = vpop.f32.mrf.mxu0
    %v1612 = vadd.f32 %v1473, %v1611
    %v1613 = vpop.f32.mrf.mxu0
    %1614 = vmatprep.mubr.f32.mxu0 0.0
    %1615 = vmatmul.mubr.f32.gmra.mxu0 %v1435
    %v1616 = vpop.f32.mrf.mxu0
    %v1617 = vadd.f32 %v1473, %v1616
    %v1618 = vpop.f32.mrf.mxu0
    %1619 = vmatprep.mubr.f32.mxu0 0.0
    %1620 = vmatmul.mubr.f32.gmra.mxu0 %v1436
    %v1621 = vpop.f32.mrf.mxu0
    %v1622 = vadd.f32 %v1473, %v1621
    %v1623 = vpop.f32.mrf.mxu0
    %1624 = vmatprep.mubr.f32.mxu0 0.0
    %1625 = vmatmul.mubr.f32.gmra.mxu0 %v1437
    %v1626 = vpop.f32.mrf.mxu0
    %v1627 = vadd.f32 %v1473, %v1626
    %v1628 = vpop.f32.mrf.mxu0
    %1629 = vmatprep.mubr.f32.mxu0 0.0
    %1630 = vmatmul.mubr.f32.gmra.mxu0 %v1438
    %v1631 = vpop.f32.mrf.mxu0
    %v1632 = vadd.f32 %v1473, %v1631
    %v1633 = vpop.f32.mrf.mxu0
    %1634 = vmatprep.mubr.f32.mxu0 0.0
    %1635 = vmatmul.mubr.f32.gmra.mxu0 %v1439
    %v1636 = vpop.f32.mrf.mxu0
    %v1637 = vadd.f32 %v1473, %v1636
    %v1638 = vpop.f32.mrf.mxu0
    %1639 = vmatprep.mubr.f32.mxu0 0.0
    %1640 = vmatmul.mubr.f32.gmra.mxu0 %v1440
    %v1641 = vpop.f32.mrf.mxu0
    %v1642 = vadd.f32 %v1473, %v1641
    %v1643 = vpop.f32.mrf.mxu0
    %1644 = vmatprep.mubr.f32.mxu0 0.0
    %1645 = vmatmul.mubr.f32.gmra.mxu0 %v1441
    %v1646 = vpop.f32.mrf.mxu0
    %v1647 = vadd.f32 %v1473, %v1646
    %v1648 = vpop.f32.mrf.mxu0
    %1649 = vmatprep.mubr.f32.mxu0 0.0
    %1650 = vmatmul.mubr.f32.gmra.mxu0 %v1442
    %v1651 = vpop.f32.mrf.mxu0
    %v1652 = vadd.f32 %v1473, %v1651
    %v1653 = vpop.f32.mrf.mxu0
    %1654 = vmatprep.mubr.f32.mxu0 0.0
    %1655 = vmatmul.mubr.f32.gmra.mxu0 %v1443
    %v1656 = vpop.f32.mrf.mxu0
    %v1657 = vadd.f32 %v1473, %v1656
    %v1658 = vpop.f32.mrf.mxu0
    %1659 = vmatprep.mubr.f32.mxu0 0.0
    %1660 = vmatmul.mubr.f32.gmra.mxu0 %v1444
    %v1661 = vpop.f32.mrf.mxu0
    %v1662 = vadd.f32 %v1473, %v1661
    %v1663 = vpop.f32.mrf.mxu0
    %1664 = vmatprep.mubr.f32.mxu0 0.0
    %1665 = vmatmul.mubr.f32.gmra.mxu0 %v1445
    %v1666 = vpop.f32.mrf.mxu0
    %v1667 = vadd.f32 %v1473, %v1666
    %v1668 = vpop.f32.mrf.mxu0
    %1669 = vmatprep.mubr.f32.mxu0 0.0
    %1670 = vmatmul.mubr.f32.gmra.mxu0 %v1446
    %v1671 = vpop.f32.mrf.mxu0
    %v1672 = vadd.f32 %v1473, %v1671
    %v1673 = vpop.f32.mrf.mxu0
    %1674 = vmatprep.mubr.f32.mxu0 0.0
    %1675 = vmatmul.mubr.f32.gmra.mxu0 %v1447
    %v1676 = vpop.f32.mrf.mxu0
    %v1677 = vadd.f32 %v1473, %v1676
    %v1678 = vpop.f32.mrf.mxu0
    %1679 = vmatprep.mubr.f32.mxu0 0.0
    %1680 = vmatmul.mubr.f32.gmra.mxu0 %v1448
    %v1681 = vpop.f32.mrf.mxu0
    %v1682 = vadd.f32 %v1473, %v1681
    %v1683 = vpop.f32.mrf.mxu0
    %1684 = vmatprep.mubr.f32.mxu0 0.0
    %1685 = vmatmul.mubr.f32.gmra.mxu0 %v1449
    %v1686 = vpop.f32.mrf.mxu0
    %v1687 = vadd.f32 %v1473, %v1686
    %v1688 = vpop.f32.mrf.mxu0
    %1689 = vmatprep.mubr.f32.mxu0 0.0
    %1690 = vmatmul.mubr.f32.gmra.mxu0 %v1450
    %v1691 = vpop.f32.mrf.mxu0
    %v1692 = vadd.f32 %v1473, %v1691
    %v1693 = vpop.f32.mrf.mxu0
    %1694 = vmatprep.mubr.f32.mxu0 0.0
    %1695 = vmatmul.mubr.f32.gmra.mxu0 %v1451
    %v1696 = vpop.f32.mrf.mxu0
    %v1697 = vadd.f32 %v1473, %v1696
    %v1698 = vpop.f32.mrf.mxu0
    %1699 = vdwg.mxu0
    %v1700 = vmax.f32 %v1542, 0.0
    %v1701 = vmax.f32 %v1547, 0.0
    %v1702 = vmax.f32 %v1552, 0.0
    %v1703 = vmax.f32 %v1557, 0.0
    %v1704 = vmax.f32 %v1562, 0.0
    %v1705 = vmax.f32 %v1567, 0.0
    %v1706 = vmax.f32 %v1572, 0.0
    %v1707 = vmax.f32 %v1577, 0.0
    %v1708 = vmax.f32 %v1582, 0.0
    %v1709 = vmax.f32 %v1587, 0.0
    %v1710 = vmax.f32 %v1592, 0.0
    %v1711 = vmax.f32 %v1597, 0.0
    %v1712 = vmax.f32 %v1602, 0.0
    %v1713 = vmax.f32 %v1607, 0.0
    %v1714 = vmax.f32 %v1612, 0.0
    %v1715 = vmax.f32 %v1617, 0.0
    %v1716 = vmax.f32 %v1622, 0.0
    %v1717 = vmax.f32 %v1627, 0.0
    %v1718 = vmax.f32 %v1632, 0.0
    %v1719 = vmax.f32 %v1637, 0.0
    %v1720 = vmax.f32 %v1642, 0.0
    %v1721 = vmax.f32 %v1647, 0.0
    %v1722 = vmax.f32 %v1652, 0.0
    %v1723 = vmax.f32 %v1657, 0.0
    %v1724 = vmax.f32 %v1662, 0.0
    %v1725 = vmax.f32 %v1667, 0.0
    %v1726 = vmax.f32 %v1672, 0.0
    %v1727 = vmax.f32 %v1677, 0.0
    %v1728 = vmax.f32 %v1682, 0.0
    %v1729 = vmax.f32 %v1687, 0.0
    %v1730 = vmax.f32 %v1692, 0.0
    %v1731 = vmax.f32 %v1697, 0.0
    %v1732 = vld [vmem:[%s7] sm:$0x1]
    %s1733 = scalar_lea.vmem %s7, 1
    %v1734 = vld [vmem:[%s1733] sm:$0x1]
    %s1735 = scalar_lea.vmem %s7, 2
    %v1736 = vld [vmem:[%s1735] sm:$0x1]
    %s1737 = scalar_lea.vmem %s7, 3
    %v1738 = vld [vmem:[%s1737] sm:$0x1]
    %s1739 = scalar_lea.vmem %s7, 4
    %v1740 = vld [vmem:[%s1739] sm:$0x1]
    %s1741 = scalar_lea.vmem %s7, 5
    %v1742 = vld [vmem:[%s1741] sm:$0x1]
    %s1743 = scalar_lea.vmem %s7, 6
    %v1744 = vld [vmem:[%s1743] sm:$0x1]
    %s1745 = scalar_lea.vmem %s7, 7
    %v1746 = vld [vmem:[%s1745] sm:$0x1]
    %s1747 = scalar_lea.vmem %s7, 8
    %v1748 = vld [vmem:[%s1747] sm:$0x1]
    %v1749 = vrot.slane %v1700, 7
    %v1750 = vrot.slane %v1702, 7
    %v1751 = vrot.slane %v1704, 7
    %v1752 = vrot.slane %v1706, 7
    %v1753 = vrot.slane %v1708, 7
    %v1754 = vrot.slane %v1710, 7
    %v1755 = vrot.slane %v1712, 7
    %v1756 = vrot.slane %v1714, 7
    %v1757 = vrot.slane %v1716, 7
    %v1758 = vrot.slane %v1718, 7
    %v1759 = vrot.slane %v1720, 7
    %v1760 = vrot.slane %v1722, 7
    %v1761 = vrot.slane %v1724, 7
    %v1762 = vrot.slane %v1726, 7
    %v1763 = vrot.slane %v1728, 7
    %v1764 = vrot.slane %v1730, 7
    %v1765 = vrot.slane %v1701, 7
    %v1766 = vrot.slane %v1703, 7
    %v1767 = vrot.slane %v1705, 7
    %v1768 = vrot.slane %v1707, 7
    %v1769 = vrot.slane %v1709, 7
    %v1770 = vrot.slane %v1711, 7
    %v1771 = vrot.slane %v1713, 7
    %v1772 = vrot.slane %v1715, 7
    %v1773 = vrot.slane %v1717, 7
    %v1774 = vrot.slane %v1719, 7
    %v1775 = vrot.slane %v1721, 7
    %v1776 = vrot.slane %v1723, 7
    %v1777 = vrot.slane %v1725, 7
    %v1778 = vrot.slane %v1727, 7
    %v1779 = vrot.slane %v1729, 7
    %v1780 = vrot.slane %v1731, 7
    %v1781 = vsel %vm563, %v1749, %v1765
    %v1782 = vsel %vm563, %v1750, %v1766
    %v1783 = vsel %vm563, %v1751, %v1767
    %v1784 = vsel %vm563, %v1752, %v1768
    %v1785 = vsel %vm563, %v1753, %v1769
    %v1786 = vsel %vm563, %v1754, %v1770
    %v1787 = vsel %vm563, %v1755, %v1771
    %v1788 = vsel %vm563, %v1756, %v1772
    %v1789 = vsel %vm563, %v1757, %v1773
    %v1790 = vsel %vm563, %v1758, %v1774
    %v1791 = vsel %vm563, %v1759, %v1775
    %v1792 = vsel %vm563, %v1760, %v1776
    %v1793 = vsel %vm563, %v1761, %v1777
    %v1794 = vsel %vm563, %v1762, %v1778
    %v1795 = vsel %vm563, %v1763, %v1779
    %v1796 = vsel %vm563, %v1764, %v1780
    %v1797 = vsel %vm563, %v1765, %v1749
    %v1798 = vsel %vm563, %v1766, %v1750
    %v1799 = vsel %vm563, %v1767, %v1751
    %v1800 = vsel %vm563, %v1768, %v1752
    %v1801 = vsel %vm563, %v1769, %v1753
    %v1802 = vsel %vm563, %v1770, %v1754
    %v1803 = vsel %vm563, %v1771, %v1755
    %v1804 = vsel %vm563, %v1772, %v1756
    %v1805 = vsel %vm563, %v1773, %v1757
    %v1806 = vsel %vm563, %v1774, %v1758
    %v1807 = vsel %vm563, %v1775, %v1759
    %v1808 = vsel %vm563, %v1776, %v1760
    %v1809 = vsel %vm563, %v1777, %v1761
    %v1810 = vsel %vm563, %v1778, %v1762
    %v1811 = vsel %vm563, %v1779, %v1763
    %v1812 = vsel %vm563, %v1780, %v1764
    %v1813 = vmul.f32 %v1797, %v194
    %v1814 = vmul.f32 %v1781, %v195
    %v1815 = vmul.f32 %v1798, %v194
    %v1816 = vmul.f32 %v1782, %v195
    %v1817 = vmul.f32 %v1799, %v194
    %v1818 = vmul.f32 %v1783, %v195
    %v1819 = vmul.f32 %v1800, %v194
    %v1820 = vmul.f32 %v1784, %v195
    %v1821 = vmul.f32 %v1801, %v194
    %v1822 = vmul.f32 %v1785, %v195
    %v1823 = vmul.f32 %v1802, %v194
    %v1824 = vmul.f32 %v1786, %v195
    %v1825 = vmul.f32 %v1803, %v194
    %v1826 = vmul.f32 %v1787, %v195
    %v1827 = vmul.f32 %v1804, %v194
    %v1828 = vmul.f32 %v1788, %v195
    %v1829 = vmul.f32 %v1805, %v194
    %v1830 = vmul.f32 %v1789, %v195
    %v1831 = vmul.f32 %v1806, %v194
    %v1832 = vmul.f32 %v1790, %v195
    %v1833 = vmul.f32 %v1807, %v194
    %v1834 = vmul.f32 %v1791, %v195
    %v1835 = vmul.f32 %v1808, %v194
    %v1836 = vmul.f32 %v1792, %v195
    %v1837 = vmul.f32 %v1809, %v194
    %v1838 = vmul.f32 %v1793, %v195
    %v1839 = vmul.f32 %v1810, %v194
    %v1840 = vmul.f32 %v1794, %v195
    %v1841 = vmul.f32 %v1811, %v194
    %v1842 = vmul.f32 %v1795, %v195
    %v1843 = vmul.f32 %v1812, %v194
    %v1844 = vmul.f32 %v1796, %v195
    %v1846 = vlaneseq
    %v1847 = vshrl.u32 %v1846, 7
    %v1848 = vsub.s32 0, %v1847
    %v1849 = vrot.slane %v1738, %v1848
    %v1851 = vmul.f32 %v1813, %v1849
    %v1852 = vmul.f32 %v1814, %v1849
    %v1853 = vmul.f32 %v1815, %v1849
    %v1854 = vmul.f32 %v1816, %v1849
    %v1855 = vmul.f32 %v1817, %v1849
    %v1856 = vmul.f32 %v1818, %v1849
    %v1857 = vmul.f32 %v1819, %v1849
    %v1858 = vmul.f32 %v1820, %v1849
    %v1859 = vmul.f32 %v1821, %v1849
    %v1860 = vmul.f32 %v1822, %v1849
    %v1861 = vmul.f32 %v1823, %v1849
    %v1862 = vmul.f32 %v1824, %v1849
    %v1863 = vmul.f32 %v1825, %v1849
    %v1864 = vmul.f32 %v1826, %v1849
    %v1865 = vmul.f32 %v1827, %v1849
    %v1866 = vmul.f32 %v1828, %v1849
    %v1867 = vmul.f32 %v1829, %v1849
    %v1868 = vmul.f32 %v1830, %v1849
    %v1869 = vmul.f32 %v1831, %v1849
    %v1870 = vmul.f32 %v1832, %v1849
    %v1871 = vmul.f32 %v1833, %v1849
    %v1872 = vmul.f32 %v1834, %v1849
    %v1873 = vmul.f32 %v1835, %v1849
    %v1874 = vmul.f32 %v1836, %v1849
    %v1875 = vmul.f32 %v1837, %v1849
    %v1876 = vmul.f32 %v1838, %v1849
    %v1877 = vmul.f32 %v1839, %v1849
    %v1878 = vmul.f32 %v1840, %v1849
    %v1879 = vmul.f32 %v1841, %v1849
    %v1880 = vmul.f32 %v1842, %v1849
    %v1881 = vmul.f32 %v1843, %v1849
    %v1882 = vmul.f32 %v1844, %v1849
    %v1883 = vadd.f32 %v1851, 0.0
    %v1884 = vadd.f32 %v1852, 0.0
    %v1885 = vadd.f32 %v1853, 0.0
    %v1886 = vadd.f32 %v1854, 0.0
    %v1887 = vadd.f32 %v1855, 0.0
    %v1888 = vadd.f32 %v1856, 0.0
    %v1889 = vadd.f32 %v1857, 0.0
    %v1890 = vadd.f32 %v1858, 0.0
    %v1891 = vadd.f32 %v1859, 0.0
    %v1892 = vadd.f32 %v1860, 0.0
    %v1893 = vadd.f32 %v1861, 0.0
    %v1894 = vadd.f32 %v1862, 0.0
    %v1895 = vadd.f32 %v1863, 0.0
    %v1896 = vadd.f32 %v1864, 0.0
    %v1897 = vadd.f32 %v1865, 0.0
    %v1898 = vadd.f32 %v1866, 0.0
    %v1899 = vadd.f32 %v1867, 0.0
    %v1900 = vadd.f32 %v1868, 0.0
    %v1901 = vadd.f32 %v1869, 0.0
    %v1902 = vadd.f32 %v1870, 0.0
    %v1903 = vadd.f32 %v1871, 0.0
    %v1904 = vadd.f32 %v1872, 0.0
    %v1905 = vadd.f32 %v1873, 0.0
    %v1906 = vadd.f32 %v1874, 0.0
    %v1907 = vadd.f32 %v1875, 0.0
    %v1908 = vadd.f32 %v1876, 0.0
    %v1909 = vadd.f32 %v1877, 0.0
    %v1910 = vadd.f32 %v1878, 0.0
    %v1911 = vadd.f32 %v1879, 0.0
    %v1912 = vadd.f32 %v1880, 0.0
    %v1913 = vadd.f32 %v1881, 0.0
    %v1914 = vadd.f32 %v1882, 0.0
    %v1916 = vlaneseq
    %v1917 = vshrl.u32 %v1916, 7
    %v1918 = vsub.s32 0, %v1917
    %v1919 = vrot.slane %v1732, %v1918
    %v1921 = vmul.f32 %v1919, 0.0
    %v1922 = vmul.f32 %v1813, %v1919
    %v1923 = vmul.f32 %v1814, %v1919
    %v1924 = vmul.f32 %v1815, %v1919
    %v1925 = vmul.f32 %v1816, %v1919
    %v1926 = vmul.f32 %v1817, %v1919
    %v1927 = vmul.f32 %v1818, %v1919
    %v1928 = vmul.f32 %v1819, %v1919
    %v1929 = vmul.f32 %v1820, %v1919
    %v1930 = vmul.f32 %v1821, %v1919
    %v1931 = vmul.f32 %v1822, %v1919
    %v1932 = vmul.f32 %v1823, %v1919
    %v1933 = vmul.f32 %v1824, %v1919
    %v1934 = vmul.f32 %v1825, %v1919
    %v1935 = vmul.f32 %v1826, %v1919
    %v1936 = vmul.f32 %v1827, %v1919
    %v1937 = vmul.f32 %v1828, %v1919
    %v1938 = vmul.f32 %v1829, %v1919
    %v1939 = vmul.f32 %v1830, %v1919
    %v1940 = vmul.f32 %v1831, %v1919
    %v1941 = vmul.f32 %v1832, %v1919
    %v1942 = vmul.f32 %v1833, %v1919
    %v1943 = vmul.f32 %v1834, %v1919
    %v1944 = vmul.f32 %v1835, %v1919
    %v1945 = vmul.f32 %v1836, %v1919
    %v1946 = vmul.f32 %v1837, %v1919
    %v1947 = vmul.f32 %v1838, %v1919
    %v1948 = vmul.f32 %v1839, %v1919
    %v1949 = vmul.f32 %v1840, %v1919
    %v1950 = vmul.f32 %v1841, %v1919
    %v1951 = vmul.f32 %v1842, %v1919
    %v1952 = vadd.f32 %v1883, %v1921
    %v1953 = vadd.f32 %v1884, %v1921
    %v1954 = vadd.f32 %v1885, %v1922
    %v1955 = vadd.f32 %v1886, %v1923
    %v1956 = vadd.f32 %v1887, %v1924
    %v1957 = vadd.f32 %v1888, %v1925
    %v1958 = vadd.f32 %v1889, %v1926
    %v1959 = vadd.f32 %v1890, %v1927
    %v1960 = vadd.f32 %v1891, %v1928
    %v1961 = vadd.f32 %v1892, %v1929
    %v1962 = vadd.f32 %v1893, %v1930
    %v1963 = vadd.f32 %v1894, %v1931
    %v1964 = vadd.f32 %v1895, %v1932
    %v1965 = vadd.f32 %v1896, %v1933
    %v1966 = vadd.f32 %v1897, %v1934
    %v1967 = vadd.f32 %v1898, %v1935
    %v1968 = vadd.f32 %v1899, %v1936
    %v1969 = vadd.f32 %v1900, %v1937
    %v1970 = vadd.f32 %v1901, %v1938
    %v1971 = vadd.f32 %v1902, %v1939
    %v1972 = vadd.f32 %v1903, %v1940
    %v1973 = vadd.f32 %v1904, %v1941
    %v1974 = vadd.f32 %v1905, %v1942
    %v1975 = vadd.f32 %v1906, %v1943
    %v1976 = vadd.f32 %v1907, %v1944
    %v1977 = vadd.f32 %v1908, %v1945
    %v1978 = vadd.f32 %v1909, %v1946
    %v1979 = vadd.f32 %v1910, %v1947
    %v1980 = vadd.f32 %v1911, %v1948
    %v1981 = vadd.f32 %v1912, %v1949
    %v1982 = vadd.f32 %v1913, %v1950
    %v1983 = vadd.f32 %v1914, %v1951
    %v1985 = vlaneseq
    %v1986 = vshrl.u32 %v1985, 7
    %v1987 = vsub.s32 0, %v1986
    %v1988 = vrot.slane %v1744, %v1987
    %v1990 = vmul.f32 %v1815, %v1988
    %v1991 = vmul.f32 %v1816, %v1988
    %v1992 = vmul.f32 %v1817, %v1988
    %v1993 = vmul.f32 %v1818, %v1988
    %v1994 = vmul.f32 %v1819, %v1988
    %v1995 = vmul.f32 %v1820, %v1988
    %v1996 = vmul.f32 %v1821, %v1988
    %v1997 = vmul.f32 %v1822, %v1988
    %v1998 = vmul.f32 %v1823, %v1988
    %v1999 = vmul.f32 %v1824, %v1988
    %v2000 = vmul.f32 %v1825, %v1988
    %v2001 = vmul.f32 %v1826, %v1988
    %v2002 = vmul.f32 %v1827, %v1988
    %v2003 = vmul.f32 %v1828, %v1988
    %v2004 = vmul.f32 %v1829, %v1988
    %v2005 = vmul.f32 %v1830, %v1988
    %v2006 = vmul.f32 %v1831, %v1988
    %v2007 = vmul.f32 %v1832, %v1988
    %v2008 = vmul.f32 %v1833, %v1988
    %v2009 = vmul.f32 %v1834, %v1988
    %v2010 = vmul.f32 %v1835, %v1988
    %v2011 = vmul.f32 %v1836, %v1988
    %v2012 = vmul.f32 %v1837, %v1988
    %v2013 = vmul.f32 %v1838, %v1988
    %v2014 = vmul.f32 %v1839, %v1988
    %v2015 = vmul.f32 %v1840, %v1988
    %v2016 = vmul.f32 %v1841, %v1988
    %v2017 = vmul.f32 %v1842, %v1988
    %v2018 = vmul.f32 %v1843, %v1988
    %v2019 = vmul.f32 %v1844, %v1988
    %v2020 = vmul.f32 %v1988, 0.0
    %v2021 = vadd.f32 %v1952, %v1990
    %v2022 = vadd.f32 %v1953, %v1991
    %v2023 = vadd.f32 %v1954, %v1992
    %v2024 = vadd.f32 %v1955, %v1993
    %v2025 = vadd.f32 %v1956, %v1994
    %v2026 = vadd.f32 %v1957, %v1995
    %v2027 = vadd.f32 %v1958, %v1996
    %v2028 = vadd.f32 %v1959, %v1997
    %v2029 = vadd.f32 %v1960, %v1998
    %v2030 = vadd.f32 %v1961, %v1999
    %v2031 = vadd.f32 %v1962, %v2000
    %v2032 = vadd.f32 %v1963, %v2001
    %v2033 = vadd.f32 %v1964, %v2002
    %v2034 = vadd.f32 %v1965, %v2003
    %v2035 = vadd.f32 %v1966, %v2004
    %v2036 = vadd.f32 %v1967, %v2005
    %v2037 = vadd.f32 %v1968, %v2006
    %v2038 = vadd.f32 %v1969, %v2007
    %v2039 = vadd.f32 %v1970, %v2008
    %v2040 = vadd.f32 %v1971, %v2009
    %v2041 = vadd.f32 %v1972, %v2010
    %v2042 = vadd.f32 %v1973, %v2011
    %v2043 = vadd.f32 %v1974, %v2012
    %v2044 = vadd.f32 %v1975, %v2013
    %v2045 = vadd.f32 %v1976, %v2014
    %v2046 = vadd.f32 %v1977, %v2015
    %v2047 = vadd.f32 %v1978, %v2016
    %v2048 = vadd.f32 %v1979, %v2017
    %v2049 = vadd.f32 %v1980, %v2018
    %v2050 = vadd.f32 %v1981, %v2019
    %v2051 = vadd.f32 %v1982, %v2020
    %v2052 = vadd.f32 %v1983, %v2020
    %v2054 = vlaneseq
    %v2055 = vshrl.u32 %v2054, 7
    %v2056 = vsub.s32 0, %v2055
    %v2057 = vrot.slane %v1740, %v2056
    %v2059 = vmul.f32 %v1700, %v2057
    %v2060 = vmul.f32 %v1701, %v2057
    %v2061 = vmul.f32 %v1702, %v2057
    %v2062 = vmul.f32 %v1703, %v2057
    %v2063 = vmul.f32 %v1704, %v2057
    %v2064 = vmul.f32 %v1705, %v2057
    %v2065 = vmul.f32 %v1706, %v2057
    %v2066 = vmul.f32 %v1707, %v2057
    %v2067 = vmul.f32 %v1708, %v2057
    %v2068 = vmul.f32 %v1709, %v2057
    %v2069 = vmul.f32 %v1710, %v2057
    %v2070 = vmul.f32 %v1711, %v2057
    %v2071 = vmul.f32 %v1712, %v2057
    %v2072 = vmul.f32 %v1713, %v2057
    %v2073 = vmul.f32 %v1714, %v2057
    %v2074 = vmul.f32 %v1715, %v2057
    %v2075 = vmul.f32 %v1716, %v2057
    %v2076 = vmul.f32 %v1717, %v2057
    %v2077 = vmul.f32 %v1718, %v2057
    %v2078 = vmul.f32 %v1719, %v2057
    %v2079 = vmul.f32 %v1720, %v2057
    %v2080 = vmul.f32 %v1721, %v2057
    %v2081 = vmul.f32 %v1722, %v2057
    %v2082 = vmul.f32 %v1723, %v2057
    %v2083 = vmul.f32 %v1724, %v2057
    %v2084 = vmul.f32 %v1725, %v2057
    %v2085 = vmul.f32 %v1726, %v2057
    %v2086 = vmul.f32 %v1727, %v2057
    %v2087 = vmul.f32 %v1728, %v2057
    %v2088 = vmul.f32 %v1729, %v2057
    %v2089 = vmul.f32 %v1730, %v2057
    %v2090 = vmul.f32 %v1731, %v2057
    %v2091 = vadd.f32 %v2021, %v2059
    %v2092 = vadd.f32 %v2022, %v2060
    %v2093 = vadd.f32 %v2023, %v2061
    %v2094 = vadd.f32 %v2024, %v2062
    %v2095 = vadd.f32 %v2025, %v2063
    %v2096 = vadd.f32 %v2026, %v2064
    %v2097 = vadd.f32 %v2027, %v2065
    %v2098 = vadd.f32 %v2028, %v2066
    %v2099 = vadd.f32 %v2029, %v2067
    %v2100 = vadd.f32 %v2030, %v2068
    %v2101 = vadd.f32 %v2031, %v2069
    %v2102 = vadd.f32 %v2032, %v2070
    %v2103 = vadd.f32 %v2033, %v2071
    %v2104 = vadd.f32 %v2034, %v2072
    %v2105 = vadd.f32 %v2035, %v2073
    %v2106 = vadd.f32 %v2036, %v2074
    %v2107 = vadd.f32 %v2037, %v2075
    %v2108 = vadd.f32 %v2038, %v2076
    %v2109 = vadd.f32 %v2039, %v2077
    %v2110 = vadd.f32 %v2040, %v2078
    %v2111 = vadd.f32 %v2041, %v2079
    %v2112 = vadd.f32 %v2042, %v2080
    %v2113 = vadd.f32 %v2043, %v2081
    %v2114 = vadd.f32 %v2044, %v2082
    %v2115 = vadd.f32 %v2045, %v2083
    %v2116 = vadd.f32 %v2046, %v2084
    %v2117 = vadd.f32 %v2047, %v2085
    %v2118 = vadd.f32 %v2048, %v2086
    %v2119 = vadd.f32 %v2049, %v2087
    %v2120 = vadd.f32 %v2050, %v2088
    %v2121 = vadd.f32 %v2051, %v2089
    %v2122 = vadd.f32 %v2052, %v2090
    %v2124 = vlaneseq
    %v2125 = vshrl.u32 %v2124, 7
    %v2126 = vsub.s32 0, %v2125
    %v2127 = vrot.slane %v1734, %v2126
    %v2129 = vmul.f32 %v2127, 0.0
    %v2130 = vmul.f32 %v1700, %v2127
    %v2131 = vmul.f32 %v1701, %v2127
    %v2132 = vmul.f32 %v1702, %v2127
    %v2133 = vmul.f32 %v1703, %v2127
    %v2134 = vmul.f32 %v1704, %v2127
    %v2135 = vmul.f32 %v1705, %v2127
    %v2136 = vmul.f32 %v1706, %v2127
    %v2137 = vmul.f32 %v1707, %v2127
    %v2138 = vmul.f32 %v1708, %v2127
    %v2139 = vmul.f32 %v1709, %v2127
    %v2140 = vmul.f32 %v1710, %v2127
    %v2141 = vmul.f32 %v1711, %v2127
    %v2142 = vmul.f32 %v1712, %v2127
    %v2143 = vmul.f32 %v1713, %v2127
    %v2144 = vmul.f32 %v1714, %v2127
    %v2145 = vmul.f32 %v1715, %v2127
    %v2146 = vmul.f32 %v1716, %v2127
    %v2147 = vmul.f32 %v1717, %v2127
    %v2148 = vmul.f32 %v1718, %v2127
    %v2149 = vmul.f32 %v1719, %v2127
    %v2150 = vmul.f32 %v1720, %v2127
    %v2151 = vmul.f32 %v1721, %v2127
    %v2152 = vmul.f32 %v1722, %v2127
    %v2153 = vmul.f32 %v1723, %v2127
    %v2154 = vmul.f32 %v1724, %v2127
    %v2155 = vmul.f32 %v1725, %v2127
    %v2156 = vmul.f32 %v1726, %v2127
    %v2157 = vmul.f32 %v1727, %v2127
    %v2158 = vmul.f32 %v1728, %v2127
    %v2159 = vmul.f32 %v1729, %v2127
    %v2160 = vadd.f32 %v2091, %v2129
    %v2161 = vadd.f32 %v2092, %v2129
    %v2162 = vadd.f32 %v2093, %v2130
    %v2163 = vadd.f32 %v2094, %v2131
    %v2164 = vadd.f32 %v2095, %v2132
    %v2165 = vadd.f32 %v2096, %v2133
    %v2166 = vadd.f32 %v2097, %v2134
    %v2167 = vadd.f32 %v2098, %v2135
    %v2168 = vadd.f32 %v2099, %v2136
    %v2169 = vadd.f32 %v2100, %v2137
    %v2170 = vadd.f32 %v2101, %v2138
    %v2171 = vadd.f32 %v2102, %v2139
    %v2172 = vadd.f32 %v2103, %v2140
    %v2173 = vadd.f32 %v2104, %v2141
    %v2174 = vadd.f32 %v2105, %v2142
    %v2175 = vadd.f32 %v2106, %v2143
    %v2176 = vadd.f32 %v2107, %v2144
    %v2177 = vadd.f32 %v2108, %v2145
    %v2178 = vadd.f32 %v2109, %v2146
    %v2179 = vadd.f32 %v2110, %v2147
    %v2180 = vadd.f32 %v2111, %v2148
    %v2181 = vadd.f32 %v2112, %v2149
    %v2182 = vadd.f32 %v2113, %v2150
    %v2183 = vadd.f32 %v2114, %v2151
    %v2184 = vadd.f32 %v2115, %v2152
    %v2185 = vadd.f32 %v2116, %v2153
    %v2186 = vadd.f32 %v2117, %v2154
    %v2187 = vadd.f32 %v2118, %v2155
    %v2188 = vadd.f32 %v2119, %v2156
    %v2189 = vadd.f32 %v2120, %v2157
    %v2190 = vadd.f32 %v2121, %v2158
    %v2191 = vadd.f32 %v2122, %v2159
    %v2193 = vlaneseq
    %v2194 = vshrl.u32 %v2193, 7
    %v2195 = vsub.s32 0, %v2194
    %v2196 = vrot.slane %v1746, %v2195
    %v2198 = vmul.f32 %v1702, %v2196
    %v2199 = vmul.f32 %v1703, %v2196
    %v2200 = vmul.f32 %v1704, %v2196
    %v2201 = vmul.f32 %v1705, %v2196
    %v2202 = vmul.f32 %v1706, %v2196
    %v2203 = vmul.f32 %v1707, %v2196
    %v2204 = vmul.f32 %v1708, %v2196
    %v2205 = vmul.f32 %v1709, %v2196
    %v2206 = vmul.f32 %v1710, %v2196
    %v2207 = vmul.f32 %v1711, %v2196
    %v2208 = vmul.f32 %v1712, %v2196
    %v2209 = vmul.f32 %v1713, %v2196
    %v2210 = vmul.f32 %v1714, %v2196
    %v2211 = vmul.f32 %v1715, %v2196
    %v2212 = vmul.f32 %v1716, %v2196
    %v2213 = vmul.f32 %v1717, %v2196
    %v2214 = vmul.f32 %v1718, %v2196
    %v2215 = vmul.f32 %v1719, %v2196
    %v2216 = vmul.f32 %v1720, %v2196
    %v2217 = vmul.f32 %v1721, %v2196
    %v2218 = vmul.f32 %v1722, %v2196
    %v2219 = vmul.f32 %v1723, %v2196
    %v2220 = vmul.f32 %v1724, %v2196
    %v2221 = vmul.f32 %v1725, %v2196
    %v2222 = vmul.f32 %v1726, %v2196
    %v2223 = vmul.f32 %v1727, %v2196
    %v2224 = vmul.f32 %v1728, %v2196
    %v2225 = vmul.f32 %v1729, %v2196
    %v2226 = vmul.f32 %v1730, %v2196
    %v2227 = vmul.f32 %v1731, %v2196
    %v2228 = vmul.f32 %v2196, 0.0
    %v2229 = vadd.f32 %v2160, %v2198
    %v2230 = vadd.f32 %v2161, %v2199
    %v2231 = vadd.f32 %v2162, %v2200
    %v2232 = vadd.f32 %v2163, %v2201
    %v2233 = vadd.f32 %v2164, %v2202
    %v2234 = vadd.f32 %v2165, %v2203
    %v2235 = vadd.f32 %v2166, %v2204
    %v2236 = vadd.f32 %v2167, %v2205
    %v2237 = vadd.f32 %v2168, %v2206
    %v2238 = vadd.f32 %v2169, %v2207
    %v2239 = vadd.f32 %v2170, %v2208
    %v2240 = vadd.f32 %v2171, %v2209
    %v2241 = vadd.f32 %v2172, %v2210
    %v2242 = vadd.f32 %v2173, %v2211
    %v2243 = vadd.f32 %v2174, %v2212
    %v2244 = vadd.f32 %v2175, %v2213
    %v2245 = vadd.f32 %v2176, %v2214
    %v2246 = vadd.f32 %v2177, %v2215
    %v2247 = vadd.f32 %v2178, %v2216
    %v2248 = vadd.f32 %v2179, %v2217
    %v2249 = vadd.f32 %v2180, %v2218
    %v2250 = vadd.f32 %v2181, %v2219
    %v2251 = vadd.f32 %v2182, %v2220
    %v2252 = vadd.f32 %v2183, %v2221
    %v2253 = vadd.f32 %v2184, %v2222
    %v2254 = vadd.f32 %v2185, %v2223
    %v2255 = vadd.f32 %v2186, %v2224
    %v2256 = vadd.f32 %v2187, %v2225
    %v2257 = vadd.f32 %v2188, %v2226
    %v2258 = vadd.f32 %v2189, %v2227
    %v2259 = vadd.f32 %v2190, %v2228
    %v2260 = vadd.f32 %v2191, %v2228
    %v2261 = vrot.slane %v1700, 1
    %v2262 = vrot.slane %v1702, 1
    %v2263 = vrot.slane %v1704, 1
    %v2264 = vrot.slane %v1706, 1
    %v2265 = vrot.slane %v1708, 1
    %v2266 = vrot.slane %v1710, 1
    %v2267 = vrot.slane %v1712, 1
    %v2268 = vrot.slane %v1714, 1
    %v2269 = vrot.slane %v1716, 1
    %v2270 = vrot.slane %v1718, 1
    %v2271 = vrot.slane %v1720, 1
    %v2272 = vrot.slane %v1722, 1
    %v2273 = vrot.slane %v1724, 1
    %v2274 = vrot.slane %v1726, 1
    %v2275 = vrot.slane %v1728, 1
    %v2276 = vrot.slane %v1730, 1
    %v2277 = vrot.slane %v1701, 1
    %v2278 = vrot.slane %v1703, 1
    %v2279 = vrot.slane %v1705, 1
    %v2280 = vrot.slane %v1707, 1
    %v2281 = vrot.slane %v1709, 1
    %v2282 = vrot.slane %v1711, 1
    %v2283 = vrot.slane %v1713, 1
    %v2284 = vrot.slane %v1715, 1
    %v2285 = vrot.slane %v1717, 1
    %v2286 = vrot.slane %v1719, 1
    %v2287 = vrot.slane %v1721, 1
    %v2288 = vrot.slane %v1723, 1
    %v2289 = vrot.slane %v1725, 1
    %v2290 = vrot.slane %v1727, 1
    %v2291 = vrot.slane %v1729, 1
    %v2292 = vrot.slane %v1731, 1
    %v2293 = vsel %vm1076, %v2261, %v2277
    %v2294 = vsel %vm1076, %v2262, %v2278
    %v2295 = vsel %vm1076, %v2263, %v2279
    %v2296 = vsel %vm1076, %v2264, %v2280
    %v2297 = vsel %vm1076, %v2265, %v2281
    %v2298 = vsel %vm1076, %v2266, %v2282
    %v2299 = vsel %vm1076, %v2267, %v2283
    %v2300 = vsel %vm1076, %v2268, %v2284
    %v2301 = vsel %vm1076, %v2269, %v2285
    %v2302 = vsel %vm1076, %v2270, %v2286
    %v2303 = vsel %vm1076, %v2271, %v2287
    %v2304 = vsel %vm1076, %v2272, %v2288
    %v2305 = vsel %vm1076, %v2273, %v2289
    %v2306 = vsel %vm1076, %v2274, %v2290
    %v2307 = vsel %vm1076, %v2275, %v2291
    %v2308 = vsel %vm1076, %v2276, %v2292
    %v2309 = vsel %vm1076, %v2277, %v2261
    %v2310 = vsel %vm1076, %v2278, %v2262
    %v2311 = vsel %vm1076, %v2279, %v2263
    %v2312 = vsel %vm1076, %v2280, %v2264
    %v2313 = vsel %vm1076, %v2281, %v2265
    %v2314 = vsel %vm1076, %v2282, %v2266
    %v2315 = vsel %vm1076, %v2283, %v2267
    %v2316 = vsel %vm1076, %v2284, %v2268
    %v2317 = vsel %vm1076, %v2285, %v2269
    %v2318 = vsel %vm1076, %v2286, %v2270
    %v2319 = vsel %vm1076, %v2287, %v2271
    %v2320 = vsel %vm1076, %v2288, %v2272
    %v2321 = vsel %vm1076, %v2289, %v2273
    %v2322 = vsel %vm1076, %v2290, %v2274
    %v2323 = vsel %vm1076, %v2291, %v2275
    %v2324 = vsel %vm1076, %v2292, %v2276
    %v2325 = vmul.f32 %v2293, %v200
    %v2326 = vmul.f32 %v2309, %v201
    %v2327 = vmul.f32 %v2294, %v200
    %v2328 = vmul.f32 %v2310, %v201
    %v2329 = vmul.f32 %v2295, %v200
    %v2330 = vmul.f32 %v2311, %v201
    %v2331 = vmul.f32 %v2296, %v200
    %v2332 = vmul.f32 %v2312, %v201
    %v2333 = vmul.f32 %v2297, %v200
    %v2334 = vmul.f32 %v2313, %v201
    %v2335 = vmul.f32 %v2298, %v200
    %v2336 = vmul.f32 %v2314, %v201
    %v2337 = vmul.f32 %v2299, %v200
    %v2338 = vmul.f32 %v2315, %v201
    %v2339 = vmul.f32 %v2300, %v200
    %v2340 = vmul.f32 %v2316, %v201
    %v2341 = vmul.f32 %v2301, %v200
    %v2342 = vmul.f32 %v2317, %v201
    %v2343 = vmul.f32 %v2302, %v200
    %v2344 = vmul.f32 %v2318, %v201
    %v2345 = vmul.f32 %v2303, %v200
    %v2346 = vmul.f32 %v2319, %v201
    %v2347 = vmul.f32 %v2304, %v200
    %v2348 = vmul.f32 %v2320, %v201
    %v2349 = vmul.f32 %v2305, %v200
    %v2350 = vmul.f32 %v2321, %v201
    %v2351 = vmul.f32 %v2306, %v200
    %v2352 = vmul.f32 %v2322, %v201
    %v2353 = vmul.f32 %v2307, %v200
    %v2354 = vmul.f32 %v2323, %v201
    %v2355 = vmul.f32 %v2308, %v200
    %v2356 = vmul.f32 %v2324, %v201
    %v2358 = vlaneseq
    %v2359 = vshrl.u32 %v2358, 7
    %v2360 = vsub.s32 0, %v2359
    %v2361 = vrot.slane %v1742, %v2360
    %v2363 = vmul.f32 %v2325, %v2361
    %v2364 = vmul.f32 %v2326, %v2361
    %v2365 = vmul.f32 %v2327, %v2361
    %v2366 = vmul.f32 %v2328, %v2361
    %v2367 = vmul.f32 %v2329, %v2361
    %v2368 = vmul.f32 %v2330, %v2361
    %v2369 = vmul.f32 %v2331, %v2361
    %v2370 = vmul.f32 %v2332, %v2361
    %v2371 = vmul.f32 %v2333, %v2361
    %v2372 = vmul.f32 %v2334, %v2361
    %v2373 = vmul.f32 %v2335, %v2361
    %v2374 = vmul.f32 %v2336, %v2361
    %v2375 = vmul.f32 %v2337, %v2361
    %v2376 = vmul.f32 %v2338, %v2361
    %v2377 = vmul.f32 %v2339, %v2361
    %v2378 = vmul.f32 %v2340, %v2361
    %v2379 = vmul.f32 %v2341, %v2361
    %v2380 = vmul.f32 %v2342, %v2361
    %v2381 = vmul.f32 %v2343, %v2361
    %v2382 = vmul.f32 %v2344, %v2361
    %v2383 = vmul.f32 %v2345, %v2361
    %v2384 = vmul.f32 %v2346, %v2361
    %v2385 = vmul.f32 %v2347, %v2361
    %v2386 = vmul.f32 %v2348, %v2361
    %v2387 = vmul.f32 %v2349, %v2361
    %v2388 = vmul.f32 %v2350, %v2361
    %v2389 = vmul.f32 %v2351, %v2361
    %v2390 = vmul.f32 %v2352, %v2361
    %v2391 = vmul.f32 %v2353, %v2361
    %v2392 = vmul.f32 %v2354, %v2361
    %v2393 = vmul.f32 %v2355, %v2361
    %v2394 = vmul.f32 %v2356, %v2361
    %v2395 = vadd.f32 %v2229, %v2363
    %v2396 = vadd.f32 %v2230, %v2364
    %v2397 = vadd.f32 %v2231, %v2365
    %v2398 = vadd.f32 %v2232, %v2366
    %v2399 = vadd.f32 %v2233, %v2367
    %v2400 = vadd.f32 %v2234, %v2368
    %v2401 = vadd.f32 %v2235, %v2369
    %v2402 = vadd.f32 %v2236, %v2370
    %v2403 = vadd.f32 %v2237, %v2371
    %v2404 = vadd.f32 %v2238, %v2372
    %v2405 = vadd.f32 %v2239, %v2373
    %v2406 = vadd.f32 %v2240, %v2374
    %v2407 = vadd.f32 %v2241, %v2375
    %v2408 = vadd.f32 %v2242, %v2376
    %v2409 = vadd.f32 %v2243, %v2377
    %v2410 = vadd.f32 %v2244, %v2378
    %v2411 = vadd.f32 %v2245, %v2379
    %v2412 = vadd.f32 %v2246, %v2380
    %v2413 = vadd.f32 %v2247, %v2381
    %v2414 = vadd.f32 %v2248, %v2382
    %v2415 = vadd.f32 %v2249, %v2383
    %v2416 = vadd.f32 %v2250, %v2384
    %v2417 = vadd.f32 %v2251, %v2385
    %v2418 = vadd.f32 %v2252, %v2386
    %v2419 = vadd.f32 %v2253, %v2387
    %v2420 = vadd.f32 %v2254, %v2388
    %v2421 = vadd.f32 %v2255, %v2389
    %v2422 = vadd.f32 %v2256, %v2390
    %v2423 = vadd.f32 %v2257, %v2391
    %v2424 = vadd.f32 %v2258, %v2392
    %v2425 = vadd.f32 %v2259, %v2393
    %v2426 = vadd.f32 %v2260, %v2394
    %v2428 = vlaneseq
    %v2429 = vshrl.u32 %v2428, 7
    %v2430 = vsub.s32 0, %v2429
    %v2431 = vrot.slane %v1736, %v2430
    %v2433 = vmul.f32 %v2431, 0.0
    %v2434 = vmul.f32 %v2325, %v2431
    %v2435 = vmul.f32 %v2326, %v2431
    %v2436 = vmul.f32 %v2327, %v2431
    %v2437 = vmul.f32 %v2328, %v2431
    %v2438 = vmul.f32 %v2329, %v2431
    %v2439 = vmul.f32 %v2330, %v2431
    %v2440 = vmul.f32 %v2331, %v2431
    %v2441 = vmul.f32 %v2332, %v2431
    %v2442 = vmul.f32 %v2333, %v2431
    %v2443 = vmul.f32 %v2334, %v2431
    %v2444 = vmul.f32 %v2335, %v2431
    %v2445 = vmul.f32 %v2336, %v2431
    %v2446 = vmul.f32 %v2337, %v2431
    %v2447 = vmul.f32 %v2338, %v2431
    %v2448 = vmul.f32 %v2339, %v2431
    %v2449 = vmul.f32 %v2340, %v2431
    %v2450 = vmul.f32 %v2341, %v2431
    %v2451 = vmul.f32 %v2342, %v2431
    %v2452 = vmul.f32 %v2343, %v2431
    %v2453 = vmul.f32 %v2344, %v2431
    %v2454 = vmul.f32 %v2345, %v2431
    %v2455 = vmul.f32 %v2346, %v2431
    %v2456 = vmul.f32 %v2347, %v2431
    %v2457 = vmul.f32 %v2348, %v2431
    %v2458 = vmul.f32 %v2349, %v2431
    %v2459 = vmul.f32 %v2350, %v2431
    %v2460 = vmul.f32 %v2351, %v2431
    %v2461 = vmul.f32 %v2352, %v2431
    %v2462 = vmul.f32 %v2353, %v2431
    %v2463 = vmul.f32 %v2354, %v2431
    %v2464 = vadd.f32 %v2395, %v2433
    %v2465 = vadd.f32 %v2396, %v2433
    %v2466 = vadd.f32 %v2397, %v2434
    %v2467 = vadd.f32 %v2398, %v2435
    %v2468 = vadd.f32 %v2399, %v2436
    %v2469 = vadd.f32 %v2400, %v2437
    %v2470 = vadd.f32 %v2401, %v2438
    %v2471 = vadd.f32 %v2402, %v2439
    %v2472 = vadd.f32 %v2403, %v2440
    %v2473 = vadd.f32 %v2404, %v2441
    %v2474 = vadd.f32 %v2405, %v2442
    %v2475 = vadd.f32 %v2406, %v2443
    %v2476 = vadd.f32 %v2407, %v2444
    %v2477 = vadd.f32 %v2408, %v2445
    %v2478 = vadd.f32 %v2409, %v2446
    %v2479 = vadd.f32 %v2410, %v2447
    %v2480 = vadd.f32 %v2411, %v2448
    %v2481 = vadd.f32 %v2412, %v2449
    %v2482 = vadd.f32 %v2413, %v2450
    %v2483 = vadd.f32 %v2414, %v2451
    %v2484 = vadd.f32 %v2415, %v2452
    %v2485 = vadd.f32 %v2416, %v2453
    %v2486 = vadd.f32 %v2417, %v2454
    %v2487 = vadd.f32 %v2418, %v2455
    %v2488 = vadd.f32 %v2419, %v2456
    %v2489 = vadd.f32 %v2420, %v2457
    %v2490 = vadd.f32 %v2421, %v2458
    %v2491 = vadd.f32 %v2422, %v2459
    %v2492 = vadd.f32 %v2423, %v2460
    %v2493 = vadd.f32 %v2424, %v2461
    %v2494 = vadd.f32 %v2425, %v2462
    %v2495 = vadd.f32 %v2426, %v2463
    %v2497 = vlaneseq
    %v2498 = vshrl.u32 %v2497, 7
    %v2499 = vsub.s32 0, %v2498
    %v2500 = vrot.slane %v1748, %v2499
    %v2502 = vmul.f32 %v2327, %v2500
    %v2503 = vmul.f32 %v2328, %v2500
    %v2504 = vmul.f32 %v2329, %v2500
    %v2505 = vmul.f32 %v2330, %v2500
    %v2506 = vmul.f32 %v2331, %v2500
    %v2507 = vmul.f32 %v2332, %v2500
    %v2508 = vmul.f32 %v2333, %v2500
    %v2509 = vmul.f32 %v2334, %v2500
    %v2510 = vmul.f32 %v2335, %v2500
    %v2511 = vmul.f32 %v2336, %v2500
    %v2512 = vmul.f32 %v2337, %v2500
    %v2513 = vmul.f32 %v2338, %v2500
    %v2514 = vmul.f32 %v2339, %v2500
    %v2515 = vmul.f32 %v2340, %v2500
    %v2516 = vmul.f32 %v2341, %v2500
    %v2517 = vmul.f32 %v2342, %v2500
    %v2518 = vmul.f32 %v2343, %v2500
    %v2519 = vmul.f32 %v2344, %v2500
    %v2520 = vmul.f32 %v2345, %v2500
    %v2521 = vmul.f32 %v2346, %v2500
    %v2522 = vmul.f32 %v2347, %v2500
    %v2523 = vmul.f32 %v2348, %v2500
    %v2524 = vmul.f32 %v2349, %v2500
    %v2525 = vmul.f32 %v2350, %v2500
    %v2526 = vmul.f32 %v2351, %v2500
    %v2527 = vmul.f32 %v2352, %v2500
    %v2528 = vmul.f32 %v2353, %v2500
    %v2529 = vmul.f32 %v2354, %v2500
    %v2530 = vmul.f32 %v2355, %v2500
    %v2531 = vmul.f32 %v2356, %v2500
    %v2532 = vmul.f32 %v2500, 0.0
    %v2533 = vadd.f32 %v2464, %v2502
    %v2534 = vadd.f32 %v2465, %v2503
    %v2535 = vadd.f32 %v2466, %v2504
    %v2536 = vadd.f32 %v2467, %v2505
    %v2537 = vadd.f32 %v2468, %v2506
    %v2538 = vadd.f32 %v2469, %v2507
    %v2539 = vadd.f32 %v2470, %v2508
    %v2540 = vadd.f32 %v2471, %v2509
    %v2541 = vadd.f32 %v2472, %v2510
    %v2542 = vadd.f32 %v2473, %v2511
    %v2543 = vadd.f32 %v2474, %v2512
    %v2544 = vadd.f32 %v2475, %v2513
    %v2545 = vadd.f32 %v2476, %v2514
    %v2546 = vadd.f32 %v2477, %v2515
    %v2547 = vadd.f32 %v2478, %v2516
    %v2548 = vadd.f32 %v2479, %v2517
    %v2549 = vadd.f32 %v2480, %v2518
    %v2550 = vadd.f32 %v2481, %v2519
    %v2551 = vadd.f32 %v2482, %v2520
    %v2552 = vadd.f32 %v2483, %v2521
    %v2553 = vadd.f32 %v2484, %v2522
    %v2554 = vadd.f32 %v2485, %v2523
    %v2555 = vadd.f32 %v2486, %v2524
    %v2556 = vadd.f32 %v2487, %v2525
    %v2557 = vadd.f32 %v2488, %v2526
    %v2558 = vadd.f32 %v2489, %v2527
    %v2559 = vadd.f32 %v2490, %v2528
    %v2560 = vadd.f32 %v2491, %v2529
    %v2561 = vadd.f32 %v2492, %v2530
    %v2562 = vadd.f32 %v2493, %v2531
    %v2563 = vadd.f32 %v2494, %v2532
    %v2564 = vadd.f32 %v2495, %v2532
    %v2565 = vld [vmem:[#allocation14] sm:$0x1]
    %v2567 = vlaneseq
    %v2568 = vshrl.u32 %v2567, 7
    %v2569 = vsub.s32 0, %v2568
    %v2570 = vrot.slane %v2565, %v2569
    %v2572 = vadd.f32 %v2533, %v2570
    %v2573 = vadd.f32 %v2534, %v2570
    %v2574 = vadd.f32 %v2535, %v2570
    %v2575 = vadd.f32 %v2536, %v2570
    %v2576 = vadd.f32 %v2537, %v2570
    %v2577 = vadd.f32 %v2538, %v2570
    %v2578 = vadd.f32 %v2539, %v2570
    %v2579 = vadd.f32 %v2540, %v2570
    %v2580 = vadd.f32 %v2541, %v2570
    %v2581 = vadd.f32 %v2542, %v2570
    %v2582 = vadd.f32 %v2543, %v2570
    %v2583 = vadd.f32 %v2544, %v2570
    %v2584 = vadd.f32 %v2545, %v2570
    %v2585 = vadd.f32 %v2546, %v2570
    %v2586 = vadd.f32 %v2547, %v2570
    %v2587 = vadd.f32 %v2548, %v2570
    %v2588 = vadd.f32 %v2549, %v2570
    %v2589 = vadd.f32 %v2550, %v2570
    %v2590 = vadd.f32 %v2551, %v2570
    %v2591 = vadd.f32 %v2552, %v2570
    %v2592 = vadd.f32 %v2553, %v2570
    %v2593 = vadd.f32 %v2554, %v2570
    %v2594 = vadd.f32 %v2555, %v2570
    %v2595 = vadd.f32 %v2556, %v2570
    %v2596 = vadd.f32 %v2557, %v2570
    %v2597 = vadd.f32 %v2558, %v2570
    %v2598 = vadd.f32 %v2559, %v2570
    %v2599 = vadd.f32 %v2560, %v2570
    %v2600 = vadd.f32 %v2561, %v2570
    %v2601 = vadd.f32 %v2562, %v2570
    %v2602 = vadd.f32 %v2563, %v2570
    %v2603 = vadd.f32 %v2564, %v2570
    %v2604 = vmax.f32 %v2572, 0.0
    %v2605 = vmax.f32 %v2573, 0.0
    %v2606 = vmax.f32 %v2574, 0.0
    %v2607 = vmax.f32 %v2575, 0.0
    %v2608 = vmax.f32 %v2576, 0.0
    %v2609 = vmax.f32 %v2577, 0.0
    %v2610 = vmax.f32 %v2578, 0.0
    %v2611 = vmax.f32 %v2579, 0.0
    %v2612 = vmax.f32 %v2580, 0.0
    %v2613 = vmax.f32 %v2581, 0.0
    %v2614 = vmax.f32 %v2582, 0.0
    %v2615 = vmax.f32 %v2583, 0.0
    %v2616 = vmax.f32 %v2584, 0.0
    %v2617 = vmax.f32 %v2585, 0.0
    %v2618 = vmax.f32 %v2586, 0.0
    %v2619 = vmax.f32 %v2587, 0.0
    %v2620 = vmax.f32 %v2588, 0.0
    %v2621 = vmax.f32 %v2589, 0.0
    %v2622 = vmax.f32 %v2590, 0.0
    %v2623 = vmax.f32 %v2591, 0.0
    %v2624 = vmax.f32 %v2592, 0.0
    %v2625 = vmax.f32 %v2593, 0.0
    %v2626 = vmax.f32 %v2594, 0.0
    %v2627 = vmax.f32 %v2595, 0.0
    %v2628 = vmax.f32 %v2596, 0.0
    %v2629 = vmax.f32 %v2597, 0.0
    %v2630 = vmax.f32 %v2598, 0.0
    %v2631 = vmax.f32 %v2599, 0.0
    %v2632 = vmax.f32 %v2600, 0.0
    %v2633 = vmax.f32 %v2601, 0.0
    %v2634 = vmax.f32 %v2602, 0.0
    %v2635 = vmax.f32 %v2603, 0.0
    %v2636 = vadd.f32 %v1700, %v2604
    %v2637 = vadd.f32 %v1701, %v2605
    %v2638 = vadd.f32 %v1702, %v2606
    %v2639 = vadd.f32 %v1703, %v2607
    %v2640 = vadd.f32 %v1704, %v2608
    %v2641 = vadd.f32 %v1705, %v2609
    %v2642 = vadd.f32 %v1706, %v2610
    %v2643 = vadd.f32 %v1707, %v2611
    %v2644 = vadd.f32 %v1708, %v2612
    %v2645 = vadd.f32 %v1709, %v2613
    %v2646 = vadd.f32 %v1710, %v2614
    %v2647 = vadd.f32 %v1711, %v2615
    %v2648 = vadd.f32 %v1712, %v2616
    %v2649 = vadd.f32 %v1713, %v2617
    %v2650 = vadd.f32 %v1714, %v2618
    %v2651 = vadd.f32 %v1715, %v2619
    %v2652 = vadd.f32 %v1716, %v2620
    %v2653 = vadd.f32 %v1717, %v2621
    %v2654 = vadd.f32 %v1718, %v2622
    %v2655 = vadd.f32 %v1719, %v2623
    %v2656 = vadd.f32 %v1720, %v2624
    %v2657 = vadd.f32 %v1721, %v2625
    %v2658 = vadd.f32 %v1722, %v2626
    %v2659 = vadd.f32 %v1723, %v2627
    %v2660 = vadd.f32 %v1724, %v2628
    %v2661 = vadd.f32 %v1725, %v2629
    %v2662 = vadd.f32 %v1726, %v2630
    %v2663 = vadd.f32 %v1727, %v2631
    %v2664 = vadd.f32 %v1728, %v2632
    %v2665 = vadd.f32 %v1729, %v2633
    %v2666 = vadd.f32 %v1730, %v2634
    %v2667 = vadd.f32 %v1731, %v2635
    %v2668 = vld [vmem:[#allocation16] sm:$0xff]
    %v2669 = vld [vmem:[#allocation16 + $0x8] sm:$0xff]
    %v2670 = vld [vmem:[#allocation16 + $0x10] sm:$0xff]
    %v2671 = vld [vmem:[#allocation16 + $0x18] sm:$0xff]
    %v2672 = vld [vmem:[#allocation16 + $0x20] sm:$0xff]
    %v2673 = vld [vmem:[#allocation16 + $0x28] sm:$0xff]
    %v2674 = vld [vmem:[#allocation16 + $0x30] sm:$0xff]
    %v2675 = vld [vmem:[#allocation16 + $0x38] sm:$0xff]
    %v2676 = vld [vmem:[#allocation16 + $0x40] sm:$0xff]
    %v2677 = vld [vmem:[#allocation16 + $0x48] sm:$0xff]
    %v2678 = vld [vmem:[#allocation16 + $0x50] sm:$0xff]
    %v2679 = vld [vmem:[#allocation16 + $0x58] sm:$0xff]
    %v2680 = vld [vmem:[#allocation16 + $0x60] sm:$0xff]
    %v2681 = vld [vmem:[#allocation16 + $0x68] sm:$0xff]
    %v2682 = vld [vmem:[#allocation16 + $0x70] sm:$0xff]
    %v2683 = vld [vmem:[#allocation16 + $0x78] sm:$0xff]
    %v2684 = vld [vmem:[#allocation17] sm:$0x1]
    %v2686 = vlaneseq
    %v2687 = vshrl.u32 %v2686, 7
    %v2688 = vsub.s32 0, %v2687
    %v2689 = vrot.slane %v2684, %v2688
    %2691 = vmatprep.subr.mxu0 0.0
    %2692 = vmatpush1.msra.mxu0 %v2683
    %2693 = vmatprep.subr.mxu0 0.0
    %2694 = vmatpush1.msra.mxu0 %v2682
    %2695 = vmatprep.subr.mxu0 0.0
    %2696 = vmatpush1.msra.mxu0 %v2681
    %2697 = vmatprep.subr.mxu0 0.0
    %2698 = vmatpush1.msra.mxu0 %v2680
    %2699 = vmatprep.subr.mxu0 0.0
    %2700 = vmatpush1.msra.mxu0 %v2679
    %2701 = vmatprep.subr.mxu0 0.0
    %2702 = vmatpush1.msra.mxu0 %v2678
    %2703 = vmatprep.subr.mxu0 0.0
    %2704 = vmatpush1.msra.mxu0 %v2677
    %2705 = vmatprep.subr.mxu0 0.0
    %2706 = vmatpush1.msra.mxu0 %v2676
    %2707 = vmatprep.subr.mxu0 0.0
    %2708 = vmatpush1.msra.mxu0 %v2675
    %2709 = vmatprep.subr.mxu0 0.0
    %2710 = vmatpush1.msra.mxu0 %v2674
    %2711 = vmatprep.subr.mxu0 0.0
    %2712 = vmatpush1.msra.mxu0 %v2673
    %2713 = vmatprep.subr.mxu0 0.0
    %2714 = vmatpush1.msra.mxu0 %v2672
    %2715 = vmatprep.subr.mxu0 0.0
    %2716 = vmatpush1.msra.mxu0 %v2671
    %2717 = vmatprep.subr.mxu0 0.0
    %2718 = vmatpush1.msra.mxu0 %v2670
    %2719 = vmatprep.subr.mxu0 0.0
    %2720 = vmatpush1.msra.mxu0 %v2669
    %2721 = vmatprep.subr.mxu0 0.0
    %2722 = vmatpush1.msra.mxu0 %v2668
    %2723 = vmatprep.subr.mxu0 0.0
    %2724 = vmatpush2.msra.mxu0 0.0
    %2725 = vmatprep.subr.mxu0 0.0
    %2726 = vmatpush2.msra.mxu0 0.0
    %2727 = vmatprep.subr.mxu0 0.0
    %2728 = vmatpush2.msra.mxu0 0.0
    %2729 = vmatprep.subr.mxu0 0.0
    %2730 = vmatpush2.msra.mxu0 0.0
    %2731 = vmatprep.subr.mxu0 0.0
    %2732 = vmatpush2.msra.mxu0 0.0
    %2733 = vmatprep.subr.mxu0 0.0
    %2734 = vmatpush2.msra.mxu0 0.0
    %2735 = vmatprep.subr.mxu0 0.0
    %2736 = vmatpush2.msra.mxu0 0.0
    %2737 = vmatprep.subr.mxu0 0.0
    %2738 = vmatpush2.msra.mxu0 0.0
    %2739 = vmatprep.subr.mxu0 0.0
    %2740 = vmatpush2.msra.mxu0 0.0
    %2741 = vmatprep.subr.mxu0 0.0
    %2742 = vmatpush2.msra.mxu0 0.0
    %2743 = vmatprep.subr.mxu0 0.0
    %2744 = vmatpush2.msra.mxu0 0.0
    %2745 = vmatprep.subr.mxu0 0.0
    %2746 = vmatpush2.msra.mxu0 0.0
    %2747 = vmatprep.subr.mxu0 0.0
    %2748 = vmatpush2.msra.mxu0 0.0
    %2749 = vmatprep.subr.mxu0 0.0
    %2750 = vmatpush2.msra.mxu0 0.0
    %2751 = vmatprep.subr.mxu0 0.0
    %2752 = vmatpush2.msra.mxu0 0.0
    %2753 = vmatprep.subr.mxu0 0.0
    %2754 = vmatpush2.msra.mxu0 0.0
    %2755 = vmatprep.mubr.f32.mxu0 0.0
    %2756 = vmatmul.mubr.f32.gmra.mxu0 %v2636
    %v2757 = vpop.f32.mrf.mxu0
    %v2758 = vadd.f32 %v2689, %v2757
    %v2759 = vpop.f32.mrf.mxu0
    %2760 = vmatprep.mubr.f32.mxu0 0.0
    %2761 = vmatmul.mubr.f32.gmra.mxu0 %v2637
    %v2762 = vpop.f32.mrf.mxu0
    %v2763 = vadd.f32 %v2689, %v2762
    %v2764 = vpop.f32.mrf.mxu0
    %2765 = vmatprep.mubr.f32.mxu0 0.0
    %2766 = vmatmul.mubr.f32.gmra.mxu0 %v2638
    %v2767 = vpop.f32.mrf.mxu0
    %v2768 = vadd.f32 %v2689, %v2767
    %v2769 = vpop.f32.mrf.mxu0
    %2770 = vmatprep.mubr.f32.mxu0 0.0
    %2771 = vmatmul.mubr.f32.gmra.mxu0 %v2639
    %v2772 = vpop.f32.mrf.mxu0
    %v2773 = vadd.f32 %v2689, %v2772
    %v2774 = vpop.f32.mrf.mxu0
    %2775 = vmatprep.mubr.f32.mxu0 0.0
    %2776 = vmatmul.mubr.f32.gmra.mxu0 %v2640
    %v2777 = vpop.f32.mrf.mxu0
    %v2778 = vadd.f32 %v2689, %v2777
    %v2779 = vpop.f32.mrf.mxu0
    %2780 = vmatprep.mubr.f32.mxu0 0.0
    %2781 = vmatmul.mubr.f32.gmra.mxu0 %v2641
    %v2782 = vpop.f32.mrf.mxu0
    %v2783 = vadd.f32 %v2689, %v2782
    %v2784 = vpop.f32.mrf.mxu0
    %2785 = vmatprep.mubr.f32.mxu0 0.0
    %2786 = vmatmul.mubr.f32.gmra.mxu0 %v2642
    %v2787 = vpop.f32.mrf.mxu0
    %v2788 = vadd.f32 %v2689, %v2787
    %v2789 = vpop.f32.mrf.mxu0
    %2790 = vmatprep.mubr.f32.mxu0 0.0
    %2791 = vmatmul.mubr.f32.gmra.mxu0 %v2643
    %v2792 = vpop.f32.mrf.mxu0
    %v2793 = vadd.f32 %v2689, %v2792
    %v2794 = vpop.f32.mrf.mxu0
    %2795 = vmatprep.mubr.f32.mxu0 0.0
    %2796 = vmatmul.mubr.f32.gmra.mxu0 %v2644
    %v2797 = vpop.f32.mrf.mxu0
    %v2798 = vadd.f32 %v2689, %v2797
    %v2799 = vpop.f32.mrf.mxu0
    %2800 = vmatprep.mubr.f32.mxu0 0.0
    %2801 = vmatmul.mubr.f32.gmra.mxu0 %v2645
    %v2802 = vpop.f32.mrf.mxu0
    %v2803 = vadd.f32 %v2689, %v2802
    %v2804 = vpop.f32.mrf.mxu0
    %2805 = vmatprep.mubr.f32.mxu0 0.0
    %2806 = vmatmul.mubr.f32.gmra.mxu0 %v2646
    %v2807 = vpop.f32.mrf.mxu0
    %v2808 = vadd.f32 %v2689, %v2807
    %v2809 = vpop.f32.mrf.mxu0
    %2810 = vmatprep.mubr.f32.mxu0 0.0
    %2811 = vmatmul.mubr.f32.gmra.mxu0 %v2647
    %v2812 = vpop.f32.mrf.mxu0
    %v2813 = vadd.f32 %v2689, %v2812
    %v2814 = vpop.f32.mrf.mxu0
    %2815 = vmatprep.mubr.f32.mxu0 0.0
    %2816 = vmatmul.mubr.f32.gmra.mxu0 %v2648
    %v2817 = vpop.f32.mrf.mxu0
    %v2818 = vadd.f32 %v2689, %v2817
    %v2819 = vpop.f32.mrf.mxu0
    %2820 = vmatprep.mubr.f32.mxu0 0.0
    %2821 = vmatmul.mubr.f32.gmra.mxu0 %v2649
    %v2822 = vpop.f32.mrf.mxu0
    %v2823 = vadd.f32 %v2689, %v2822
    %v2824 = vpop.f32.mrf.mxu0
    %2825 = vmatprep.mubr.f32.mxu0 0.0
    %2826 = vmatmul.mubr.f32.gmra.mxu0 %v2650
    %v2827 = vpop.f32.mrf.mxu0
    %v2828 = vadd.f32 %v2689, %v2827
    %v2829 = vpop.f32.mrf.mxu0
    %2830 = vmatprep.mubr.f32.mxu0 0.0
    %2831 = vmatmul.mubr.f32.gmra.mxu0 %v2651
    %v2832 = vpop.f32.mrf.mxu0
    %v2833 = vadd.f32 %v2689, %v2832
    %v2834 = vpop.f32.mrf.mxu0
    %2835 = vmatprep.mubr.f32.mxu0 0.0
    %2836 = vmatmul.mubr.f32.gmra.mxu0 %v2652
    %v2837 = vpop.f32.mrf.mxu0
    %v2838 = vadd.f32 %v2689, %v2837
    %v2839 = vpop.f32.mrf.mxu0
    %2840 = vmatprep.mubr.f32.mxu0 0.0
    %2841 = vmatmul.mubr.f32.gmra.mxu0 %v2653
    %v2842 = vpop.f32.mrf.mxu0
    %v2843 = vadd.f32 %v2689, %v2842
    %v2844 = vpop.f32.mrf.mxu0
    %2845 = vmatprep.mubr.f32.mxu0 0.0
    %2846 = vmatmul.mubr.f32.gmra.mxu0 %v2654
    %v2847 = vpop.f32.mrf.mxu0
    %v2848 = vadd.f32 %v2689, %v2847
    %v2849 = vpop.f32.mrf.mxu0
    %2850 = vmatprep.mubr.f32.mxu0 0.0
    %2851 = vmatmul.mubr.f32.gmra.mxu0 %v2655
    %v2852 = vpop.f32.mrf.mxu0
    %v2853 = vadd.f32 %v2689, %v2852
    %v2854 = vpop.f32.mrf.mxu0
    %2855 = vmatprep.mubr.f32.mxu0 0.0
    %2856 = vmatmul.mubr.f32.gmra.mxu0 %v2656
    %v2857 = vpop.f32.mrf.mxu0
    %v2858 = vadd.f32 %v2689, %v2857
    %v2859 = vpop.f32.mrf.mxu0
    %2860 = vmatprep.mubr.f32.mxu0 0.0
    %2861 = vmatmul.mubr.f32.gmra.mxu0 %v2657
    %v2862 = vpop.f32.mrf.mxu0
    %v2863 = vadd.f32 %v2689, %v2862
    %v2864 = vpop.f32.mrf.mxu0
    %2865 = vmatprep.mubr.f32.mxu0 0.0
    %2866 = vmatmul.mubr.f32.gmra.mxu0 %v2658
    %v2867 = vpop.f32.mrf.mxu0
    %v2868 = vadd.f32 %v2689, %v2867
    %v2869 = vpop.f32.mrf.mxu0
    %2870 = vmatprep.mubr.f32.mxu0 0.0
    %2871 = vmatmul.mubr.f32.gmra.mxu0 %v2659
    %v2872 = vpop.f32.mrf.mxu0
    %v2873 = vadd.f32 %v2689, %v2872
    %v2874 = vpop.f32.mrf.mxu0
    %2875 = vmatprep.mubr.f32.mxu0 0.0
    %2876 = vmatmul.mubr.f32.gmra.mxu0 %v2660
    %v2877 = vpop.f32.mrf.mxu0
    %v2878 = vadd.f32 %v2689, %v2877
    %v2879 = vpop.f32.mrf.mxu0
    %2880 = vmatprep.mubr.f32.mxu0 0.0
    %2881 = vmatmul.mubr.f32.gmra.mxu0 %v2661
    %v2882 = vpop.f32.mrf.mxu0
    %v2883 = vadd.f32 %v2689, %v2882
    %v2884 = vpop.f32.mrf.mxu0
    %2885 = vmatprep.mubr.f32.mxu0 0.0
    %2886 = vmatmul.mubr.f32.gmra.mxu0 %v2662
    %v2887 = vpop.f32.mrf.mxu0
    %v2888 = vadd.f32 %v2689, %v2887
    %v2889 = vpop.f32.mrf.mxu0
    %2890 = vmatprep.mubr.f32.mxu0 0.0
    %2891 = vmatmul.mubr.f32.gmra.mxu0 %v2663
    %v2892 = vpop.f32.mrf.mxu0
    %v2893 = vadd.f32 %v2689, %v2892
    %v2894 = vpop.f32.mrf.mxu0
    %2895 = vmatprep.mubr.f32.mxu0 0.0
    %2896 = vmatmul.mubr.f32.gmra.mxu0 %v2664
    %v2897 = vpop.f32.mrf.mxu0
    %v2898 = vadd.f32 %v2689, %v2897
    %v2899 = vpop.f32.mrf.mxu0
    %2900 = vmatprep.mubr.f32.mxu0 0.0
    %2901 = vmatmul.mubr.f32.gmra.mxu0 %v2665
    %v2902 = vpop.f32.mrf.mxu0
    %v2903 = vadd.f32 %v2689, %v2902
    %v2904 = vpop.f32.mrf.mxu0
    %2905 = vmatprep.mubr.f32.mxu0 0.0
    %2906 = vmatmul.mubr.f32.gmra.mxu0 %v2666
    %v2907 = vpop.f32.mrf.mxu0
    %v2908 = vadd.f32 %v2689, %v2907
    %v2909 = vpop.f32.mrf.mxu0
    %2910 = vmatprep.mubr.f32.mxu0 0.0
    %2911 = vmatmul.mubr.f32.gmra.mxu0 %v2667
    %v2912 = vpop.f32.mrf.mxu0
    %v2913 = vadd.f32 %v2689, %v2912
    %v2914 = vpop.f32.mrf.mxu0
    %2915 = vdwg.mxu0
    %v2916 = vsub.f32 0.0, %v2758
    %v2917 = vsub.f32 0.0, %v2763
    %v2918 = vsub.f32 0.0, %v2768
    %v2919 = vsub.f32 0.0, %v2773
    %v2920 = vsub.f32 0.0, %v2778
    %v2921 = vsub.f32 0.0, %v2783
    %v2922 = vsub.f32 0.0, %v2788
    %v2923 = vsub.f32 0.0, %v2793
    %v2924 = vsub.f32 0.0, %v2798
    %v2925 = vsub.f32 0.0, %v2803
    %v2926 = vsub.f32 0.0, %v2808
    %v2927 = vsub.f32 0.0, %v2813
    %v2928 = vsub.f32 0.0, %v2818
    %v2929 = vsub.f32 0.0, %v2823
    %v2930 = vsub.f32 0.0, %v2828
    %v2931 = vsub.f32 0.0, %v2833
    %v2932 = vsub.f32 0.0, %v2838
    %v2933 = vsub.f32 0.0, %v2843
    %v2934 = vsub.f32 0.0, %v2848
    %v2935 = vsub.f32 0.0, %v2853
    %v2936 = vsub.f32 0.0, %v2858
    %v2937 = vsub.f32 0.0, %v2863
    %v2938 = vsub.f32 0.0, %v2868
    %v2939 = vsub.f32 0.0, %v2873
    %v2940 = vsub.f32 0.0, %v2878
    %v2941 = vsub.f32 0.0, %v2883
    %v2942 = vsub.f32 0.0, %v2888
    %v2943 = vsub.f32 0.0, %v2893
    %v2944 = vsub.f32 0.0, %v2898
    %v2945 = vsub.f32 0.0, %v2903
    %v2946 = vsub.f32 0.0, %v2908
    %v2947 = vsub.f32 0.0, %v2913
    %v2948 = vmul.f32 %v2916, 1.442695
    %v2949 = vpow.pop %v2948
    %v2950 = vmul.f32 %v2917, 1.442695
    %v2951 = vpow.pop %v2950
    %v2952 = vmul.f32 %v2918, 1.442695
    %v2953 = vpow.pop %v2952
    %v2954 = vmul.f32 %v2919, 1.442695
    %v2955 = vpow.pop %v2954
    %v2956 = vmul.f32 %v2920, 1.442695
    %v2957 = vpow.pop %v2956
    %v2958 = vmul.f32 %v2921, 1.442695
    %v2959 = vpow.pop %v2958
    %v2960 = vmul.f32 %v2922, 1.442695
    %v2961 = vpow.pop %v2960
    %v2962 = vmul.f32 %v2923, 1.442695
    %v2963 = vpow.pop %v2962
    %v2964 = vmul.f32 %v2924, 1.442695
    %v2965 = vpow.pop %v2964
    %v2966 = vmul.f32 %v2925, 1.442695
    %v2967 = vpow.pop %v2966
    %v2968 = vmul.f32 %v2926, 1.442695
    %v2969 = vpow.pop %v2968
    %v2970 = vmul.f32 %v2927, 1.442695
    %v2971 = vpow.pop %v2970
    %v2972 = vmul.f32 %v2928, 1.442695
    %v2973 = vpow.pop %v2972
    %v2974 = vmul.f32 %v2929, 1.442695
    %v2975 = vpow.pop %v2974
    %v2976 = vmul.f32 %v2930, 1.442695
    %v2977 = vpow.pop %v2976
    %v2978 = vmul.f32 %v2931, 1.442695
    %v2979 = vpow.pop %v2978
    %v2980 = vmul.f32 %v2932, 1.442695
    %v2981 = vpow.pop %v2980
    %v2982 = vmul.f32 %v2933, 1.442695
    %v2983 = vpow.pop %v2982
    %v2984 = vmul.f32 %v2934, 1.442695
    %v2985 = vpow.pop %v2984
    %v2986 = vmul.f32 %v2935, 1.442695
    %v2987 = vpow.pop %v2986
    %v2988 = vmul.f32 %v2936, 1.442695
    %v2989 = vpow.pop %v2988
    %v2990 = vmul.f32 %v2937, 1.442695
    %v2991 = vpow.pop %v2990
    %v2992 = vmul.f32 %v2938, 1.442695
    %v2993 = vpow.pop %v2992
    %v2994 = vmul.f32 %v2939, 1.442695
    %v2995 = vpow.pop %v2994
    %v2996 = vmul.f32 %v2940, 1.442695
    %v2997 = vpow.pop %v2996
    %v2998 = vmul.f32 %v2941, 1.442695
    %v2999 = vpow.pop %v2998
    %v3000 = vmul.f32 %v2942, 1.442695
    %v3001 = vpow.pop %v3000
    %v3002 = vmul.f32 %v2943, 1.442695
    %v3003 = vpow.pop %v3002
    %v3004 = vmul.f32 %v2944, 1.442695
    %v3005 = vpow.pop %v3004
    %v3006 = vmul.f32 %v2945, 1.442695
    %v3007 = vpow.pop %v3006
    %v3008 = vmul.f32 %v2946, 1.442695
    %v3009 = vpow.pop %v3008
    %v3010 = vmul.f32 %v2947, 1.442695
    %v3011 = vpow.pop %v3010
    %v3012 = vadd.f32 %v2949, 1.0
    %v3013 = vadd.f32 %v2951, 1.0
    %v3014 = vadd.f32 %v2953, 1.0
    %v3015 = vadd.f32 %v2955, 1.0
    %v3016 = vadd.f32 %v2957, 1.0
    %v3017 = vadd.f32 %v2959, 1.0
    %v3018 = vadd.f32 %v2961, 1.0
    %v3019 = vadd.f32 %v2963, 1.0
    %v3020 = vadd.f32 %v2965, 1.0
    %v3021 = vadd.f32 %v2967, 1.0
    %v3022 = vadd.f32 %v2969, 1.0
    %v3023 = vadd.f32 %v2971, 1.0
    %v3024 = vadd.f32 %v2973, 1.0
    %v3025 = vadd.f32 %v2975, 1.0
    %v3026 = vadd.f32 %v2977, 1.0
    %v3027 = vadd.f32 %v2979, 1.0
    %v3028 = vadd.f32 %v2981, 1.0
    %v3029 = vadd.f32 %v2983, 1.0
    %v3030 = vadd.f32 %v2985, 1.0
    %v3031 = vadd.f32 %v2987, 1.0
    %v3032 = vadd.f32 %v2989, 1.0
    %v3033 = vadd.f32 %v2991, 1.0
    %v3034 = vadd.f32 %v2993, 1.0
    %v3035 = vadd.f32 %v2995, 1.0
    %v3036 = vadd.f32 %v2997, 1.0
    %v3037 = vadd.f32 %v2999, 1.0
    %v3038 = vadd.f32 %v3001, 1.0
    %v3039 = vadd.f32 %v3003, 1.0
    %v3040 = vadd.f32 %v3005, 1.0
    %v3041 = vadd.f32 %v3007, 1.0
    %v3042 = vadd.f32 %v3009, 1.0
    %v3043 = vadd.f32 %v3011, 1.0
    %v3044 = vrcp.pop %v3012
    %v3045 = vrcp.pop %v3013
    %v3046 = vrcp.pop %v3014
    %v3047 = vrcp.pop %v3015
    %v3048 = vrcp.pop %v3016
    %v3049 = vrcp.pop %v3017
    %v3050 = vrcp.pop %v3018
    %v3051 = vrcp.pop %v3019
    %v3052 = vrcp.pop %v3020
    %v3053 = vrcp.pop %v3021
    %v3054 = vrcp.pop %v3022
    %v3055 = vrcp.pop %v3023
    %v3056 = vrcp.pop %v3024
    %v3057 = vrcp.pop %v3025
    %v3058 = vrcp.pop %v3026
    %v3059 = vrcp.pop %v3027
    %v3060 = vrcp.pop %v3028
    %v3061 = vrcp.pop %v3029
    %v3062 = vrcp.pop %v3030
    %v3063 = vrcp.pop %v3031
    %v3064 = vrcp.pop %v3032
    %v3065 = vrcp.pop %v3033
    %v3066 = vrcp.pop %v3034
    %v3067 = vrcp.pop %v3035
    %v3068 = vrcp.pop %v3036
    %v3069 = vrcp.pop %v3037
    %v3070 = vrcp.pop %v3038
    %v3071 = vrcp.pop %v3039
    %v3072 = vrcp.pop %v3040
    %v3073 = vrcp.pop %v3041
    %v3074 = vrcp.pop %v3042
    %v3075 = vrcp.pop %v3043
    %v3076 = vmul.f32 %v2758, %v3044
    %v3077 = vmul.f32 %v2763, %v3045
    %v3078 = vmul.f32 %v2768, %v3046
    %v3079 = vmul.f32 %v2773, %v3047
    %v3080 = vmul.f32 %v2778, %v3048
    %v3081 = vmul.f32 %v2783, %v3049
    %v3082 = vmul.f32 %v2788, %v3050
    %v3083 = vmul.f32 %v2793, %v3051
    %v3084 = vmul.f32 %v2798, %v3052
    %v3085 = vmul.f32 %v2803, %v3053
    %v3086 = vmul.f32 %v2808, %v3054
    %v3087 = vmul.f32 %v2813, %v3055
    %v3088 = vmul.f32 %v2818, %v3056
    %v3089 = vmul.f32 %v2823, %v3057
    %v3090 = vmul.f32 %v2828, %v3058
    %v3091 = vmul.f32 %v2833, %v3059
    %v3092 = vmul.f32 %v2838, %v3060
    %v3093 = vmul.f32 %v2843, %v3061
    %v3094 = vmul.f32 %v2848, %v3062
    %v3095 = vmul.f32 %v2853, %v3063
    %v3096 = vmul.f32 %v2858, %v3064
    %v3097 = vmul.f32 %v2863, %v3065
    %v3098 = vmul.f32 %v2868, %v3066
    %v3099 = vmul.f32 %v2873, %v3067
    %v3100 = vmul.f32 %v2878, %v3068
    %v3101 = vmul.f32 %v2883, %v3069
    %v3102 = vmul.f32 %v2888, %v3070
    %v3103 = vmul.f32 %v2893, %v3071
    %v3104 = vmul.f32 %v2898, %v3072
    %v3105 = vmul.f32 %v2903, %v3073
    %v3106 = vmul.f32 %v2908, %v3074
    %v3107 = vmul.f32 %v2913, %v3075
    %v3108 = vld [vmem:[%s11] sm:$0x1]
    %s3109 = scalar_lea.vmem %s11, 1
    %v3110 = vld [vmem:[%s3109] sm:$0x1]
    %s3111 = scalar_lea.vmem %s11, 2
    %v3112 = vld [vmem:[%s3111] sm:$0x1]
    %s3113 = scalar_lea.vmem %s11, 3
    %v3114 = vld [vmem:[%s3113] sm:$0x1]
    %s3115 = scalar_lea.vmem %s11, 4
    %v3116 = vld [vmem:[%s3115] sm:$0x1]
    %s3117 = scalar_lea.vmem %s11, 5
    %v3118 = vld [vmem:[%s3117] sm:$0x1]
    %s3119 = scalar_lea.vmem %s11, 6
    %v3120 = vld [vmem:[%s3119] sm:$0x1]
    %s3121 = scalar_lea.vmem %s11, 7
    %v3122 = vld [vmem:[%s3121] sm:$0x1]
    %s3123 = scalar_lea.vmem %s11, 8
    %v3124 = vld [vmem:[%s3123] sm:$0x1]
    %v3125 = vrot.slane %v3076, 7
    %v3126 = vrot.slane %v3078, 7
    %v3127 = vrot.slane %v3080, 7
    %v3128 = vrot.slane %v3082, 7
    %v3129 = vrot.slane %v3084, 7
    %v3130 = vrot.slane %v3086, 7
    %v3131 = vrot.slane %v3088, 7
    %v3132 = vrot.slane %v3090, 7
    %v3133 = vrot.slane %v3092, 7
    %v3134 = vrot.slane %v3094, 7
    %v3135 = vrot.slane %v3096, 7
    %v3136 = vrot.slane %v3098, 7
    %v3137 = vrot.slane %v3100, 7
    %v3138 = vrot.slane %v3102, 7
    %v3139 = vrot.slane %v3104, 7
    %v3140 = vrot.slane %v3106, 7
    %v3141 = vrot.slane %v3077, 7
    %v3142 = vrot.slane %v3079, 7
    %v3143 = vrot.slane %v3081, 7
    %v3144 = vrot.slane %v3083, 7
    %v3145 = vrot.slane %v3085, 7
    %v3146 = vrot.slane %v3087, 7
    %v3147 = vrot.slane %v3089, 7
    %v3148 = vrot.slane %v3091, 7
    %v3149 = vrot.slane %v3093, 7
    %v3150 = vrot.slane %v3095, 7
    %v3151 = vrot.slane %v3097, 7
    %v3152 = vrot.slane %v3099, 7
    %v3153 = vrot.slane %v3101, 7
    %v3154 = vrot.slane %v3103, 7
    %v3155 = vrot.slane %v3105, 7
    %v3156 = vrot.slane %v3107, 7
    %v3157 = vsel %vm563, %v3125, %v3141
    %v3158 = vsel %vm563, %v3126, %v3142
    %v3159 = vsel %vm563, %v3127, %v3143
    %v3160 = vsel %vm563, %v3128, %v3144
    %v3161 = vsel %vm563, %v3129, %v3145
    %v3162 = vsel %vm563, %v3130, %v3146
    %v3163 = vsel %vm563, %v3131, %v3147
    %v3164 = vsel %vm563, %v3132, %v3148
    %v3165 = vsel %vm563, %v3133, %v3149
    %v3166 = vsel %vm563, %v3134, %v3150
    %v3167 = vsel %vm563, %v3135, %v3151
    %v3168 = vsel %vm563, %v3136, %v3152
    %v3169 = vsel %vm563, %v3137, %v3153
    %v3170 = vsel %vm563, %v3138, %v3154
    %v3171 = vsel %vm563, %v3139, %v3155
    %v3172 = vsel %vm563, %v3140, %v3156
    %v3173 = vsel %vm563, %v3141, %v3125
    %v3174 = vsel %vm563, %v3142, %v3126
    %v3175 = vsel %vm563, %v3143, %v3127
    %v3176 = vsel %vm563, %v3144, %v3128
    %v3177 = vsel %vm563, %v3145, %v3129
    %v3178 = vsel %vm563, %v3146, %v3130
    %v3179 = vsel %vm563, %v3147, %v3131
    %v3180 = vsel %vm563, %v3148, %v3132
    %v3181 = vsel %vm563, %v3149, %v3133
    %v3182 = vsel %vm563, %v3150, %v3134
    %v3183 = vsel %vm563, %v3151, %v3135
    %v3184 = vsel %vm563, %v3152, %v3136
    %v3185 = vsel %vm563, %v3153, %v3137
    %v3186 = vsel %vm563, %v3154, %v3138
    %v3187 = vsel %vm563, %v3155, %v3139
    %v3188 = vsel %vm563, %v3156, %v3140
    %v3189 = vmul.f32 %v3173, %v194
    %v3190 = vmul.f32 %v3157, %v195
    %v3191 = vmul.f32 %v3174, %v194
    %v3192 = vmul.f32 %v3158, %v195
    %v3193 = vmul.f32 %v3175, %v194
    %v3194 = vmul.f32 %v3159, %v195
    %v3195 = vmul.f32 %v3176, %v194
    %v3196 = vmul.f32 %v3160, %v195
    %v3197 = vmul.f32 %v3177, %v194
    %v3198 = vmul.f32 %v3161, %v195
    %v3199 = vmul.f32 %v3178, %v194
    %v3200 = vmul.f32 %v3162, %v195
    %v3201 = vmul.f32 %v3179, %v194
    %v3202 = vmul.f32 %v3163, %v195
    %v3203 = vmul.f32 %v3180, %v194
    %v3204 = vmul.f32 %v3164, %v195
    %v3205 = vmul.f32 %v3181, %v194
    %v3206 = vmul.f32 %v3165, %v195
    %v3207 = vmul.f32 %v3182, %v194
    %v3208 = vmul.f32 %v3166, %v195
    %v3209 = vmul.f32 %v3183, %v194
    %v3210 = vmul.f32 %v3167, %v195
    %v3211 = vmul.f32 %v3184, %v194
    %v3212 = vmul.f32 %v3168, %v195
    %v3213 = vmul.f32 %v3185, %v194
    %v3214 = vmul.f32 %v3169, %v195
    %v3215 = vmul.f32 %v3186, %v194
    %v3216 = vmul.f32 %v3170, %v195
    %v3217 = vmul.f32 %v3187, %v194
    %v3218 = vmul.f32 %v3171, %v195
    %v3219 = vmul.f32 %v3188, %v194
    %v3220 = vmul.f32 %v3172, %v195
    %v3222 = vlaneseq
    %v3223 = vshrl.u32 %v3222, 7
    %v3224 = vsub.s32 0, %v3223
    %v3225 = vrot.slane %v3114, %v3224
    %v3227 = vmul.f32 %v3189, %v3225
    %v3228 = vmul.f32 %v3190, %v3225
    %v3229 = vmul.f32 %v3191, %v3225
    %v3230 = vmul.f32 %v3192, %v3225
    %v3231 = vmul.f32 %v3193, %v3225
    %v3232 = vmul.f32 %v3194, %v3225
    %v3233 = vmul.f32 %v3195, %v3225
    %v3234 = vmul.f32 %v3196, %v3225
    %v3235 = vmul.f32 %v3197, %v3225
    %v3236 = vmul.f32 %v3198, %v3225
    %v3237 = vmul.f32 %v3199, %v3225
    %v3238 = vmul.f32 %v3200, %v3225
    %v3239 = vmul.f32 %v3201, %v3225
    %v3240 = vmul.f32 %v3202, %v3225
    %v3241 = vmul.f32 %v3203, %v3225
    %v3242 = vmul.f32 %v3204, %v3225
    %v3243 = vmul.f32 %v3205, %v3225
    %v3244 = vmul.f32 %v3206, %v3225
    %v3245 = vmul.f32 %v3207, %v3225
    %v3246 = vmul.f32 %v3208, %v3225
    %v3247 = vmul.f32 %v3209, %v3225
    %v3248 = vmul.f32 %v3210, %v3225
    %v3249 = vmul.f32 %v3211, %v3225
    %v3250 = vmul.f32 %v3212, %v3225
    %v3251 = vmul.f32 %v3213, %v3225
    %v3252 = vmul.f32 %v3214, %v3225
    %v3253 = vmul.f32 %v3215, %v3225
    %v3254 = vmul.f32 %v3216, %v3225
    %v3255 = vmul.f32 %v3217, %v3225
    %v3256 = vmul.f32 %v3218, %v3225
    %v3257 = vmul.f32 %v3219, %v3225
    %v3258 = vmul.f32 %v3220, %v3225
    %v3259 = vadd.f32 %v3227, 0.0
    %v3260 = vadd.f32 %v3228, 0.0
    %v3261 = vadd.f32 %v3229, 0.0
    %v3262 = vadd.f32 %v3230, 0.0
    %v3263 = vadd.f32 %v3231, 0.0
    %v3264 = vadd.f32 %v3232, 0.0
    %v3265 = vadd.f32 %v3233, 0.0
    %v3266 = vadd.f32 %v3234, 0.0
    %v3267 = vadd.f32 %v3235, 0.0
    %v3268 = vadd.f32 %v3236, 0.0
    %v3269 = vadd.f32 %v3237, 0.0
    %v3270 = vadd.f32 %v3238, 0.0
    %v3271 = vadd.f32 %v3239, 0.0
    %v3272 = vadd.f32 %v3240, 0.0
    %v3273 = vadd.f32 %v3241, 0.0
    %v3274 = vadd.f32 %v3242, 0.0
    %v3275 = vadd.f32 %v3243, 0.0
    %v3276 = vadd.f32 %v3244, 0.0
    %v3277 = vadd.f32 %v3245, 0.0
    %v3278 = vadd.f32 %v3246, 0.0
    %v3279 = vadd.f32 %v3247, 0.0
    %v3280 = vadd.f32 %v3248, 0.0
    %v3281 = vadd.f32 %v3249, 0.0
    %v3282 = vadd.f32 %v3250, 0.0
    %v3283 = vadd.f32 %v3251, 0.0
    %v3284 = vadd.f32 %v3252, 0.0
    %v3285 = vadd.f32 %v3253, 0.0
    %v3286 = vadd.f32 %v3254, 0.0
    %v3287 = vadd.f32 %v3255, 0.0
    %v3288 = vadd.f32 %v3256, 0.0
    %v3289 = vadd.f32 %v3257, 0.0
    %v3290 = vadd.f32 %v3258, 0.0
    %v3292 = vlaneseq
    %v3293 = vshrl.u32 %v3292, 7
    %v3294 = vsub.s32 0, %v3293
    %v3295 = vrot.slane %v3108, %v3294
    %v3297 = vmul.f32 %v3295, 0.0
    %v3298 = vmul.f32 %v3189, %v3295
    %v3299 = vmul.f32 %v3190, %v3295
    %v3300 = vmul.f32 %v3191, %v3295
    %v3301 = vmul.f32 %v3192, %v3295
    %v3302 = vmul.f32 %v3193, %v3295
    %v3303 = vmul.f32 %v3194, %v3295
    %v3304 = vmul.f32 %v3195, %v3295
    %v3305 = vmul.f32 %v3196, %v3295
    %v3306 = vmul.f32 %v3197, %v3295
    %v3307 = vmul.f32 %v3198, %v3295
    %v3308 = vmul.f32 %v3199, %v3295
    %v3309 = vmul.f32 %v3200, %v3295
    %v3310 = vmul.f32 %v3201, %v3295
    %v3311 = vmul.f32 %v3202, %v3295
    %v3312 = vmul.f32 %v3203, %v3295
    %v3313 = vmul.f32 %v3204, %v3295
    %v3314 = vmul.f32 %v3205, %v3295
    %v3315 = vmul.f32 %v3206, %v3295
    %v3316 = vmul.f32 %v3207, %v3295
    %v3317 = vmul.f32 %v3208, %v3295
    %v3318 = vmul.f32 %v3209, %v3295
    %v3319 = vmul.f32 %v3210, %v3295
    %v3320 = vmul.f32 %v3211, %v3295
    %v3321 = vmul.f32 %v3212, %v3295
    %v3322 = vmul.f32 %v3213, %v3295
    %v3323 = vmul.f32 %v3214, %v3295
    %v3324 = vmul.f32 %v3215, %v3295
    %v3325 = vmul.f32 %v3216, %v3295
    %v3326 = vmul.f32 %v3217, %v3295
    %v3327 = vmul.f32 %v3218, %v3295
    %v3328 = vadd.f32 %v3259, %v3297
    %v3329 = vadd.f32 %v3260, %v3297
    %v3330 = vadd.f32 %v3261, %v3298
    %v3331 = vadd.f32 %v3262, %v3299
    %v3332 = vadd.f32 %v3263, %v3300
    %v3333 = vadd.f32 %v3264, %v3301
    %v3334 = vadd.f32 %v3265, %v3302
    %v3335 = vadd.f32 %v3266, %v3303
    %v3336 = vadd.f32 %v3267, %v3304
    %v3337 = vadd.f32 %v3268, %v3305
    %v3338 = vadd.f32 %v3269, %v3306
    %v3339 = vadd.f32 %v3270, %v3307
    %v3340 = vadd.f32 %v3271, %v3308
    %v3341 = vadd.f32 %v3272, %v3309
    %v3342 = vadd.f32 %v3273, %v3310
    %v3343 = vadd.f32 %v3274, %v3311
    %v3344 = vadd.f32 %v3275, %v3312
    %v3345 = vadd.f32 %v3276, %v3313
    %v3346 = vadd.f32 %v3277, %v3314
    %v3347 = vadd.f32 %v3278, %v3315
    %v3348 = vadd.f32 %v3279, %v3316
    %v3349 = vadd.f32 %v3280, %v3317
    %v3350 = vadd.f32 %v3281, %v3318
    %v3351 = vadd.f32 %v3282, %v3319
    %v3352 = vadd.f32 %v3283, %v3320
    %v3353 = vadd.f32 %v3284, %v3321
    %v3354 = vadd.f32 %v3285, %v3322
    %v3355 = vadd.f32 %v3286, %v3323
    %v3356 = vadd.f32 %v3287, %v3324
    %v3357 = vadd.f32 %v3288, %v3325
    %v3358 = vadd.f32 %v3289, %v3326
    %v3359 = vadd.f32 %v3290, %v3327
    %v3361 = vlaneseq
    %v3362 = vshrl.u32 %v3361, 7
    %v3363 = vsub.s32 0, %v3362
    %v3364 = vrot.slane %v3120, %v3363
    %v3366 = vmul.f32 %v3191, %v3364
    %v3367 = vmul.f32 %v3192, %v3364
    %v3368 = vmul.f32 %v3193, %v3364
    %v3369 = vmul.f32 %v3194, %v3364
    %v3370 = vmul.f32 %v3195, %v3364
    %v3371 = vmul.f32 %v3196, %v3364
    %v3372 = vmul.f32 %v3197, %v3364
    %v3373 = vmul.f32 %v3198, %v3364
    %v3374 = vmul.f32 %v3199, %v3364
    %v3375 = vmul.f32 %v3200, %v3364
    %v3376 = vmul.f32 %v3201, %v3364
    %v3377 = vmul.f32 %v3202, %v3364
    %v3378 = vmul.f32 %v3203, %v3364
    %v3379 = vmul.f32 %v3204, %v3364
    %v3380 = vmul.f32 %v3205, %v3364
    %v3381 = vmul.f32 %v3206, %v3364
    %v3382 = vmul.f32 %v3207, %v3364
    %v3383 = vmul.f32 %v3208, %v3364
    %v3384 = vmul.f32 %v3209, %v3364
    %v3385 = vmul.f32 %v3210, %v3364
    %v3386 = vmul.f32 %v3211, %v3364
    %v3387 = vmul.f32 %v3212, %v3364
    %v3388 = vmul.f32 %v3213, %v3364
    %v3389 = vmul.f32 %v3214, %v3364
    %v3390 = vmul.f32 %v3215, %v3364
    %v3391 = vmul.f32 %v3216, %v3364
    %v3392 = vmul.f32 %v3217, %v3364
    %v3393 = vmul.f32 %v3218, %v3364
    %v3394 = vmul.f32 %v3219, %v3364
    %v3395 = vmul.f32 %v3220, %v3364
    %v3396 = vmul.f32 %v3364, 0.0
    %v3397 = vadd.f32 %v3328, %v3366
    %v3398 = vadd.f32 %v3329, %v3367
    %v3399 = vadd.f32 %v3330, %v3368
    %v3400 = vadd.f32 %v3331, %v3369
    %v3401 = vadd.f32 %v3332, %v3370
    %v3402 = vadd.f32 %v3333, %v3371
    %v3403 = vadd.f32 %v3334, %v3372
    %v3404 = vadd.f32 %v3335, %v3373
    %v3405 = vadd.f32 %v3336, %v3374
    %v3406 = vadd.f32 %v3337, %v3375
    %v3407 = vadd.f32 %v3338, %v3376
    %v3408 = vadd.f32 %v3339, %v3377
    %v3409 = vadd.f32 %v3340, %v3378
    %v3410 = vadd.f32 %v3341, %v3379
    %v3411 = vadd.f32 %v3342, %v3380
    %v3412 = vadd.f32 %v3343, %v3381
    %v3413 = vadd.f32 %v3344, %v3382
    %v3414 = vadd.f32 %v3345, %v3383
    %v3415 = vadd.f32 %v3346, %v3384
    %v3416 = vadd.f32 %v3347, %v3385
    %v3417 = vadd.f32 %v3348, %v3386
    %v3418 = vadd.f32 %v3349, %v3387
    %v3419 = vadd.f32 %v3350, %v3388
    %v3420 = vadd.f32 %v3351, %v3389
    %v3421 = vadd.f32 %v3352, %v3390
    %v3422 = vadd.f32 %v3353, %v3391
    %v3423 = vadd.f32 %v3354, %v3392
    %v3424 = vadd.f32 %v3355, %v3393
    %v3425 = vadd.f32 %v3356, %v3394
    %v3426 = vadd.f32 %v3357, %v3395
    %v3427 = vadd.f32 %v3358, %v3396
    %v3428 = vadd.f32 %v3359, %v3396
    %v3430 = vlaneseq
    %v3431 = vshrl.u32 %v3430, 7
    %v3432 = vsub.s32 0, %v3431
    %v3433 = vrot.slane %v3116, %v3432
    %v3435 = vmul.f32 %v3076, %v3433
    %v3436 = vmul.f32 %v3077, %v3433
    %v3437 = vmul.f32 %v3078, %v3433
    %v3438 = vmul.f32 %v3079, %v3433
    %v3439 = vmul.f32 %v3080, %v3433
    %v3440 = vmul.f32 %v3081, %v3433
    %v3441 = vmul.f32 %v3082, %v3433
    %v3442 = vmul.f32 %v3083, %v3433
    %v3443 = vmul.f32 %v3084, %v3433
    %v3444 = vmul.f32 %v3085, %v3433
    %v3445 = vmul.f32 %v3086, %v3433
    %v3446 = vmul.f32 %v3087, %v3433
    %v3447 = vmul.f32 %v3088, %v3433
    %v3448 = vmul.f32 %v3089, %v3433
    %v3449 = vmul.f32 %v3090, %v3433
    %v3450 = vmul.f32 %v3091, %v3433
    %v3451 = vmul.f32 %v3092, %v3433
    %v3452 = vmul.f32 %v3093, %v3433
    %v3453 = vmul.f32 %v3094, %v3433
    %v3454 = vmul.f32 %v3095, %v3433
    %v3455 = vmul.f32 %v3096, %v3433
    %v3456 = vmul.f32 %v3097, %v3433
    %v3457 = vmul.f32 %v3098, %v3433
    %v3458 = vmul.f32 %v3099, %v3433
    %v3459 = vmul.f32 %v3100, %v3433
    %v3460 = vmul.f32 %v3101, %v3433
    %v3461 = vmul.f32 %v3102, %v3433
    %v3462 = vmul.f32 %v3103, %v3433
    %v3463 = vmul.f32 %v3104, %v3433
    %v3464 = vmul.f32 %v3105, %v3433
    %v3465 = vmul.f32 %v3106, %v3433
    %v3466 = vmul.f32 %v3107, %v3433
    %v3467 = vadd.f32 %v3397, %v3435
    %v3468 = vadd.f32 %v3398, %v3436
    %v3469 = vadd.f32 %v3399, %v3437
    %v3470 = vadd.f32 %v3400, %v3438
    %v3471 = vadd.f32 %v3401, %v3439
    %v3472 = vadd.f32 %v3402, %v3440
    %v3473 = vadd.f32 %v3403, %v3441
    %v3474 = vadd.f32 %v3404, %v3442
    %v3475 = vadd.f32 %v3405, %v3443
    %v3476 = vadd.f32 %v3406, %v3444
    %v3477 = vadd.f32 %v3407, %v3445
    %v3478 = vadd.f32 %v3408, %v3446
    %v3479 = vadd.f32 %v3409, %v3447
    %v3480 = vadd.f32 %v3410, %v3448
    %v3481 = vadd.f32 %v3411, %v3449
    %v3482 = vadd.f32 %v3412, %v3450
    %v3483 = vadd.f32 %v3413, %v3451
    %v3484 = vadd.f32 %v3414, %v3452
    %v3485 = vadd.f32 %v3415, %v3453
    %v3486 = vadd.f32 %v3416, %v3454
    %v3487 = vadd.f32 %v3417, %v3455
    %v3488 = vadd.f32 %v3418, %v3456
    %v3489 = vadd.f32 %v3419, %v3457
    %v3490 = vadd.f32 %v3420, %v3458
    %v3491 = vadd.f32 %v3421, %v3459
    %v3492 = vadd.f32 %v3422, %v3460
    %v3493 = vadd.f32 %v3423, %v3461
    %v3494 = vadd.f32 %v3424, %v3462
    %v3495 = vadd.f32 %v3425, %v3463
    %v3496 = vadd.f32 %v3426, %v3464
    %v3497 = vadd.f32 %v3427, %v3465
    %v3498 = vadd.f32 %v3428, %v3466
    %v3500 = vlaneseq
    %v3501 = vshrl.u32 %v3500, 7
    %v3502 = vsub.s32 0, %v3501
    %v3503 = vrot.slane %v3110, %v3502
    %v3505 = vmul.f32 %v3503, 0.0
    %v3506 = vmul.f32 %v3076, %v3503
    %v3507 = vmul.f32 %v3077, %v3503
    %v3508 = vmul.f32 %v3078, %v3503
    %v3509 = vmul.f32 %v3079, %v3503
    %v3510 = vmul.f32 %v3080, %v3503
    %v3511 = vmul.f32 %v3081, %v3503
    %v3512 = vmul.f32 %v3082, %v3503
    %v3513 = vmul.f32 %v3083, %v3503
    %v3514 = vmul.f32 %v3084, %v3503
    %v3515 = vmul.f32 %v3085, %v3503
    %v3516 = vmul.f32 %v3086, %v3503
    %v3517 = vmul.f32 %v3087, %v3503
    %v3518 = vmul.f32 %v3088, %v3503
    %v3519 = vmul.f32 %v3089, %v3503
    %v3520 = vmul.f32 %v3090, %v3503
    %v3521 = vmul.f32 %v3091, %v3503
    %v3522 = vmul.f32 %v3092, %v3503
    %v3523 = vmul.f32 %v3093, %v3503
    %v3524 = vmul.f32 %v3094, %v3503
    %v3525 = vmul.f32 %v3095, %v3503
    %v3526 = vmul.f32 %v3096, %v3503
    %v3527 = vmul.f32 %v3097, %v3503
    %v3528 = vmul.f32 %v3098, %v3503
    %v3529 = vmul.f32 %v3099, %v3503
    %v3530 = vmul.f32 %v3100, %v3503
    %v3531 = vmul.f32 %v3101, %v3503
    %v3532 = vmul.f32 %v3102, %v3503
    %v3533 = vmul.f32 %v3103, %v3503
    %v3534 = vmul.f32 %v3104, %v3503
    %v3535 = vmul.f32 %v3105, %v3503
    %v3536 = vadd.f32 %v3467, %v3505
    %v3537 = vadd.f32 %v3468, %v3505
    %v3538 = vadd.f32 %v3469, %v3506
    %v3539 = vadd.f32 %v3470, %v3507
    %v3540 = vadd.f32 %v3471, %v3508
    %v3541 = vadd.f32 %v3472, %v3509
    %v3542 = vadd.f32 %v3473, %v3510
    %v3543 = vadd.f32 %v3474, %v3511
    %v3544 = vadd.f32 %v3475, %v3512
    %v3545 = vadd.f32 %v3476, %v3513
    %v3546 = vadd.f32 %v3477, %v3514
    %v3547 = vadd.f32 %v3478, %v3515
    %v3548 = vadd.f32 %v3479, %v3516
    %v3549 = vadd.f32 %v3480, %v3517
    %v3550 = vadd.f32 %v3481, %v3518
    %v3551 = vadd.f32 %v3482, %v3519
    %v3552 = vadd.f32 %v3483, %v3520
    %v3553 = vadd.f32 %v3484, %v3521
    %v3554 = vadd.f32 %v3485, %v3522
    %v3555 = vadd.f32 %v3486, %v3523
    %v3556 = vadd.f32 %v3487, %v3524
    %v3557 = vadd.f32 %v3488, %v3525
    %v3558 = vadd.f32 %v3489, %v3526
    %v3559 = vadd.f32 %v3490, %v3527
    %v3560 = vadd.f32 %v3491, %v3528
    %v3561 = vadd.f32 %v3492, %v3529
    %v3562 = vadd.f32 %v3493, %v3530
    %v3563 = vadd.f32 %v3494, %v3531
    %v3564 = vadd.f32 %v3495, %v3532
    %v3565 = vadd.f32 %v3496, %v3533
    %v3566 = vadd.f32 %v3497, %v3534
    %v3567 = vadd.f32 %v3498, %v3535
    %v3569 = vlaneseq
    %v3570 = vshrl.u32 %v3569, 7
    %v3571 = vsub.s32 0, %v3570
    %v3572 = vrot.slane %v3122, %v3571
    %v3574 = vmul.f32 %v3078, %v3572
    %v3575 = vmul.f32 %v3079, %v3572
    %v3576 = vmul.f32 %v3080, %v3572
    %v3577 = vmul.f32 %v3081, %v3572
    %v3578 = vmul.f32 %v3082, %v3572
    %v3579 = vmul.f32 %v3083, %v3572
    %v3580 = vmul.f32 %v3084, %v3572
    %v3581 = vmul.f32 %v3085, %v3572
    %v3582 = vmul.f32 %v3086, %v3572
    %v3583 = vmul.f32 %v3087, %v3572
    %v3584 = vmul.f32 %v3088, %v3572
    %v3585 = vmul.f32 %v3089, %v3572
    %v3586 = vmul.f32 %v3090, %v3572
    %v3587 = vmul.f32 %v3091, %v3572
    %v3588 = vmul.f32 %v3092, %v3572
    %v3589 = vmul.f32 %v3093, %v3572
    %v3590 = vmul.f32 %v3094, %v3572
    %v3591 = vmul.f32 %v3095, %v3572
    %v3592 = vmul.f32 %v3096, %v3572
    %v3593 = vmul.f32 %v3097, %v3572
    %v3594 = vmul.f32 %v3098, %v3572
    %v3595 = vmul.f32 %v3099, %v3572
    %v3596 = vmul.f32 %v3100, %v3572
    %v3597 = vmul.f32 %v3101, %v3572
    %v3598 = vmul.f32 %v3102, %v3572
    %v3599 = vmul.f32 %v3103, %v3572
    %v3600 = vmul.f32 %v3104, %v3572
    %v3601 = vmul.f32 %v3105, %v3572
    %v3602 = vmul.f32 %v3106, %v3572
    %v3603 = vmul.f32 %v3107, %v3572
    %v3604 = vmul.f32 %v3572, 0.0
    %v3605 = vadd.f32 %v3536, %v3574
    %v3606 = vadd.f32 %v3537, %v3575
    %v3607 = vadd.f32 %v3538, %v3576
    %v3608 = vadd.f32 %v3539, %v3577
    %v3609 = vadd.f32 %v3540, %v3578
    %v3610 = vadd.f32 %v3541, %v3579
    %v3611 = vadd.f32 %v3542, %v3580
    %v3612 = vadd.f32 %v3543, %v3581
    %v3613 = vadd.f32 %v3544, %v3582
    %v3614 = vadd.f32 %v3545, %v3583
    %v3615 = vadd.f32 %v3546, %v3584
    %v3616 = vadd.f32 %v3547, %v3585
    %v3617 = vadd.f32 %v3548, %v3586
    %v3618 = vadd.f32 %v3549, %v3587
    %v3619 = vadd.f32 %v3550, %v3588
    %v3620 = vadd.f32 %v3551, %v3589
    %v3621 = vadd.f32 %v3552, %v3590
    %v3622 = vadd.f32 %v3553, %v3591
    %v3623 = vadd.f32 %v3554, %v3592
    %v3624 = vadd.f32 %v3555, %v3593
    %v3625 = vadd.f32 %v3556, %v3594
    %v3626 = vadd.f32 %v3557, %v3595
    %v3627 = vadd.f32 %v3558, %v3596
    %v3628 = vadd.f32 %v3559, %v3597
    %v3629 = vadd.f32 %v3560, %v3598
    %v3630 = vadd.f32 %v3561, %v3599
    %v3631 = vadd.f32 %v3562, %v3600
    %v3632 = vadd.f32 %v3563, %v3601
    %v3633 = vadd.f32 %v3564, %v3602
    %v3634 = vadd.f32 %v3565, %v3603
    %v3635 = vadd.f32 %v3566, %v3604
    %v3636 = vadd.f32 %v3567, %v3604
    %v3637 = vrot.slane %v3076, 1
    %v3638 = vrot.slane %v3078, 1
    %v3639 = vrot.slane %v3080, 1
    %v3640 = vrot.slane %v3082, 1
    %v3641 = vrot.slane %v3084, 1
    %v3642 = vrot.slane %v3086, 1
    %v3643 = vrot.slane %v3088, 1
    %v3644 = vrot.slane %v3090, 1
    %v3645 = vrot.slane %v3092, 1
    %v3646 = vrot.slane %v3094, 1
    %v3647 = vrot.slane %v3096, 1
    %v3648 = vrot.slane %v3098, 1
    %v3649 = vrot.slane %v3100, 1
    %v3650 = vrot.slane %v3102, 1
    %v3651 = vrot.slane %v3104, 1
    %v3652 = vrot.slane %v3106, 1
    %v3653 = vrot.slane %v3077, 1
    %v3654 = vrot.slane %v3079, 1
    %v3655 = vrot.slane %v3081, 1
    %v3656 = vrot.slane %v3083, 1
    %v3657 = vrot.slane %v3085, 1
    %v3658 = vrot.slane %v3087, 1
    %v3659 = vrot.slane %v3089, 1
    %v3660 = vrot.slane %v3091, 1
    %v3661 = vrot.slane %v3093, 1
    %v3662 = vrot.slane %v3095, 1
    %v3663 = vrot.slane %v3097, 1
    %v3664 = vrot.slane %v3099, 1
    %v3665 = vrot.slane %v3101, 1
    %v3666 = vrot.slane %v3103, 1
    %v3667 = vrot.slane %v3105, 1
    %v3668 = vrot.slane %v3107, 1
    %v3669 = vsel %vm1076, %v3637, %v3653
    %v3670 = vsel %vm1076, %v3638, %v3654
    %v3671 = vsel %vm1076, %v3639, %v3655
    %v3672 = vsel %vm1076, %v3640, %v3656
    %v3673 = vsel %vm1076, %v3641, %v3657
    %v3674 = vsel %vm1076, %v3642, %v3658
    %v3675 = vsel %vm1076, %v3643, %v3659
    %v3676 = vsel %vm1076, %v3644, %v3660
    %v3677 = vsel %vm1076, %v3645, %v3661
    %v3678 = vsel %vm1076, %v3646, %v3662
    %v3679 = vsel %vm1076, %v3647, %v3663
    %v3680 = vsel %vm1076, %v3648, %v3664
    %v3681 = vsel %vm1076, %v3649, %v3665
    %v3682 = vsel %vm1076, %v3650, %v3666
    %v3683 = vsel %vm1076, %v3651, %v3667
    %v3684 = vsel %vm1076, %v3652, %v3668
    %v3685 = vsel %vm1076, %v3653, %v3637
    %v3686 = vsel %vm1076, %v3654, %v3638
    %v3687 = vsel %vm1076, %v3655, %v3639
    %v3688 = vsel %vm1076, %v3656, %v3640
    %v3689 = vsel %vm1076, %v3657, %v3641
    %v3690 = vsel %vm1076, %v3658, %v3642
    %v3691 = vsel %vm1076, %v3659, %v3643
    %v3692 = vsel %vm1076, %v3660, %v3644
    %v3693 = vsel %vm1076, %v3661, %v3645
    %v3694 = vsel %vm1076, %v3662, %v3646
    %v3695 = vsel %vm1076, %v3663, %v3647
    %v3696 = vsel %vm1076, %v3664, %v3648
    %v3697 = vsel %vm1076, %v3665, %v3649
    %v3698 = vsel %vm1076, %v3666, %v3650
    %v3699 = vsel %vm1076, %v3667, %v3651
    %v3700 = vsel %vm1076, %v3668, %v3652
    %v3701 = vmul.f32 %v3669, %v200
    %v3702 = vmul.f32 %v3685, %v201
    %v3703 = vmul.f32 %v3670, %v200
    %v3704 = vmul.f32 %v3686, %v201
    %v3705 = vmul.f32 %v3671, %v200
    %v3706 = vmul.f32 %v3687, %v201
    %v3707 = vmul.f32 %v3672, %v200
    %v3708 = vmul.f32 %v3688, %v201
    %v3709 = vmul.f32 %v3673, %v200
    %v3710 = vmul.f32 %v3689, %v201
    %v3711 = vmul.f32 %v3674, %v200
    %v3712 = vmul.f32 %v3690, %v201
    %v3713 = vmul.f32 %v3675, %v200
    %v3714 = vmul.f32 %v3691, %v201
    %v3715 = vmul.f32 %v3676, %v200
    %v3716 = vmul.f32 %v3692, %v201
    %v3717 = vmul.f32 %v3677, %v200
    %v3718 = vmul.f32 %v3693, %v201
    %v3719 = vmul.f32 %v3678, %v200
    %v3720 = vmul.f32 %v3694, %v201
    %v3721 = vmul.f32 %v3679, %v200
    %v3722 = vmul.f32 %v3695, %v201
    %v3723 = vmul.f32 %v3680, %v200
    %v3724 = vmul.f32 %v3696, %v201
    %v3725 = vmul.f32 %v3681, %v200
    %v3726 = vmul.f32 %v3697, %v201
    %v3727 = vmul.f32 %v3682, %v200
    %v3728 = vmul.f32 %v3698, %v201
    %v3729 = vmul.f32 %v3683, %v200
    %v3730 = vmul.f32 %v3699, %v201
    %v3731 = vmul.f32 %v3684, %v200
    %v3732 = vmul.f32 %v3700, %v201
    %v3734 = vlaneseq
    %v3735 = vshrl.u32 %v3734, 7
    %v3736 = vsub.s32 0, %v3735
    %v3737 = vrot.slane %v3118, %v3736
    %v3739 = vmul.f32 %v3701, %v3737
    %v3740 = vmul.f32 %v3702, %v3737
    %v3741 = vmul.f32 %v3703, %v3737
    %v3742 = vmul.f32 %v3704, %v3737
    %v3743 = vmul.f32 %v3705, %v3737
    %v3744 = vmul.f32 %v3706, %v3737
    %v3745 = vmul.f32 %v3707, %v3737
    %v3746 = vmul.f32 %v3708, %v3737
    %v3747 = vmul.f32 %v3709, %v3737
    %v3748 = vmul.f32 %v3710, %v3737
    %v3749 = vmul.f32 %v3711, %v3737
    %v3750 = vmul.f32 %v3712, %v3737
    %v3751 = vmul.f32 %v3713, %v3737
    %v3752 = vmul.f32 %v3714, %v3737
    %v3753 = vmul.f32 %v3715, %v3737
    %v3754 = vmul.f32 %v3716, %v3737
    %v3755 = vmul.f32 %v3717, %v3737
    %v3756 = vmul.f32 %v3718, %v3737
    %v3757 = vmul.f32 %v3719, %v3737
    %v3758 = vmul.f32 %v3720, %v3737
    %v3759 = vmul.f32 %v3721, %v3737
    %v3760 = vmul.f32 %v3722, %v3737
    %v3761 = vmul.f32 %v3723, %v3737
    %v3762 = vmul.f32 %v3724, %v3737
    %v3763 = vmul.f32 %v3725, %v3737
    %v3764 = vmul.f32 %v3726, %v3737
    %v3765 = vmul.f32 %v3727, %v3737
    %v3766 = vmul.f32 %v3728, %v3737
    %v3767 = vmul.f32 %v3729, %v3737
    %v3768 = vmul.f32 %v3730, %v3737
    %v3769 = vmul.f32 %v3731, %v3737
    %v3770 = vmul.f32 %v3732, %v3737
    %v3771 = vadd.f32 %v3605, %v3739
    %v3772 = vadd.f32 %v3606, %v3740
    %v3773 = vadd.f32 %v3607, %v3741
    %v3774 = vadd.f32 %v3608, %v3742
    %v3775 = vadd.f32 %v3609, %v3743
    %v3776 = vadd.f32 %v3610, %v3744
    %v3777 = vadd.f32 %v3611, %v3745
    %v3778 = vadd.f32 %v3612, %v3746
    %v3779 = vadd.f32 %v3613, %v3747
    %v3780 = vadd.f32 %v3614, %v3748
    %v3781 = vadd.f32 %v3615, %v3749
    %v3782 = vadd.f32 %v3616, %v3750
    %v3783 = vadd.f32 %v3617, %v3751
    %v3784 = vadd.f32 %v3618, %v3752
    %v3785 = vadd.f32 %v3619, %v3753
    %v3786 = vadd.f32 %v3620, %v3754
    %v3787 = vadd.f32 %v3621, %v3755
    %v3788 = vadd.f32 %v3622, %v3756
    %v3789 = vadd.f32 %v3623, %v3757
    %v3790 = vadd.f32 %v3624, %v3758
    %v3791 = vadd.f32 %v3625, %v3759
    %v3792 = vadd.f32 %v3626, %v3760
    %v3793 = vadd.f32 %v3627, %v3761
    %v3794 = vadd.f32 %v3628, %v3762
    %v3795 = vadd.f32 %v3629, %v3763
    %v3796 = vadd.f32 %v3630, %v3764
    %v3797 = vadd.f32 %v3631, %v3765
    %v3798 = vadd.f32 %v3632, %v3766
    %v3799 = vadd.f32 %v3633, %v3767
    %v3800 = vadd.f32 %v3634, %v3768
    %v3801 = vadd.f32 %v3635, %v3769
    %v3802 = vadd.f32 %v3636, %v3770
    %v3804 = vlaneseq
    %v3805 = vshrl.u32 %v3804, 7
    %v3806 = vsub.s32 0, %v3805
    %v3807 = vrot.slane %v3112, %v3806
    %v3809 = vmul.f32 %v3807, 0.0
    %v3810 = vmul.f32 %v3701, %v3807
    %v3811 = vmul.f32 %v3702, %v3807
    %v3812 = vmul.f32 %v3703, %v3807
    %v3813 = vmul.f32 %v3704, %v3807
    %v3814 = vmul.f32 %v3705, %v3807
    %v3815 = vmul.f32 %v3706, %v3807
    %v3816 = vmul.f32 %v3707, %v3807
    %v3817 = vmul.f32 %v3708, %v3807
    %v3818 = vmul.f32 %v3709, %v3807
    %v3819 = vmul.f32 %v3710, %v3807
    %v3820 = vmul.f32 %v3711, %v3807
    %v3821 = vmul.f32 %v3712, %v3807
    %v3822 = vmul.f32 %v3713, %v3807
    %v3823 = vmul.f32 %v3714, %v3807
    %v3824 = vmul.f32 %v3715, %v3807
    %v3825 = vmul.f32 %v3716, %v3807
    %v3826 = vmul.f32 %v3717, %v3807
    %v3827 = vmul.f32 %v3718, %v3807
    %v3828 = vmul.f32 %v3719, %v3807
    %v3829 = vmul.f32 %v3720, %v3807
    %v3830 = vmul.f32 %v3721, %v3807
    %v3831 = vmul.f32 %v3722, %v3807
    %v3832 = vmul.f32 %v3723, %v3807
    %v3833 = vmul.f32 %v3724, %v3807
    %v3834 = vmul.f32 %v3725, %v3807
    %v3835 = vmul.f32 %v3726, %v3807
    %v3836 = vmul.f32 %v3727, %v3807
    %v3837 = vmul.f32 %v3728, %v3807
    %v3838 = vmul.f32 %v3729, %v3807
    %v3839 = vmul.f32 %v3730, %v3807
    %v3840 = vadd.f32 %v3771, %v3809
    %v3841 = vadd.f32 %v3772, %v3809
    %v3842 = vadd.f32 %v3773, %v3810
    %v3843 = vadd.f32 %v3774, %v3811
    %v3844 = vadd.f32 %v3775, %v3812
    %v3845 = vadd.f32 %v3776, %v3813
    %v3846 = vadd.f32 %v3777, %v3814
    %v3847 = vadd.f32 %v3778, %v3815
    %v3848 = vadd.f32 %v3779, %v3816
    %v3849 = vadd.f32 %v3780, %v3817
    %v3850 = vadd.f32 %v3781, %v3818
    %v3851 = vadd.f32 %v3782, %v3819
    %v3852 = vadd.f32 %v3783, %v3820
    %v3853 = vadd.f32 %v3784, %v3821
    %v3854 = vadd.f32 %v3785, %v3822
    %v3855 = vadd.f32 %v3786, %v3823
    %v3856 = vadd.f32 %v3787, %v3824
    %v3857 = vadd.f32 %v3788, %v3825
    %v3858 = vadd.f32 %v3789, %v3826
    %v3859 = vadd.f32 %v3790, %v3827
    %v3860 = vadd.f32 %v3791, %v3828
    %v3861 = vadd.f32 %v3792, %v3829
    %v3862 = vadd.f32 %v3793, %v3830
    %v3863 = vadd.f32 %v3794, %v3831
    %v3864 = vadd.f32 %v3795, %v3832
    %v3865 = vadd.f32 %v3796, %v3833
    %v3866 = vadd.f32 %v3797, %v3834
    %v3867 = vadd.f32 %v3798, %v3835
    %v3868 = vadd.f32 %v3799, %v3836
    %v3869 = vadd.f32 %v3800, %v3837
    %v3870 = vadd.f32 %v3801, %v3838
    %v3871 = vadd.f32 %v3802, %v3839
    %v3873 = vlaneseq
    %v3874 = vshrl.u32 %v3873, 7
    %v3875 = vsub.s32 0, %v3874
    %v3876 = vrot.slane %v3124, %v3875
    %v3878 = vmul.f32 %v3703, %v3876
    %v3879 = vmul.f32 %v3704, %v3876
    %v3880 = vmul.f32 %v3705, %v3876
    %v3881 = vmul.f32 %v3706, %v3876
    %v3882 = vmul.f32 %v3707, %v3876
    %v3883 = vmul.f32 %v3708, %v3876
    %v3884 = vmul.f32 %v3709, %v3876
    %v3885 = vmul.f32 %v3710, %v3876
    %v3886 = vmul.f32 %v3711, %v3876
    %v3887 = vmul.f32 %v3712, %v3876
    %v3888 = vmul.f32 %v3713, %v3876
    %v3889 = vmul.f32 %v3714, %v3876
    %v3890 = vmul.f32 %v3715, %v3876
    %v3891 = vmul.f32 %v3716, %v3876
    %v3892 = vmul.f32 %v3717, %v3876
    %v3893 = vmul.f32 %v3718, %v3876
    %v3894 = vmul.f32 %v3719, %v3876
    %v3895 = vmul.f32 %v3720, %v3876
    %v3896 = vmul.f32 %v3721, %v3876
    %v3897 = vmul.f32 %v3722, %v3876
    %v3898 = vmul.f32 %v3723, %v3876
    %v3899 = vmul.f32 %v3724, %v3876
    %v3900 = vmul.f32 %v3725, %v3876
    %v3901 = vmul.f32 %v3726, %v3876
    %v3902 = vmul.f32 %v3727, %v3876
    %v3903 = vmul.f32 %v3728, %v3876
    %v3904 = vmul.f32 %v3729, %v3876
    %v3905 = vmul.f32 %v3730, %v3876
    %v3906 = vmul.f32 %v3731, %v3876
    %v3907 = vmul.f32 %v3732, %v3876
    %v3908 = vmul.f32 %v3876, 0.0
    %v3909 = vadd.f32 %v3840, %v3878
    %v3910 = vadd.f32 %v3841, %v3879
    %v3911 = vadd.f32 %v3842, %v3880
    %v3912 = vadd.f32 %v3843, %v3881
    %v3913 = vadd.f32 %v3844, %v3882
    %v3914 = vadd.f32 %v3845, %v3883
    %v3915 = vadd.f32 %v3846, %v3884
    %v3916 = vadd.f32 %v3847, %v3885
    %v3917 = vadd.f32 %v3848, %v3886
    %v3918 = vadd.f32 %v3849, %v3887
    %v3919 = vadd.f32 %v3850, %v3888
    %v3920 = vadd.f32 %v3851, %v3889
    %v3921 = vadd.f32 %v3852, %v3890
    %v3922 = vadd.f32 %v3853, %v3891
    %v3923 = vadd.f32 %v3854, %v3892
    %v3924 = vadd.f32 %v3855, %v3893
    %v3925 = vadd.f32 %v3856, %v3894
    %v3926 = vadd.f32 %v3857, %v3895
    %v3927 = vadd.f32 %v3858, %v3896
    %v3928 = vadd.f32 %v3859, %v3897
    %v3929 = vadd.f32 %v3860, %v3898
    %v3930 = vadd.f32 %v3861, %v3899
    %v3931 = vadd.f32 %v3862, %v3900
    %v3932 = vadd.f32 %v3863, %v3901
    %v3933 = vadd.f32 %v3864, %v3902
    %v3934 = vadd.f32 %v3865, %v3903
    %v3935 = vadd.f32 %v3866, %v3904
    %v3936 = vadd.f32 %v3867, %v3905
    %v3937 = vadd.f32 %v3868, %v3906
    %v3938 = vadd.f32 %v3869, %v3907
    %v3939 = vadd.f32 %v3870, %v3908
    %v3940 = vadd.f32 %v3871, %v3908
    %v3941 = vld [vmem:[%s12] sm:$0x1]
    %v3943 = vlaneseq
    %v3944 = vshrl.u32 %v3943, 7
    %v3945 = vsub.s32 0, %v3944
    %v3946 = vrot.slane %v3941, %v3945
    %v3948 = vadd.f32 %v3909, %v3946
    %v3949 = vadd.f32 %v3910, %v3946
    %v3950 = vadd.f32 %v3911, %v3946
    %v3951 = vadd.f32 %v3912, %v3946
    %v3952 = vadd.f32 %v3913, %v3946
    %v3953 = vadd.f32 %v3914, %v3946
    %v3954 = vadd.f32 %v3915, %v3946
    %v3955 = vadd.f32 %v3916, %v3946
    %v3956 = vadd.f32 %v3917, %v3946
    %v3957 = vadd.f32 %v3918, %v3946
    %v3958 = vadd.f32 %v3919, %v3946
    %v3959 = vadd.f32 %v3920, %v3946
    %v3960 = vadd.f32 %v3921, %v3946
    %v3961 = vadd.f32 %v3922, %v3946
    %v3962 = vadd.f32 %v3923, %v3946
    %v3963 = vadd.f32 %v3924, %v3946
    %v3964 = vadd.f32 %v3925, %v3946
    %v3965 = vadd.f32 %v3926, %v3946
    %v3966 = vadd.f32 %v3927, %v3946
    %v3967 = vadd.f32 %v3928, %v3946
    %v3968 = vadd.f32 %v3929, %v3946
    %v3969 = vadd.f32 %v3930, %v3946
    %v3970 = vadd.f32 %v3931, %v3946
    %v3971 = vadd.f32 %v3932, %v3946
    %v3972 = vadd.f32 %v3933, %v3946
    %v3973 = vadd.f32 %v3934, %v3946
    %v3974 = vadd.f32 %v3935, %v3946
    %v3975 = vadd.f32 %v3936, %v3946
    %v3976 = vadd.f32 %v3937, %v3946
    %v3977 = vadd.f32 %v3938, %v3946
    %v3978 = vadd.f32 %v3939, %v3946
    %v3979 = vadd.f32 %v3940, %v3946
    %v3980 = vmax.f32 %v3948, 0.0
    %v3981 = vmax.f32 %v3949, 0.0
    %v3982 = vmax.f32 %v3950, 0.0
    %v3983 = vmax.f32 %v3951, 0.0
    %v3984 = vmax.f32 %v3952, 0.0
    %v3985 = vmax.f32 %v3953, 0.0
    %v3986 = vmax.f32 %v3954, 0.0
    %v3987 = vmax.f32 %v3955, 0.0
    %v3988 = vmax.f32 %v3956, 0.0
    %v3989 = vmax.f32 %v3957, 0.0
    %v3990 = vmax.f32 %v3958, 0.0
    %v3991 = vmax.f32 %v3959, 0.0
    %v3992 = vmax.f32 %v3960, 0.0
    %v3993 = vmax.f32 %v3961, 0.0
    %v3994 = vmax.f32 %v3962, 0.0
    %v3995 = vmax.f32 %v3963, 0.0
    %v3996 = vmax.f32 %v3964, 0.0
    %v3997 = vmax.f32 %v3965, 0.0
    %v3998 = vmax.f32 %v3966, 0.0
    %v3999 = vmax.f32 %v3967, 0.0
    %v4000 = vmax.f32 %v3968, 0.0
    %v4001 = vmax.f32 %v3969, 0.0
    %v4002 = vmax.f32 %v3970, 0.0
    %v4003 = vmax.f32 %v3971, 0.0
    %v4004 = vmax.f32 %v3972, 0.0
    %v4005 = vmax.f32 %v3973, 0.0
    %v4006 = vmax.f32 %v3974, 0.0
    %v4007 = vmax.f32 %v3975, 0.0
    %v4008 = vmax.f32 %v3976, 0.0
    %v4009 = vmax.f32 %v3977, 0.0
    %v4010 = vmax.f32 %v3978, 0.0
    %v4011 = vmax.f32 %v3979, 0.0
    %v4012 = vadd.f32 %v3076, %v3980
    %v4013 = vadd.f32 %v3077, %v3981
    %v4014 = vadd.f32 %v3078, %v3982
    %v4015 = vadd.f32 %v3079, %v3983
    %v4016 = vadd.f32 %v3080, %v3984
    %v4017 = vadd.f32 %v3081, %v3985
    %v4018 = vadd.f32 %v3082, %v3986
    %v4019 = vadd.f32 %v3083, %v3987
    %v4020 = vadd.f32 %v3084, %v3988
    %v4021 = vadd.f32 %v3085, %v3989
    %v4022 = vadd.f32 %v3086, %v3990
    %v4023 = vadd.f32 %v3087, %v3991
    %v4024 = vadd.f32 %v3088, %v3992
    %v4025 = vadd.f32 %v3089, %v3993
    %v4026 = vadd.f32 %v3090, %v3994
    %v4027 = vadd.f32 %v3091, %v3995
    %v4028 = vadd.f32 %v3092, %v3996
    %v4029 = vadd.f32 %v3093, %v3997
    %v4030 = vadd.f32 %v3094, %v3998
    %v4031 = vadd.f32 %v3095, %v3999
    %v4032 = vadd.f32 %v3096, %v4000
    %v4033 = vadd.f32 %v3097, %v4001
    %v4034 = vadd.f32 %v3098, %v4002
    %v4035 = vadd.f32 %v3099, %v4003
    %v4036 = vadd.f32 %v3100, %v4004
    %v4037 = vadd.f32 %v3101, %v4005
    %v4038 = vadd.f32 %v3102, %v4006
    %v4039 = vadd.f32 %v3103, %v4007
    %v4040 = vadd.f32 %v3104, %v4008
    %v4041 = vadd.f32 %v3105, %v4009
    %v4042 = vadd.f32 %v3106, %v4010
    %v4043 = vadd.f32 %v3107, %v4011
    %v4044 = vld [vmem:[#allocation19] sm:$0xff]
    %v4045 = vld [vmem:[#allocation19 + $0x8] sm:$0xff]
    %v4046 = vld [vmem:[#allocation19 + $0x10] sm:$0xff]
    %v4047 = vld [vmem:[#allocation19 + $0x18] sm:$0xff]
    %v4048 = vld [vmem:[#allocation19 + $0x20] sm:$0xff]
    %v4049 = vld [vmem:[#allocation19 + $0x28] sm:$0xff]
    %v4050 = vld [vmem:[#allocation19 + $0x30] sm:$0xff]
    %v4051 = vld [vmem:[#allocation19 + $0x38] sm:$0xff]
    %v4052 = vld [vmem:[#allocation19 + $0x40] sm:$0xff]
    %v4053 = vld [vmem:[#allocation19 + $0x48] sm:$0xff]
    %v4054 = vld [vmem:[#allocation19 + $0x50] sm:$0xff]
    %v4055 = vld [vmem:[#allocation19 + $0x58] sm:$0xff]
    %v4056 = vld [vmem:[#allocation19 + $0x60] sm:$0xff]
    %v4057 = vld [vmem:[#allocation19 + $0x68] sm:$0xff]
    %v4058 = vld [vmem:[#allocation19 + $0x70] sm:$0xff]
    %v4059 = vld [vmem:[#allocation19 + $0x78] sm:$0xff]
    %4060 = vmatprep.subr.mxu0 0.0
    %4061 = vmatpush1.msra.mxu0 %v4059
    %4062 = vmatprep.subr.mxu0 0.0
    %4063 = vmatpush1.msra.mxu0 %v4058
    %4064 = vmatprep.subr.mxu0 0.0
    %4065 = vmatpush1.msra.mxu0 %v4057
    %4066 = vmatprep.subr.mxu0 0.0
    %4067 = vmatpush1.msra.mxu0 %v4056
    %4068 = vmatprep.subr.mxu0 0.0
    %4069 = vmatpush1.msra.mxu0 %v4055
    %4070 = vmatprep.subr.mxu0 0.0
    %4071 = vmatpush1.msra.mxu0 %v4054
    %4072 = vmatprep.subr.mxu0 0.0
    %4073 = vmatpush1.msra.mxu0 %v4053
    %4074 = vmatprep.subr.mxu0 0.0
    %4075 = vmatpush1.msra.mxu0 %v4052
    %4076 = vmatprep.subr.mxu0 0.0
    %4077 = vmatpush1.msra.mxu0 %v4051
    %4078 = vmatprep.subr.mxu0 0.0
    %4079 = vmatpush1.msra.mxu0 %v4050
    %4080 = vmatprep.subr.mxu0 0.0
    %4081 = vmatpush1.msra.mxu0 %v4049
    %4082 = vmatprep.subr.mxu0 0.0
    %4083 = vmatpush1.msra.mxu0 %v4048
    %4084 = vmatprep.subr.mxu0 0.0
    %4085 = vmatpush1.msra.mxu0 %v4047
    %4086 = vmatprep.subr.mxu0 0.0
    %4087 = vmatpush1.msra.mxu0 %v4046
    %4088 = vmatprep.subr.mxu0 0.0
    %4089 = vmatpush1.msra.mxu0 %v4045
    %4090 = vmatprep.subr.mxu0 0.0
    %4091 = vmatpush1.msra.mxu0 %v4044
    %4092 = vmatprep.subr.mxu0 0.0
    %4093 = vmatpush2.msra.mxu0 0.0
    %4094 = vmatprep.subr.mxu0 0.0
    %4095 = vmatpush2.msra.mxu0 0.0
    %4096 = vmatprep.subr.mxu0 0.0
    %4097 = vmatpush2.msra.mxu0 0.0
    %4098 = vmatprep.subr.mxu0 0.0
    %4099 = vmatpush2.msra.mxu0 0.0
    %4100 = vmatprep.subr.mxu0 0.0
    %4101 = vmatpush2.msra.mxu0 0.0
    %4102 = vmatprep.subr.mxu0 0.0
    %4103 = vmatpush2.msra.mxu0 0.0
    %4104 = vmatprep.subr.mxu0 0.0
    %4105 = vmatpush2.msra.mxu0 0.0
    %4106 = vmatprep.subr.mxu0 0.0
    %4107 = vmatpush2.msra.mxu0 0.0
    %4108 = vmatprep.subr.mxu0 0.0
    %4109 = vmatpush2.msra.mxu0 0.0
    %4110 = vmatprep.subr.mxu0 0.0
    %4111 = vmatpush2.msra.mxu0 0.0
    %4112 = vmatprep.subr.mxu0 0.0
    %4113 = vmatpush2.msra.mxu0 0.0
    %4114 = vmatprep.subr.mxu0 0.0
    %4115 = vmatpush2.msra.mxu0 0.0
    %4116 = vmatprep.subr.mxu0 0.0
    %4117 = vmatpush2.msra.mxu0 0.0
    %4118 = vmatprep.subr.mxu0 0.0
    %4119 = vmatpush2.msra.mxu0 0.0
    %4120 = vmatprep.subr.mxu0 0.0
    %4121 = vmatpush2.msra.mxu0 0.0
    %4122 = vmatprep.subr.mxu0 0.0
    %4123 = vmatpush2.msra.mxu0 0.0
    %4124 = vmatprep.mubr.f32.mxu0 0.0
    %4125 = vmatmul.mubr.f32.gmra.mxu0 %v4012
    %v4126 = vpop.f32.mrf.mxu0
    %v4127 = vadd.f32 0.0, %v4126
    %v4128 = vpop.f32.mrf.mxu0
    %4129 = vmatprep.mubr.f32.mxu0 0.0
    %4130 = vmatmul.mubr.f32.gmra.mxu0 %v4013
    %v4131 = vpop.f32.mrf.mxu0
    %v4132 = vadd.f32 0.0, %v4131
    %v4133 = vpop.f32.mrf.mxu0
    %4134 = vmatprep.mubr.f32.mxu0 0.0
    %4135 = vmatmul.mubr.f32.gmra.mxu0 %v4014
    %v4136 = vpop.f32.mrf.mxu0
    %v4137 = vadd.f32 0.0, %v4136
    %v4138 = vpop.f32.mrf.mxu0
    %4139 = vmatprep.mubr.f32.mxu0 0.0
    %4140 = vmatmul.mubr.f32.gmra.mxu0 %v4015
    %v4141 = vpop.f32.mrf.mxu0
    %v4142 = vadd.f32 0.0, %v4141
    %v4143 = vpop.f32.mrf.mxu0
    %4144 = vmatprep.mubr.f32.mxu0 0.0
    %4145 = vmatmul.mubr.f32.gmra.mxu0 %v4016
    %v4146 = vpop.f32.mrf.mxu0
    %v4147 = vadd.f32 0.0, %v4146
    %v4148 = vpop.f32.mrf.mxu0
    %4149 = vmatprep.mubr.f32.mxu0 0.0
    %4150 = vmatmul.mubr.f32.gmra.mxu0 %v4017
    %v4151 = vpop.f32.mrf.mxu0
    %v4152 = vadd.f32 0.0, %v4151
    %v4153 = vpop.f32.mrf.mxu0
    %4154 = vmatprep.mubr.f32.mxu0 0.0
    %4155 = vmatmul.mubr.f32.gmra.mxu0 %v4018
    %v4156 = vpop.f32.mrf.mxu0
    %v4157 = vadd.f32 0.0, %v4156
    %v4158 = vpop.f32.mrf.mxu0
    %4159 = vmatprep.mubr.f32.mxu0 0.0
    %4160 = vmatmul.mubr.f32.gmra.mxu0 %v4019
    %v4161 = vpop.f32.mrf.mxu0
    %v4162 = vadd.f32 0.0, %v4161
    %v4163 = vpop.f32.mrf.mxu0
    %4164 = vmatprep.mubr.f32.mxu0 0.0
    %4165 = vmatmul.mubr.f32.gmra.mxu0 %v4020
    %v4166 = vpop.f32.mrf.mxu0
    %v4167 = vadd.f32 0.0, %v4166
    %v4168 = vpop.f32.mrf.mxu0
    %4169 = vmatprep.mubr.f32.mxu0 0.0
    %4170 = vmatmul.mubr.f32.gmra.mxu0 %v4021
    %v4171 = vpop.f32.mrf.mxu0
    %v4172 = vadd.f32 0.0, %v4171
    %v4173 = vpop.f32.mrf.mxu0
    %4174 = vmatprep.mubr.f32.mxu0 0.0
    %4175 = vmatmul.mubr.f32.gmra.mxu0 %v4022
    %v4176 = vpop.f32.mrf.mxu0
    %v4177 = vadd.f32 0.0, %v4176
    %v4178 = vpop.f32.mrf.mxu0
    %4179 = vmatprep.mubr.f32.mxu0 0.0
    %4180 = vmatmul.mubr.f32.gmra.mxu0 %v4023
    %v4181 = vpop.f32.mrf.mxu0
    %v4182 = vadd.f32 0.0, %v4181
    %v4183 = vpop.f32.mrf.mxu0
    %4184 = vmatprep.mubr.f32.mxu0 0.0
    %4185 = vmatmul.mubr.f32.gmra.mxu0 %v4024
    %v4186 = vpop.f32.mrf.mxu0
    %v4187 = vadd.f32 0.0, %v4186
    %v4188 = vpop.f32.mrf.mxu0
    %4189 = vmatprep.mubr.f32.mxu0 0.0
    %4190 = vmatmul.mubr.f32.gmra.mxu0 %v4025
    %v4191 = vpop.f32.mrf.mxu0
    %v4192 = vadd.f32 0.0, %v4191
    %v4193 = vpop.f32.mrf.mxu0
    %4194 = vmatprep.mubr.f32.mxu0 0.0
    %4195 = vmatmul.mubr.f32.gmra.mxu0 %v4026
    %v4196 = vpop.f32.mrf.mxu0
    %v4197 = vadd.f32 0.0, %v4196
    %v4198 = vpop.f32.mrf.mxu0
    %4199 = vmatprep.mubr.f32.mxu0 0.0
    %4200 = vmatmul.mubr.f32.gmra.mxu0 %v4027
    %v4201 = vpop.f32.mrf.mxu0
    %v4202 = vadd.f32 0.0, %v4201
    %v4203 = vpop.f32.mrf.mxu0
    %4204 = vmatprep.mubr.f32.mxu0 0.0
    %4205 = vmatmul.mubr.f32.gmra.mxu0 %v4028
    %v4206 = vpop.f32.mrf.mxu0
    %v4207 = vadd.f32 0.0, %v4206
    %v4208 = vpop.f32.mrf.mxu0
    %4209 = vmatprep.mubr.f32.mxu0 0.0
    %4210 = vmatmul.mubr.f32.gmra.mxu0 %v4029
    %v4211 = vpop.f32.mrf.mxu0
    %v4212 = vadd.f32 0.0, %v4211
    %v4213 = vpop.f32.mrf.mxu0
    %4214 = vmatprep.mubr.f32.mxu0 0.0
    %4215 = vmatmul.mubr.f32.gmra.mxu0 %v4030
    %v4216 = vpop.f32.mrf.mxu0
    %v4217 = vadd.f32 0.0, %v4216
    %v4218 = vpop.f32.mrf.mxu0
    %4219 = vmatprep.mubr.f32.mxu0 0.0
    %4220 = vmatmul.mubr.f32.gmra.mxu0 %v4031
    %v4221 = vpop.f32.mrf.mxu0
    %v4222 = vadd.f32 0.0, %v4221
    %v4223 = vpop.f32.mrf.mxu0
    %4224 = vmatprep.mubr.f32.mxu0 0.0
    %4225 = vmatmul.mubr.f32.gmra.mxu0 %v4032
    %v4226 = vpop.f32.mrf.mxu0
    %v4227 = vadd.f32 0.0, %v4226
    %v4228 = vpop.f32.mrf.mxu0
    %4229 = vmatprep.mubr.f32.mxu0 0.0
    %4230 = vmatmul.mubr.f32.gmra.mxu0 %v4033
    %v4231 = vpop.f32.mrf.mxu0
    %v4232 = vadd.f32 0.0, %v4231
    %v4233 = vpop.f32.mrf.mxu0
    %4234 = vmatprep.mubr.f32.mxu0 0.0
    %4235 = vmatmul.mubr.f32.gmra.mxu0 %v4034
    %v4236 = vpop.f32.mrf.mxu0
    %v4237 = vadd.f32 0.0, %v4236
    %v4238 = vpop.f32.mrf.mxu0
    %4239 = vmatprep.mubr.f32.mxu0 0.0
    %4240 = vmatmul.mubr.f32.gmra.mxu0 %v4035
    %v4241 = vpop.f32.mrf.mxu0
    %v4242 = vadd.f32 0.0, %v4241
    %v4243 = vpop.f32.mrf.mxu0
    %4244 = vmatprep.mubr.f32.mxu0 0.0
    %4245 = vmatmul.mubr.f32.gmra.mxu0 %v4036
    %v4246 = vpop.f32.mrf.mxu0
    %v4247 = vadd.f32 0.0, %v4246
    %v4248 = vpop.f32.mrf.mxu0
    %4249 = vmatprep.mubr.f32.mxu0 0.0
    %4250 = vmatmul.mubr.f32.gmra.mxu0 %v4037
    %v4251 = vpop.f32.mrf.mxu0
    %v4252 = vadd.f32 0.0, %v4251
    %v4253 = vpop.f32.mrf.mxu0
    %4254 = vmatprep.mubr.f32.mxu0 0.0
    %4255 = vmatmul.mubr.f32.gmra.mxu0 %v4038
    %v4256 = vpop.f32.mrf.mxu0
    %v4257 = vadd.f32 0.0, %v4256
    %v4258 = vpop.f32.mrf.mxu0
    %4259 = vmatprep.mubr.f32.mxu0 0.0
    %4260 = vmatmul.mubr.f32.gmra.mxu0 %v4039
    %v4261 = vpop.f32.mrf.mxu0
    %v4262 = vadd.f32 0.0, %v4261
    %v4263 = vpop.f32.mrf.mxu0
    %4264 = vmatprep.mubr.f32.mxu0 0.0
    %4265 = vmatmul.mubr.f32.gmra.mxu0 %v4040
    %v4266 = vpop.f32.mrf.mxu0
    %v4267 = vadd.f32 0.0, %v4266
    %v4268 = vpop.f32.mrf.mxu0
    %4269 = vmatprep.mubr.f32.mxu0 0.0
    %4270 = vmatmul.mubr.f32.gmra.mxu0 %v4041
    %v4271 = vpop.f32.mrf.mxu0
    %v4272 = vadd.f32 0.0, %v4271
    %v4273 = vpop.f32.mrf.mxu0
    %4274 = vmatprep.mubr.f32.mxu0 0.0
    %4275 = vmatmul.mubr.f32.gmra.mxu0 %v4042
    %v4276 = vpop.f32.mrf.mxu0
    %v4277 = vadd.f32 0.0, %v4276
    %v4278 = vpop.f32.mrf.mxu0
    %4279 = vmatprep.mubr.f32.mxu0 0.0
    %4280 = vmatmul.mubr.f32.gmra.mxu0 %v4043
    %v4281 = vpop.f32.mrf.mxu0
    %v4282 = vadd.f32 0.0, %v4281
    %v4283 = vpop.f32.mrf.mxu0
    %4284 = vdwg.mxu0
    %v4285 = vmax.f32 %v4127, 0.0
    %v4286 = vmax.f32 %v4132, 0.0
    %v4287 = vmax.f32 %v4137, 0.0
    %v4288 = vmax.f32 %v4142, 0.0
    %v4289 = vmax.f32 %v4147, 0.0
    %v4290 = vmax.f32 %v4152, 0.0
    %v4291 = vmax.f32 %v4157, 0.0
    %v4292 = vmax.f32 %v4162, 0.0
    %v4293 = vmax.f32 %v4167, 0.0
    %v4294 = vmax.f32 %v4172, 0.0
    %v4295 = vmax.f32 %v4177, 0.0
    %v4296 = vmax.f32 %v4182, 0.0
    %v4297 = vmax.f32 %v4187, 0.0
    %v4298 = vmax.f32 %v4192, 0.0
    %v4299 = vmax.f32 %v4197, 0.0
    %v4300 = vmax.f32 %v4202, 0.0
    %v4301 = vmax.f32 %v4207, 0.0
    %v4302 = vmax.f32 %v4212, 0.0
    %v4303 = vmax.f32 %v4217, 0.0
    %v4304 = vmax.f32 %v4222, 0.0
    %v4305 = vmax.f32 %v4227, 0.0
    %v4306 = vmax.f32 %v4232, 0.0
    %v4307 = vmax.f32 %v4237, 0.0
    %v4308 = vmax.f32 %v4242, 0.0
    %v4309 = vmax.f32 %v4247, 0.0
    %v4310 = vmax.f32 %v4252, 0.0
    %v4311 = vmax.f32 %v4257, 0.0
    %v4312 = vmax.f32 %v4262, 0.0
    %v4313 = vmax.f32 %v4267, 0.0
    %v4314 = vmax.f32 %v4272, 0.0
    %v4315 = vmax.f32 %v4277, 0.0
    %v4316 = vmax.f32 %v4282, 0.0
    %v4317 = vsub.f32 0.0, %v4285
    %v4318 = vsub.f32 0.0, %v4286
    %v4319 = vsub.f32 0.0, %v4287
    %v4320 = vsub.f32 0.0, %v4288
    %v4321 = vsub.f32 0.0, %v4289
    %v4322 = vsub.f32 0.0, %v4290
    %v4323 = vsub.f32 0.0, %v4291
    %v4324 = vsub.f32 0.0, %v4292
    %v4325 = vsub.f32 0.0, %v4293
    %v4326 = vsub.f32 0.0, %v4294
    %v4327 = vsub.f32 0.0, %v4295
    %v4328 = vsub.f32 0.0, %v4296
    %v4329 = vsub.f32 0.0, %v4297
    %v4330 = vsub.f32 0.0, %v4298
    %v4331 = vsub.f32 0.0, %v4299
    %v4332 = vsub.f32 0.0, %v4300
    %v4333 = vsub.f32 0.0, %v4301
    %v4334 = vsub.f32 0.0, %v4302
    %v4335 = vsub.f32 0.0, %v4303
    %v4336 = vsub.f32 0.0, %v4304
    %v4337 = vsub.f32 0.0, %v4305
    %v4338 = vsub.f32 0.0, %v4306
    %v4339 = vsub.f32 0.0, %v4307
    %v4340 = vsub.f32 0.0, %v4308
    %v4341 = vsub.f32 0.0, %v4309
    %v4342 = vsub.f32 0.0, %v4310
    %v4343 = vsub.f32 0.0, %v4311
    %v4344 = vsub.f32 0.0, %v4312
    %v4345 = vsub.f32 0.0, %v4313
    %v4346 = vsub.f32 0.0, %v4314
    %v4347 = vsub.f32 0.0, %v4315
    %v4348 = vsub.f32 0.0, %v4316
    %v4349 = vmul.f32 %v4317, 1.442695
    %v4350 = vpow.pop %v4349
    %v4351 = vmul.f32 %v4318, 1.442695
    %v4352 = vpow.pop %v4351
    %v4353 = vmul.f32 %v4319, 1.442695
    %v4354 = vpow.pop %v4353
    %v4355 = vmul.f32 %v4320, 1.442695
    %v4356 = vpow.pop %v4355
    %v4357 = vmul.f32 %v4321, 1.442695
    %v4358 = vpow.pop %v4357
    %v4359 = vmul.f32 %v4322, 1.442695
    %v4360 = vpow.pop %v4359
    %v4361 = vmul.f32 %v4323, 1.442695
    %v4362 = vpow.pop %v4361
    %v4363 = vmul.f32 %v4324, 1.442695
    %v4364 = vpow.pop %v4363
    %v4365 = vmul.f32 %v4325, 1.442695
    %v4366 = vpow.pop %v4365
    %v4367 = vmul.f32 %v4326, 1.442695
    %v4368 = vpow.pop %v4367
    %v4369 = vmul.f32 %v4327, 1.442695
    %v4370 = vpow.pop %v4369
    %v4371 = vmul.f32 %v4328, 1.442695
    %v4372 = vpow.pop %v4371
    %v4373 = vmul.f32 %v4329, 1.442695
    %v4374 = vpow.pop %v4373
    %v4375 = vmul.f32 %v4330, 1.442695
    %v4376 = vpow.pop %v4375
    %v4377 = vmul.f32 %v4331, 1.442695
    %v4378 = vpow.pop %v4377
    %v4379 = vmul.f32 %v4332, 1.442695
    %v4380 = vpow.pop %v4379
    %v4381 = vmul.f32 %v4333, 1.442695
    %v4382 = vpow.pop %v4381
    %v4383 = vmul.f32 %v4334, 1.442695
    %v4384 = vpow.pop %v4383
    %v4385 = vmul.f32 %v4335, 1.442695
    %v4386 = vpow.pop %v4385
    %v4387 = vmul.f32 %v4336, 1.442695
    %v4388 = vpow.pop %v4387
    %v4389 = vmul.f32 %v4337, 1.442695
    %v4390 = vpow.pop %v4389
    %v4391 = vmul.f32 %v4338, 1.442695
    %v4392 = vpow.pop %v4391
    %v4393 = vmul.f32 %v4339, 1.442695
    %v4394 = vpow.pop %v4393
    %v4395 = vmul.f32 %v4340, 1.442695
    %v4396 = vpow.pop %v4395
    %v4397 = vmul.f32 %v4341, 1.442695
    %v4398 = vpow.pop %v4397
    %v4399 = vmul.f32 %v4342, 1.442695
    %v4400 = vpow.pop %v4399
    %v4401 = vmul.f32 %v4343, 1.442695
    %v4402 = vpow.pop %v4401
    %v4403 = vmul.f32 %v4344, 1.442695
    %v4404 = vpow.pop %v4403
    %v4405 = vmul.f32 %v4345, 1.442695
    %v4406 = vpow.pop %v4405
    %v4407 = vmul.f32 %v4346, 1.442695
    %v4408 = vpow.pop %v4407
    %v4409 = vmul.f32 %v4347, 1.442695
    %v4410 = vpow.pop %v4409
    %v4411 = vmul.f32 %v4348, 1.442695
    %v4412 = vpow.pop %v4411
    %v4413 = vadd.f32 %v4350, 1.0
    %v4414 = vadd.f32 %v4352, 1.0
    %v4415 = vadd.f32 %v4354, 1.0
    %v4416 = vadd.f32 %v4356, 1.0
    %v4417 = vadd.f32 %v4358, 1.0
    %v4418 = vadd.f32 %v4360, 1.0
    %v4419 = vadd.f32 %v4362, 1.0
    %v4420 = vadd.f32 %v4364, 1.0
    %v4421 = vadd.f32 %v4366, 1.0
    %v4422 = vadd.f32 %v4368, 1.0
    %v4423 = vadd.f32 %v4370, 1.0
    %v4424 = vadd.f32 %v4372, 1.0
    %v4425 = vadd.f32 %v4374, 1.0
    %v4426 = vadd.f32 %v4376, 1.0
    %v4427 = vadd.f32 %v4378, 1.0
    %v4428 = vadd.f32 %v4380, 1.0
    %v4429 = vadd.f32 %v4382, 1.0
    %v4430 = vadd.f32 %v4384, 1.0
    %v4431 = vadd.f32 %v4386, 1.0
    %v4432 = vadd.f32 %v4388, 1.0
    %v4433 = vadd.f32 %v4390, 1.0
    %v4434 = vadd.f32 %v4392, 1.0
    %v4435 = vadd.f32 %v4394, 1.0
    %v4436 = vadd.f32 %v4396, 1.0
    %v4437 = vadd.f32 %v4398, 1.0
    %v4438 = vadd.f32 %v4400, 1.0
    %v4439 = vadd.f32 %v4402, 1.0
    %v4440 = vadd.f32 %v4404, 1.0
    %v4441 = vadd.f32 %v4406, 1.0
    %v4442 = vadd.f32 %v4408, 1.0
    %v4443 = vadd.f32 %v4410, 1.0
    %v4444 = vadd.f32 %v4412, 1.0
    %v4445 = vrcp.pop %v4413
    %v4446 = vrcp.pop %v4414
    %v4447 = vrcp.pop %v4415
    %v4448 = vrcp.pop %v4416
    %v4449 = vrcp.pop %v4417
    %v4450 = vrcp.pop %v4418
    %v4451 = vrcp.pop %v4419
    %v4452 = vrcp.pop %v4420
    %v4453 = vrcp.pop %v4421
    %v4454 = vrcp.pop %v4422
    %v4455 = vrcp.pop %v4423
    %v4456 = vrcp.pop %v4424
    %v4457 = vrcp.pop %v4425
    %v4458 = vrcp.pop %v4426
    %v4459 = vrcp.pop %v4427
    %v4460 = vrcp.pop %v4428
    %v4461 = vrcp.pop %v4429
    %v4462 = vrcp.pop %v4430
    %v4463 = vrcp.pop %v4431
    %v4464 = vrcp.pop %v4432
    %v4465 = vrcp.pop %v4433
    %v4466 = vrcp.pop %v4434
    %v4467 = vrcp.pop %v4435
    %v4468 = vrcp.pop %v4436
    %v4469 = vrcp.pop %v4437
    %v4470 = vrcp.pop %v4438
    %v4471 = vrcp.pop %v4439
    %v4472 = vrcp.pop %v4440
    %v4473 = vrcp.pop %v4441
    %v4474 = vrcp.pop %v4442
    %v4475 = vrcp.pop %v4443
    %v4476 = vrcp.pop %v4444
    %v4477 = vmul.f32 %v202, %v4445
    %v4478 = vmul.f32 %v203, %v4446
    %v4479 = vmul.f32 %v204, %v4447
    %v4480 = vmul.f32 %v205, %v4448
    %v4481 = vmul.f32 %v206, %v4449
    %v4482 = vmul.f32 %v207, %v4450
    %v4483 = vmul.f32 %v208, %v4451
    %v4484 = vmul.f32 %v209, %v4452
    %v4485 = vmul.f32 %v210, %v4453
    %v4486 = vmul.f32 %v211, %v4454
    %v4487 = vmul.f32 %v212, %v4455
    %v4488 = vmul.f32 %v213, %v4456
    %v4489 = vmul.f32 %v214, %v4457
    %v4490 = vmul.f32 %v215, %v4458
    %v4491 = vmul.f32 %v216, %v4459
    %v4492 = vmul.f32 %v217, %v4460
    %v4493 = vmul.f32 %v218, %v4461
    %v4494 = vmul.f32 %v219, %v4462
    %v4495 = vmul.f32 %v220, %v4463
    %v4496 = vmul.f32 %v221, %v4464
    %v4497 = vmul.f32 %v222, %v4465
    %v4498 = vmul.f32 %v223, %v4466
    %v4499 = vmul.f32 %v224, %v4467
    %v4500 = vmul.f32 %v225, %v4468
    %v4501 = vmul.f32 %v226, %v4469
    %v4502 = vmul.f32 %v227, %v4470
    %v4503 = vmul.f32 %v228, %v4471
    %v4504 = vmul.f32 %v229, %v4472
    %v4505 = vmul.f32 %v230, %v4473
    %v4506 = vmul.f32 %v231, %v4474
    %v4507 = vmul.f32 %v232, %v4475
    %v4508 = vmul.f32 %v233, %v4476
    %v4509 = vadd.f32 %v202, %v4477
    %v4510 = vadd.f32 %v203, %v4478
    %v4511 = vadd.f32 %v204, %v4479
    %v4512 = vadd.f32 %v205, %v4480
    %v4513 = vadd.f32 %v206, %v4481
    %v4514 = vadd.f32 %v207, %v4482
    %v4515 = vadd.f32 %v208, %v4483
    %v4516 = vadd.f32 %v209, %v4484
    %v4517 = vadd.f32 %v210, %v4485
    %v4518 = vadd.f32 %v211, %v4486
    %v4519 = vadd.f32 %v212, %v4487
    %v4520 = vadd.f32 %v213, %v4488
    %v4521 = vadd.f32 %v214, %v4489
    %v4522 = vadd.f32 %v215, %v4490
    %v4523 = vadd.f32 %v216, %v4491
    %v4524 = vadd.f32 %v217, %v4492
    %v4525 = vadd.f32 %v218, %v4493
    %v4526 = vadd.f32 %v219, %v4494
    %v4527 = vadd.f32 %v220, %v4495
    %v4528 = vadd.f32 %v221, %v4496
    %v4529 = vadd.f32 %v222, %v4497
    %v4530 = vadd.f32 %v223, %v4498
    %v4531 = vadd.f32 %v224, %v4499
    %v4532 = vadd.f32 %v225, %v4500
    %v4533 = vadd.f32 %v226, %v4501
    %v4534 = vadd.f32 %v227, %v4502
    %v4535 = vadd.f32 %v228, %v4503
    %v4536 = vadd.f32 %v229, %v4504
    %v4537 = vadd.f32 %v230, %v4505
    %v4538 = vadd.f32 %v231, %v4506
    %v4539 = vadd.f32 %v232, %v4507
    %v4540 = vadd.f32 %v233, %v4508
    %4541 = vst [vmem:[#allocation20] sm:$0xff] %v4509
    %4542 = vst [vmem:[#allocation20 + $0x8] sm:$0xff] %v4510
    %4543 = vst [vmem:[#allocation20 + $0x10] sm:$0xff] %v4511
    %4544 = vst [vmem:[#allocation20 + $0x18] sm:$0xff] %v4512
    %4545 = vst [vmem:[#allocation20 + $0x20] sm:$0xff] %v4513
    %4546 = vst [vmem:[#allocation20 + $0x28] sm:$0xff] %v4514
    %4547 = vst [vmem:[#allocation20 + $0x30] sm:$0xff] %v4515
    %4548 = vst [vmem:[#allocation20 + $0x38] sm:$0xff] %v4516
    %4549 = vst [vmem:[#allocation20 + $0x40] sm:$0xff] %v4517
    %4550 = vst [vmem:[#allocation20 + $0x48] sm:$0xff] %v4518
    %4551 = vst [vmem:[#allocation20 + $0x50] sm:$0xff] %v4519
    %4552 = vst [vmem:[#allocation20 + $0x58] sm:$0xff] %v4520
    %4553 = vst [vmem:[#allocation20 + $0x60] sm:$0xff] %v4521
    %4554 = vst [vmem:[#allocation20 + $0x68] sm:$0xff] %v4522
    %4555 = vst [vmem:[#allocation20 + $0x70] sm:$0xff] %v4523
    %4556 = vst [vmem:[#allocation20 + $0x78] sm:$0xff] %v4524
    %4557 = vst [vmem:[#allocation20 + $0x80] sm:$0xff] %v4525
    %4558 = vst [vmem:[#allocation20 + $0x88] sm:$0xff] %v4526
    %4559 = vst [vmem:[#allocation20 + $0x90] sm:$0xff] %v4527
    %4560 = vst [vmem:[#allocation20 + $0x98] sm:$0xff] %v4528
    %4561 = vst [vmem:[#allocation20 + $0xa0] sm:$0xff] %v4529
    %4562 = vst [vmem:[#allocation20 + $0xa8] sm:$0xff] %v4530
    %4563 = vst [vmem:[#allocation20 + $0xb0] sm:$0xff] %v4531
    %4564 = vst [vmem:[#allocation20 + $0xb8] sm:$0xff] %v4532
    %4565 = vst [vmem:[#allocation20 + $0xc0] sm:$0xff] %v4533
    %4566 = vst [vmem:[#allocation20 + $0xc8] sm:$0xff] %v4534
    %4567 = vst [vmem:[#allocation20 + $0xd0] sm:$0xff] %v4535
    %4568 = vst [vmem:[#allocation20 + $0xd8] sm:$0xff] %v4536
    %4569 = vst [vmem:[#allocation20 + $0xe0] sm:$0xff] %v4537
    %4570 = vst [vmem:[#allocation20 + $0xe8] sm:$0xff] %v4538
    %4571 = vst [vmem:[#allocation20 + $0xf0] sm:$0xff] %v4539
    %4572 = vst [vmem:[#allocation20 + $0xf8] sm:$0xff] %v4540
    // Predicated region
    $region102: #{tpu_custom_call.1} parent=1 // pred_check
      _
    $region103: #{tpu_custom_call.1} parent=1 // pred_check_branch
      %4574 = sbr.rel (0) target = $region105
    $region104: #{tpu_custom_call.1} parent=1 // pred_region
      %s4576 = ssub.s32 4096, 4096
      %4577 = vsyncadd [#allocation4], %s4576
      %s4578 = sshll.u32 [#allocation20], 4
      %s4579 = int_to_ptr.vmem [resolvable:$true] %s4578
      %4584 = dma.vmem_to_hbm [thread:$0]  %s4579, 4096, %s14, [#allocation4], 128, 128, 8
    $region105: #{tpu_custom_call.1} parent=1 // pred_fallthru
      _
    // Predicated region
    $region106: #{tpu_custom_call.1} parent=1 // pred_check
      _
    $region107: #{tpu_custom_call.1} parent=1 // pred_check_branch
      %4586 = sbr.rel (0) target = $region109
    $region108: #{tpu_custom_call.1} parent=1 // pred_region
      %4587 = dma.done [#allocation4], 4096
    $region109: #{tpu_custom_call.1} parent=1 // pred_fallthru
      _
    %4588 = vsyncpa [#allocation3], 1
    %4589 = vsyncpa [#allocation6], 1
    %4590 = vsyncpa [#allocation9], 1
    %4591 = vsyncpa [#allocation12], 1
    %4592 = vsyncpa [#allocation15], 1
    %4593 = vsyncpa [#allocation18], 1
    %4594 = vsyncpa [#allocation4], 1

</llo_original>
